<compile_context>
chip_gen: v7x
topology: tpu7x:2x2x1
jax: 0.10.0
libtpu: 0.0.40
codegen_flags: <defaults>
</compile_context>

<pallas_src>
import math
from functools import partial

import jax
import jax.numpy as jnp
from jax.experimental import pallas as pl
from jax.experimental.pallas import tpu as pltpu

BN_EPS = 1e-5


def _vmem_budget_bytes():
    """Per-generation scoped-VMEM budget (leave headroom for compiler scratch)."""
    try:
        cap = int(pltpu.get_tpu_info().vmem_capacity_bytes)
    except Exception:
        cap = 128 * 1024 * 1024
    return int(min(int(cap * 0.8), 110 * 1024 * 1024))


def _lane_pad(c):
    """Pad channel count to a lane-dense width (128) when below one vreg row."""
    return c if c >= 128 else 128


# ----------------------------- linear projection ----------------------------

def _linear_kernel(x_ref, w_ref, b_ref, o_ref):
    o_ref[...] = (jnp.dot(x_ref[...], w_ref[...],
                          preferred_element_type=jnp.float32)
                  + b_ref[...]).astype(o_ref.dtype)


def linear_proj(x2d, w, b):
    M, K = x2d.shape
    N = w.shape[1]
    # Bandwidth-bound (K = latent_dim is small): use big M tiles to amortize
    # per-grid-step overhead; keep N untiled when it already fits.
    tm = M if M <= 512 else 512
    tn = N if N <= 512 else 512
    grid = (pl.cdiv(M, tm), pl.cdiv(N, tn))
    return pl.pallas_call(
        _linear_kernel,
        out_shape=jax.ShapeDtypeStruct((M, N), x2d.dtype),
        grid=grid,
        in_specs=[pl.BlockSpec((tm, K), lambda i, j: (i, 0)),
                  pl.BlockSpec((K, tn), lambda i, j: (0, j)),
                  pl.BlockSpec((1, tn), lambda i, j: (0, j))],
        out_specs=pl.BlockSpec((tm, tn), lambda i, j: (i, j)),
        compiler_params=pltpu.CompilerParams(
            dimension_semantics=("parallel", "parallel")),
        cost_estimate=pl.CostEstimate(
            flops=2 * M * K * N, transcendentals=0,
            bytes_accessed=4 * (M * K + K * N + M * N)),
    )(x2d, w, b)


# --------------------------- fused ResBlock stack ----------------------------

def _resblock_stack_kernel(x_hbm, w1_ref, g1_ref, be1_ref,
                           w2_ref, g2_ref, be2_ref, o_ref, pad_ref):
    # x_hbm  : raw HBM ref (B, H, W, Cp), aliased with the output buffer.
    # o_ref  : (B, H, W, Cp) VMEM-resident output block across the layer grid
    #          axis; doubles as the activation carry.
    # wN_ref : (1, 9*Cp, Cp) tap-major flattened conv weight (conv_dtype).
    # gN/beN : (1, 1, Cp) BatchNorm gamma / beta (f32).
    # pad_ref: (B, H+2, Wp, Cp) zero-padded halo scratch in conv_dtype,
    #          Wp = round_up(W+2, 8) for sublane alignment.
    B, H, W, Cp = o_ref.shape
    n = B * H * W

    @pl.when(pl.program_id(0) == 0)
    def _():
        # Halo scratch zeroed ONCE (only the 1-px halo must stay zero; the
        # interior is fully overwritten before every conv), then bring the
        # activation resident with a single HBM -> VMEM DMA.
        pad_ref[...] = jnp.zeros(pad_ref.shape, pad_ref.dtype)
        pltpu.sync_copy(x_hbm, o_ref)

    x = o_ref[...].astype(jnp.float32).reshape(n, Cp)   # current activation

    def conv3x3_bn(inp_2d, w_ref, g_ref, be_ref):
        # Write conv input into the halo scratch already cast to conv_dtype.
        pad_ref[:, 1:H + 1, 1:W + 1, :] = (
            inp_2d.reshape(B, H, W, Cp).astype(pad_ref.dtype))
        # 9 accumulated per-tap MXU matmuls (no im2col slab); only one (n, Cp)
        # tap operand live at a time, accumulation stays in f32.
        acc = jnp.zeros((n, Cp), jnp.float32)
        t = 0
        for dy in range(3):
            for dx in range(3):
                tap = pad_ref[:, dy:dy + H, dx:dx + W, :].reshape(n, Cp)
                w_t = w_ref[0, t * Cp:(t + 1) * Cp, :]
                acc = acc + jnp.dot(tap, w_t,
                                    preferred_element_type=jnp.float32)
                t += 1
        y = acc
        # One-pass training-mode BatchNorm; the conv bias cancels exactly under
        # batch statistics so it is folded away analytically.  Clamp the
        # one-pass variance at 0 to guard against catastrophic cancellation.
        s = jnp.sum(y, axis=0, keepdims=True)
        ss = jnp.sum(y * y, axis=0, keepdims=True)
        mean = s * (1.0 / n)
        var = jnp.maximum(ss * (1.0 / n) - mean * mean, 0.0)
        scale = g_ref[0] * jax.lax.rsqrt(var + BN_EPS)
        shift = be_ref[0] - mean * scale
        return y * scale + shift                         # (n, Cp) f32

    y1 = jnp.maximum(conv3x3_bn(x, w1_ref, g1_ref, be1_ref), 0.0)
    y2 = conv3x3_bn(y1, w2_ref, g2_ref, be2_ref)
    out = jnp.maximum(y2 + x, 0.0)                       # shortcut = Identity
    o_ref[...] = out.reshape(B, H, W, Cp).astype(o_ref.dtype)


def resblock_stack(x_nhwc, stack, conv_dtype=jnp.float32):
    """x_nhwc: (B, H, W, Cp) lane-dense activation. stack: padded conv params."""
    B, H, W, Cp = x_nhwc.shape
    n_layers = stack["w1"].shape[0]
    if n_layers == 0:
        return x_nhwc
    K9 = 9 * Cp
    Wp = ((W + 2 + 7) // 8) * 8                          # sublane-aligned halo
    w1 = stack["w1"].astype(conv_dtype)
    w2 = stack["w2"].astype(conv_dtype)
    g1, be1, g2, be2 = stack["g1"], stack["be1"], stack["g2"], stack["be2"]

    ospec = pl.BlockSpec((B, H, W, Cp), lambda i: (0, 0, 0, 0))
    xspec = pl.BlockSpec(memory_space=pl.ANY)            # raw HBM, manual DMA
    wspec = pl.BlockSpec((1, K9, Cp), lambda i: (i, 0, 0))
    pspec = pl.BlockSpec((1, 1, Cp), lambda i: (i, 0, 0))

    wb = jnp.dtype(conv_dtype).itemsize
    est_bytes = (B * H * W * Cp * 4                      # resident activation
                 + B * (H + 2) * Wp * Cp * wb            # halo scratch
                 + 2 * 2 * K9 * Cp * wb                  # double-buffered weights x2
                 + 4 * B * H * W * Cp * 4                # acc / y / tap temporaries
                 + 16 * Cp * 4)
    vmem_limit = int(min(_vmem_budget_bytes(),
                         max(2 * est_bytes, 16 * 1024 * 1024)))

    flops = n_layers * 2 * 2 * (B * H * W) * K9 * Cp
    bytes_accessed = (2 * B * H * W * Cp * 4
                      + n_layers * (2 * K9 * Cp * wb + 8 * Cp * 4))

    return pl.pallas_call(
        _resblock_stack_kernel,
        out_shape=jax.ShapeDtypeStruct((B, H, W, Cp), x_nhwc.dtype),
        grid_spec=pltpu.PrefetchScalarGridSpec(
            num_scalar_prefetch=0,
            grid=(n_layers,),
            in_specs=[xspec, wspec, pspec, pspec, wspec, pspec, pspec],
            out_specs=ospec,
            scratch_shapes=[pltpu.VMEM((B, H + 2, Wp, Cp), conv_dtype)]),
        input_output_aliases={0: 0},                     # activation HBM reuse
        compiler_params=pltpu.CompilerParams(
            dimension_semantics=("arbitrary",),
            vmem_limit_bytes=vmem_limit),
        cost_estimate=pl.CostEstimate(
            flops=flops, transcendentals=n_layers * 2 * Cp,
            bytes_accessed=bytes_accessed),
    )(x_nhwc, w1, g1, be1, w2, g2, be2)


# ------------------------------ plain-JAX glue -------------------------------

def inverse_apply_mask(x, ids_restore, cls_token, mask_token):
    # mirrors Decoder.inverse_apply_mask, but returns NHWC instead of NCHW
    B, _, C = x.shape
    L = ids_restore.shape[1]
    cls = jnp.broadcast_to(cls_token, (B, 1, C))
    x = jnp.concatenate([cls, x], axis=1)                       # (B, Lvis+1, C)
    n_mask = L + 1 - x.shape[1]
    mask_tokens = jnp.broadcast_to(mask_token, (B, n_mask, C))
    x_ = jnp.concatenate([x[:, 1:, :], mask_tokens], axis=1)    # (B, L, C)
    x_ = jnp.take_along_axis(x_, ids_restore[:, :, None], axis=1)
    x = jnp.concatenate([x[:, :1, :], x_], axis=1)
    x = x[:, 1:, :]                                             # (B, L, C)
    h = w = int(L ** 0.5)
    # torch: permute(0,2,1).reshape(B, C, h, w)  <=>  NHWC reshape(B, h, w, C)
    return x.reshape(B, h, w, C)


def _pad_last(a, cp, value=0.0):
    c = a.shape[-1]
    if cp == c:
        return a
    pad = [(0, 0)] * (a.ndim - 1) + [(0, cp - c)]
    return jnp.pad(a, pad, constant_values=value)


def _pad_stack_params(params, cp):
    """Zero-pad conv/BN params to a lane-dense channel width cp.

    Padded output channels provably stay exactly 0 through every layer:
    zero weight columns -> y == 0 -> mean 0, var 0 -> scale*0 + beta_pad(=0) = 0,
    residual input channels are 0, relu(0) = 0.
    """
    nl = params["w1"].shape[0]
    c = params["g1"].shape[-1]

    def pad_w(w):
        w4 = w.reshape(nl, 9, c, c)
        w4 = jnp.pad(w4, ((0, 0), (0, 0), (0, cp - c), (0, cp - c)))
        return w4.reshape(nl, 9 * cp, cp)

    if cp == c:
        return dict(w1=params["w1"], w2=params["w2"],
                    g1=params["g1"], be1=params["be1"],
                    g2=params["g2"], be2=params["be2"])
    return dict(
        w1=pad_w(params["w1"]), w2=pad_w(params["w2"]),
        g1=_pad_last(params["g1"], cp, 1.0), be1=_pad_last(params["be1"], cp),
        g2=_pad_last(params["g2"], cp, 1.0), be2=_pad_last(params["be2"], cp))


@partial(jax.jit, static_argnames=("conv_dtype",))
def decoder_forward(x, ids_restore, params, conv_dtype=jnp.float32):
    B, Lvis, latent = x.shape
    C = params["proj_w"].shape[1]
    Cp = _lane_pad(C)                                    # lane-dense channel width

    # Lane-dense projection: pad the output columns (and tokens) with zeros so
    # the whole pipeline runs at Cp channels; sliced back to C at the end.
    proj_w = _pad_last(params["proj_w"], Cp)
    proj_b = _pad_last(params["proj_b"], Cp)
    cls_tok = _pad_last(params["cls_token"], Cp)
    msk_tok = _pad_last(params["mask_token"], Cp)

    x2d = linear_proj(x.reshape(B * Lvis, latent), proj_w, proj_b)  # Pallas
    x = x2d.reshape(B, Lvis, Cp)
    x = inverse_apply_mask(x, ids_restore, cls_tok, msk_tok)        # glue (NHWC)

    stack = _pad_stack_params(params, Cp)
    x = resblock_stack(x, stack, conv_dtype=conv_dtype)             # fused kernel

    B_, H, W, _ = x.shape
    # torch: reshape(B, C, H*W).permute(0,2,1)  <=>  NHWC reshape(B, H*W, C)
    return x[..., :C].reshape(B_, H * W, C)


# ---------------------------- pure-JAX reference -----------------------------

def _ref_forward(x, ids_restore, params):
    x = x @ params["proj_w"] + params["proj_b"]
    x = inverse_apply_mask(x, ids_restore,
                           params["cls_token"], params["mask_token"])

    def conv(xin, w_flat, b):
        Bh, Hh, Wh, Ch = xin.shape
        xp = jnp.pad(xin, ((0, 0), (1, 1), (1, 1), (0, 0)))
        col = jnp.concatenate(
            [xp[:, dy:dy + Hh, dx:dx + Wh, :]
             for dy in range(3) for dx in range(3)],
            axis=-1).reshape(Bh * Hh * Wh, 9 * Ch)
        return (col @ w_flat).reshape(Bh, Hh, Wh, Ch) + b   # bias kept explicit

    def bn(y, g, be):
        mean = jnp.mean(y, axis=(0, 1, 2), keepdims=True)
        var = jnp.mean((y - mean) ** 2, axis=(0, 1, 2), keepdims=True)
        return (y - mean) / jnp.sqrt(var + BN_EPS) * g + be

    n_layers = params["w1"].shape[0]
    for i in range(n_layers):
        identity = x
        y = jax.nn.relu(bn(conv(x, params["w1"][i], params["b1"][i]),
                           params["g1"][i], params["be1"][i]))
        y = bn(conv(y, params["w2"][i], params["b2"][i]),
               params["g2"][i], params["be2"][i])
        x = jax.nn.relu(y + identity)
    B, H, W, C = x.shape
    return x.reshape(B, H * W, C)


# --------------------------- deterministic init ------------------------------

def init_params(key, latent_dim, hidden_dim, n_layers):
    # Synthetic deterministic init.  Conv weights are stored im2col-flattened
    # as (n_layers, 9*C, C), tap-major rows (torch (Cout,Cin,3,3) would map via
    # transpose(2,3,1,0).reshape(9*Cin, Cout)).
    C = hidden_dim
    ks = jax.random.split(key, 12)
    proj_w = jax.random.normal(ks[0], (latent_dim, hidden_dim),
                               jnp.float32) / math.sqrt(latent_dim)
    proj_b = 0.05 * jax.random.normal(ks[1], (1, hidden_dim), jnp.float32)
    cls_token = 0.02 * jax.random.normal(ks[2], (1, 1, hidden_dim), jnp.float32)
    mask_token = 0.02 * jax.random.normal(ks[3], (1, 1, hidden_dim), jnp.float32)
    nl = max(n_layers, 1)
    w1 = 0.08 * jax.random.normal(ks[4], (nl, 9 * C, C), jnp.float32)[:n_layers]
    w2 = 0.08 * jax.random.normal(ks[5], (nl, 9 * C, C), jnp.float32)[:n_layers]
    b1 = 0.1 * jax.random.normal(ks[6], (nl, 1, C), jnp.float32)[:n_layers]
    b2 = 0.1 * jax.random.normal(ks[7], (nl, 1, C), jnp.float32)[:n_layers]
    g1 = (1.0 + 0.1 * jax.random.normal(ks[8], (nl, 1, C), jnp.float32))[:n_layers]
    g2 = (1.0 + 0.1 * jax.random.normal(ks[9], (nl, 1, C), jnp.float32))[:n_layers]
    be1 = 0.1 * jax.random.normal(ks[10], (nl, 1, C), jnp.float32)[:n_layers]
    be2 = 0.1 * jax.random.normal(ks[11], (nl, 1, C), jnp.float32)[:n_layers]
    return dict(proj_w=proj_w, proj_b=proj_b,
                cls_token=cls_token, mask_token=mask_token,
                w1=w1, b1=b1, g1=g1, be1=be1,
                w2=w2, b2=b2, g2=g2, be2=be2)


# ------------------------------------ main ------------------------------------

if __name__ == "__main__":
    B = 2
    latent_dim = 16
    hidden_dim = 32
    patch_size = 4                       # -> n_layers = log2(4) = 2 ResBlocks
    n_layers = int(math.log2(patch_size))
    L_total = 16                         # ids_restore length -> 4x4 token grid
    L_vis = 8                            # visible (unmasked) tokens

    key = jax.random.PRNGKey(0)
    k_x, k_ids, k_p = jax.random.split(key, 3)
    x = jax.random.normal(k_x, (B, L_vis, latent_dim), jnp.float32)
    ids_restore = jnp.stack([
        jax.random.permutation(jax.random.fold_in(k_ids, b), L_total)
        for b in range(B)
    ]).astype(jnp.int32)
    params = init_params(k_p, latent_dim, hidden_dim, n_layers)

    # f32 MXU operands: exact match to the f32 reference
    out = jax.block_until_ready(decoder_forward(x, ids_restore, params))
    assert out.shape == (B, L_total, hidden_dim), out.shape
    ref = _ref_forward(x, ids_restore, params)
    max_err = float(jnp.max(jnp.abs(out - ref)))
    assert max_err < 5e-3, f"f32 path mismatch vs reference: {max_err}"

    # bf16 MXU operands (perf mode): looser tolerance vs the f32 reference
    out_bf16 = jax.block_until_ready(
        decoder_forward(x, ids_restore, params, conv_dtype=jnp.bfloat16))
    max_err_bf16 = float(jnp.max(jnp.abs(out_bf16 - ref)))
    assert max_err_bf16 < 1.5e-1, f"bf16 path mismatch vs reference: {max_err_bf16}"

    print("KERNEL_OK")
</pallas_src>

<mosaic_0001>
module attributes {stable_mosaic.version = 11 : i64} {
  func.func @_linear_kernel(%arg0: i32, %arg1: i32, %arg2: memref<16x16xf32, #tpu.memory_space<vmem>>, %arg3: memref<16x128xf32, #tpu.memory_space<vmem>>, %arg4: memref<1x128xf32, #tpu.memory_space<vmem>>, %arg5: memref<16x128xf32, #tpu.memory_space<vmem>>) attributes {dimension_semantics = [#tpu.dimension_semantics<parallel>, #tpu.dimension_semantics<parallel>], iteration_bounds = array<i64: 1, 1>, scalar_prefetch = 0 : i64, scratch_operands = 0 : i64, tpu.core_type = #tpu.core_type<tc>, window_params = [{transform_indices = @transform_0, window_bounds = array<i64: 16, 16>}, {transform_indices = @transform_1, window_bounds = array<i64: 16, 128>}, {transform_indices = @transform_2, window_bounds = array<i64: 1, 128>}, {transform_indices = @transform_3, window_bounds = array<i64: 16, 128>}]} {
    %c0 = arith.constant 0 : index
    %c0_0 = arith.constant 0 : index
    %0 = vector.load %arg2[%c0, %c0_0] : memref<16x16xf32, #tpu.memory_space<vmem>>, vector<16x16xf32>
    %c0_1 = arith.constant 0 : index
    %c0_2 = arith.constant 0 : index
    %1 = vector.load %arg3[%c0_1, %c0_2] : memref<16x128xf32, #tpu.memory_space<vmem>>, vector<16x128xf32>
    %cst = arith.constant dense<0.000000e+00> : vector<16x128xf32>
    %2 = tpu.matmul %0, %1, %cst {dimension_numbers = #tpu.dot_dimension_numbers<[1], [0], [0], [1], [0, 0, 1, 1], [], []>} : vector<16x16xf32>, vector<16x128xf32>, vector<16x128xf32> -> vector<16x128xf32>
    %c0_3 = arith.constant 0 : index
    %c0_4 = arith.constant 0 : index
    %3 = vector.load %arg4[%c0_3, %c0_4] : memref<1x128xf32, #tpu.memory_space<vmem>>, vector<1x128xf32>
    %4 = vector.broadcast %3 : vector<1x128xf32> to vector<16x128xf32>
    %5 = arith.addf %2, %4 : vector<16x128xf32>
    %c0_5 = arith.constant 0 : index
    %c0_6 = arith.constant 0 : index
    %6 = vector.load %arg5[%c0_5, %c0_6] : memref<16x128xf32, #tpu.memory_space<vmem>>, vector<16x128xf32>
    tpu.vector_store %arg5[%c0_5, %c0_6], %5 {strides = array<i32>} : memref<16x128xf32, #tpu.memory_space<vmem>>, vector<16x128xf32>,
    return
  }
  func.func @transform_0(%arg0: i32, %arg1: i32) -> (i32, i32) {
    %c0_i32 = arith.constant 0 : i32
    %c0_i32_0 = arith.constant 0 : i32
    return %arg0, %c0_i32 : i32, i32
  }
  func.func @transform_1(%arg0: i32, %arg1: i32) -> (i32, i32) {
    %c0_i32 = arith.constant 0 : i32
    %c0_i32_0 = arith.constant 0 : i32
    return %c0_i32, %arg1 : i32, i32
  }
  func.func @transform_2(%arg0: i32, %arg1: i32) -> (i32, i32) {
    %c0_i32 = arith.constant 0 : i32
    %c0_i32_0 = arith.constant 0 : i32
    return %c0_i32, %arg1 : i32, i32
  }
  func.func @transform_3(%arg0: i32, %arg1: i32) -> (i32, i32) {
    %c0_i32 = arith.constant 0 : i32
    return %arg0, %arg1 : i32, i32
  }
}

module attributes {stable_mosaic.version = 11 : i64} {
  func.func @_resblock_stack_kernel(%arg0: i32, %arg1: memref<2x4x4x128xf32, #tpu.memory_space<any>>, %arg2: memref<1x1152x128xf32, #tpu.memory_space<vmem>>, %arg3: memref<1x1x128xf32, #tpu.memory_space<vmem>>, %arg4: memref<1x1x128xf32, #tpu.memory_space<vmem>>, %arg5: memref<1x1152x128xf32, #tpu.memory_space<vmem>>, %arg6: memref<1x1x128xf32, #tpu.memory_space<vmem>>, %arg7: memref<1x1x128xf32, #tpu.memory_space<vmem>>, %arg8: memref<2x4x4x128xf32, #tpu.memory_space<vmem>>, %arg9: memref<2x6x8x128xf32, #tpu.memory_space<vmem>>) attributes {dimension_semantics = [#tpu.dimension_semantics<arbitrary>], iteration_bounds = array<i64: 2>, scalar_prefetch = 0 : i64, scratch_operands = 1 : i64, tpu.core_type = #tpu.core_type<tc>, window_params = [{}, {transform_indices = @transform_1, window_bounds = array<i64: 1, 1152, 128>}, {transform_indices = @transform_2, window_bounds = array<i64: 1, 1, 128>}, {transform_indices = @transform_3, window_bounds = array<i64: 1, 1, 128>}, {transform_indices = @transform_4, window_bounds = array<i64: 1, 1152, 128>}, {transform_indices = @transform_5, window_bounds = array<i64: 1, 1, 128>}, {transform_indices = @transform_6, window_bounds = array<i64: 1, 1, 128>}, {pipeline_mode = #tpu.pipeline_mode<synchronous>, transform_indices = @transform_7, window_bounds = array<i64: 2, 4, 4, 128>}]} {
    %c0_i32 = arith.constant 0 : i32
    %0 = arith.cmpi eq, %arg0, %c0_i32 : i32
    %1 = arith.extui %0 : i1 to i32
    %c0_i32_0 = arith.constant 0 : i32
    %2 = arith.cmpi ne, %1, %c0_i32_0 : i32
    scf.if %2 {
      %cst_177 = arith.constant 0.000000e+00 : f32
      %180 = vector.broadcast %cst_177 : f32 to vector<2x6x8x128xf32>
      %c0_178 = arith.constant 0 : index
      %c0_179 = arith.constant 0 : index
      %c0_180 = arith.constant 0 : index
      %c0_181 = arith.constant 0 : index
      %181 = vector.load %arg9[%c0_178, %c0_179, %c0_180, %c0_181] : memref<2x6x8x128xf32, #tpu.memory_space<vmem>>, vector<2x6x8x128xf32>
      tpu.vector_store %arg9[%c0_178, %c0_179, %c0_180, %c0_181], %180 {strides = array<i32>} : memref<2x6x8x128xf32, #tpu.memory_space<vmem>>, vector<2x6x8x128xf32>,
      "tpu.region"() ({
        %182 = tpu.sem_alloc : memref<!tpu.dma_semaphore, #tpu.memory_space<semaphore_mem>>
        tpu.enqueue_dma source(%arg1 : memref<2x4x4x128xf32, #tpu.memory_space<any>>) target(%arg8 : memref<2x4x4x128xf32, #tpu.memory_space<vmem>>) target_semaphore(%182 : memref<!tpu.dma_semaphore, #tpu.memory_space<semaphore_mem>>)
        tpu.wait_dma2 semaphore(%182 : memref<!tpu.dma_semaphore, #tpu.memory_space<semaphore_mem>>) src(%arg1 : memref<2x4x4x128xf32, #tpu.memory_space<any>>) dst(%arg8 : memref<2x4x4x128xf32, #tpu.memory_space<vmem>>)
        tpu.yield
      }) : () -> ()
    } else {
    }
    %c0 = arith.constant 0 : index
    %c0_1 = arith.constant 0 : index
    %c0_2 = arith.constant 0 : index
    %c0_3 = arith.constant 0 : index
    %3 = vector.load %arg8[%c0, %c0_1, %c0_2, %c0_3] : memref<2x4x4x128xf32, #tpu.memory_space<vmem>>, vector<2x4x4x128xf32>
    %4 = vector.shape_cast %3 : vector<2x4x4x128xf32> to vector<32x128xf32>
    %5 = vector.shape_cast %4 : vector<32x128xf32> to vector<2x4x4x128xf32>
    %c0_4 = arith.constant 0 : index
    %c1 = arith.constant 1 : index
    %c1_5 = arith.constant 1 : index
    %c0_6 = arith.constant 0 : index
    %6 = vector.load %arg9[%c0_4, %c1, %c1_5, %c0_6] : memref<2x6x8x128xf32, #tpu.memory_space<vmem>>, vector<2x4x4x128xf32>
    tpu.vector_store %arg9[%c0_4, %c1, %c1_5, %c0_6], %5 {strides = array<i32>} : memref<2x6x8x128xf32, #tpu.memory_space<vmem>>, vector<2x4x4x128xf32>,
    %cst = arith.constant 0.000000e+00 : f32
    %7 = vector.broadcast %cst : f32 to vector<32x128xf32>
    %c0_7 = arith.constant 0 : index
    %c0_8 = arith.constant 0 : index
    %c0_9 = arith.constant 0 : index
    %c0_10 = arith.constant 0 : index
    %8 = vector.load %arg9[%c0_7, %c0_8, %c0_9, %c0_10] : memref<2x6x8x128xf32, #tpu.memory_space<vmem>>, vector<2x4x4x128xf32>
    %9 = vector.shape_cast %8 : vector<2x4x4x128xf32> to vector<32x128xf32>
    %c0_11 = arith.constant 0 : index
    %c0_12 = arith.constant 0 : index
    %c0_13 = arith.constant 0 : index
    %10 = vector.load %arg2[%c0_11, %c0_12, %c0_13] : memref<1x1152x128xf32, #tpu.memory_space<vmem>>, vector<1x128x128xf32>
    %11 = vector.shape_cast %10 : vector<1x128x128xf32> to vector<128x128xf32>
    %cst_14 = arith.constant dense<0.000000e+00> : vector<32x128xf32>
    %12 = tpu.matmul %9, %11, %cst_14 {dimension_numbers = #tpu.dot_dimension_numbers<[1], [0], [0], [1], [0, 0, 1, 1], [], []>} : vector<32x128xf32>, vector<128x128xf32>, vector<32x128xf32> -> vector<32x128xf32>
    %13 = arith.addf %7, %12 : vector<32x128xf32>
    %c0_15 = arith.constant 0 : index
    %c0_16 = arith.constant 0 : index
    %c1_17 = arith.constant 1 : index
    %c0_18 = arith.constant 0 : index
    %14 = vector.load %arg9[%c0_15, %c0_16, %c1_17, %c0_18] : memref<2x6x8x128xf32, #tpu.memory_space<vmem>>, vector<2x4x4x128xf32>
    %15 = vector.shape_cast %14 : vector<2x4x4x128xf32> to vector<32x128xf32>
    %c0_19 = arith.constant 0 : index
    %c128 = arith.constant 128 : index
    %c0_20 = arith.constant 0 : index
    %16 = vector.load %arg2[%c0_19, %c128, %c0_20] : memref<1x1152x128xf32, #tpu.memory_space<vmem>>, vector<1x128x128xf32>
    %17 = vector.shape_cast %16 : vector<1x128x128xf32> to vector<128x128xf32>
    %cst_21 = arith.constant dense<0.000000e+00> : vector<32x128xf32>
    %18 = tpu.matmul %15, %17, %cst_21 {dimension_numbers = #tpu.dot_dimension_numbers<[1], [0], [0], [1], [0, 0, 1, 1], [], []>} : vector<32x128xf32>, vector<128x128xf32>, vector<32x128xf32> -> vector<32x128xf32>
    %19 = arith.addf %13, %18 : vector<32x128xf32>
    %c0_22 = arith.constant 0 : index
    %c0_23 = arith.constant 0 : index
    %c2 = arith.constant 2 : index
    %c0_24 = arith.constant 0 : index
    %20 = vector.load %arg9[%c0_22, %c0_23, %c2, %c0_24] : memref<2x6x8x128xf32, #tpu.memory_space<vmem>>, vector<2x4x4x128xf32>
    %21 = vector.shape_cast %20 : vector<2x4x4x128xf32> to vector<32x128xf32>
    %c0_25 = arith.constant 0 : index
    %c256 = arith.constant 256 : index
    %c0_26 = arith.constant 0 : index
    %22 = vector.load %arg2[%c0_25, %c256, %c0_26] : memref<1x1152x128xf32, #tpu.memory_space<vmem>>, vector<1x128x128xf32>
    %23 = vector.shape_cast %22 : vector<1x128x128xf32> to vector<128x128xf32>
    %cst_27 = arith.constant dense<0.000000e+00> : vector<32x128xf32>
    %24 = tpu.matmul %21, %23, %cst_27 {dimension_numbers = #tpu.dot_dimension_numbers<[1], [0], [0], [1], [0, 0, 1, 1], [], []>} : vector<32x128xf32>, vector<128x128xf32>, vector<32x128xf32> -> vector<32x128xf32>
    %25 = arith.addf %19, %24 : vector<32x128xf32>
    %c0_28 = arith.constant 0 : index
    %c1_29 = arith.constant 1 : index
    %c0_30 = arith.constant 0 : index
    %c0_31 = arith.constant 0 : index
    %26 = vector.load %arg9[%c0_28, %c1_29, %c0_30, %c0_31] : memref<2x6x8x128xf32, #tpu.memory_space<vmem>>, vector<2x4x4x128xf32>
    %27 = vector.shape_cast %26 : vector<2x4x4x128xf32> to vector<32x128xf32>
    %c0_32 = arith.constant 0 : index
    %c384 = arith.constant 384 : index
    %c0_33 = arith.constant 0 : index
    %28 = vector.load %arg2[%c0_32, %c384, %c0_33] : memref<1x1152x128xf32, #tpu.memory_space<vmem>>, vector<1x128x128xf32>
    %29 = vector.shape_cast %28 : vector<1x128x128xf32> to vector<128x128xf32>
    %cst_34 = arith.constant dense<0.000000e+00> : vector<32x128xf32>
    %30 = tpu.matmul %27, %29, %cst_34 {dimension_numbers = #tpu.dot_dimension_numbers<[1], [0], [0], [1], [0, 0, 1, 1], [], []>} : vector<32x128xf32>, vector<128x128xf32>, vector<32x128xf32> -> vector<32x128xf32>
    %31 = arith.addf %25, %30 : vector<32x128xf32>
    %c0_35 = arith.constant 0 : index
    %c1_36 = arith.constant 1 : index
    %c1_37 = arith.constant 1 : index
    %c0_38 = arith.constant 0 : index
    %32 = vector.load %arg9[%c0_35, %c1_36, %c1_37, %c0_38] : memref<2x6x8x128xf32, #tpu.memory_space<vmem>>, vector<2x4x4x128xf32>
    %33 = vector.shape_cast %32 : vector<2x4x4x128xf32> to vector<32x128xf32>
    %c0_39 = arith.constant 0 : index
    %c512 = arith.constant 512 : index
    %c0_40 = arith.constant 0 : index
    %34 = vector.load %arg2[%c0_39, %c512, %c0_40] : memref<1x1152x128xf32, #tpu.memory_space<vmem>>, vector<1x128x128xf32>
    %35 = vector.shape_cast %34 : vector<1x128x128xf32> to vector<128x128xf32>
    %cst_41 = arith.constant dense<0.000000e+00> : vector<32x128xf32>
    %36 = tpu.matmul %33, %35, %cst_41 {dimension_numbers = #tpu.dot_dimension_numbers<[1], [0], [0], [1], [0, 0, 1, 1], [], []>} : vector<32x128xf32>, vector<128x128xf32>, vector<32x128xf32> -> vector<32x128xf32>
    %37 = arith.addf %31, %36 : vector<32x128xf32>
    %c0_42 = arith.constant 0 : index
    %c1_43 = arith.constant 1 : index
    %c2_44 = arith.constant 2 : index
    %c0_45 = arith.constant 0 : index
    %38 = vector.load %arg9[%c0_42, %c1_43, %c2_44, %c0_45] : memref<2x6x8x128xf32, #tpu.memory_space<vmem>>, vector<2x4x4x128xf32>
    %39 = vector.shape_cast %38 : vector<2x4x4x128xf32> to vector<32x128xf32>
    %c0_46 = arith.constant 0 : index
    %c640 = arith.constant 640 : index
    %c0_47 = arith.constant 0 : index
    %40 = vector.load %arg2[%c0_46, %c640, %c0_47] : memref<1x1152x128xf32, #tpu.memory_space<vmem>>, vector<1x128x128xf32>
    %41 = vector.shape_cast %40 : vector<1x128x128xf32> to vector<128x128xf32>
    %cst_48 = arith.constant dense<0.000000e+00> : vector<32x128xf32>
    %42 = tpu.matmul %39, %41, %cst_48 {dimension_numbers = #tpu.dot_dimension_numbers<[1], [0], [0], [1], [0, 0, 1, 1], [], []>} : vector<32x128xf32>, vector<128x128xf32>, vector<32x128xf32> -> vector<32x128xf32>
    %43 = arith.addf %37, %42 : vector<32x128xf32>
    %c0_49 = arith.constant 0 : index
    %c2_50 = arith.constant 2 : index
    %c0_51 = arith.constant 0 : index
    %c0_52 = arith.constant 0 : index
    %44 = vector.load %arg9[%c0_49, %c2_50, %c0_51, %c0_52] : memref<2x6x8x128xf32, #tpu.memory_space<vmem>>, vector<2x4x4x128xf32>
    %45 = vector.shape_cast %44 : vector<2x4x4x128xf32> to vector<32x128xf32>
    %c0_53 = arith.constant 0 : index
    %c768 = arith.constant 768 : index
    %c0_54 = arith.constant 0 : index
    %46 = vector.load %arg2[%c0_53, %c768, %c0_54] : memref<1x1152x128xf32, #tpu.memory_space<vmem>>, vector<1x128x128xf32>
    %47 = vector.shape_cast %46 : vector<1x128x128xf32> to vector<128x128xf32>
    %cst_55 = arith.constant dense<0.000000e+00> : vector<32x128xf32>
    %48 = tpu.matmul %45, %47, %cst_55 {dimension_numbers = #tpu.dot_dimension_numbers<[1], [0], [0], [1], [0, 0, 1, 1], [], []>} : vector<32x128xf32>, vector<128x128xf32>, vector<32x128xf32> -> vector<32x128xf32>
    %49 = arith.addf %43, %48 : vector<32x128xf32>
    %c0_56 = arith.constant 0 : index
    %c2_57 = arith.constant 2 : index
    %c1_58 = arith.constant 1 : index
    %c0_59 = arith.constant 0 : index
    %50 = vector.load %arg9[%c0_56, %c2_57, %c1_58, %c0_59] : memref<2x6x8x128xf32, #tpu.memory_space<vmem>>, vector<2x4x4x128xf32>
    %51 = vector.shape_cast %50 : vector<2x4x4x128xf32> to vector<32x128xf32>
    %c0_60 = arith.constant 0 : index
    %c896 = arith.constant 896 : index
    %c0_61 = arith.constant 0 : index
    %52 = vector.load %arg2[%c0_60, %c896, %c0_61] : memref<1x1152x128xf32, #tpu.memory_space<vmem>>, vector<1x128x128xf32>
    %53 = vector.shape_cast %52 : vector<1x128x128xf32> to vector<128x128xf32>
    %cst_62 = arith.constant dense<0.000000e+00> : vector<32x128xf32>
    %54 = tpu.matmul %51, %53, %cst_62 {dimension_numbers = #tpu.dot_dimension_numbers<[1], [0], [0], [1], [0, 0, 1, 1], [], []>} : vector<32x128xf32>, vector<128x128xf32>, vector<32x128xf32> -> vector<32x128xf32>
    %55 = arith.addf %49, %54 : vector<32x128xf32>
    %c0_63 = arith.constant 0 : index
    %c2_64 = arith.constant 2 : index
    %c2_65 = arith.constant 2 : index
    %c0_66 = arith.constant 0 : index
    %56 = vector.load %arg9[%c0_63, %c2_64, %c2_65, %c0_66] : memref<2x6x8x128xf32, #tpu.memory_space<vmem>>, vector<2x4x4x128xf32>
    %57 = vector.shape_cast %56 : vector<2x4x4x128xf32> to vector<32x128xf32>
    %c0_67 = arith.constant 0 : index
    %c1024 = arith.constant 1024 : index
    %c0_68 = arith.constant 0 : index
    %58 = vector.load %arg2[%c0_67, %c1024, %c0_68] : memref<1x1152x128xf32, #tpu.memory_space<vmem>>, vector<1x128x128xf32>
    %59 = vector.shape_cast %58 : vector<1x128x128xf32> to vector<128x128xf32>
    %cst_69 = arith.constant dense<0.000000e+00> : vector<32x128xf32>
    %60 = tpu.matmul %57, %59, %cst_69 {dimension_numbers = #tpu.dot_dimension_numbers<[1], [0], [0], [1], [0, 0, 1, 1], [], []>} : vector<32x128xf32>, vector<128x128xf32>, vector<32x128xf32> -> vector<32x128xf32>
    %61 = arith.addf %55, %60 : vector<32x128xf32>
    %cst_70 = arith.constant dense<0.000000e+00> : vector<128xf32>
    %62 = vector.multi_reduction <add>, %61, %cst_70 [0] : vector<32x128xf32> to vector<128xf32>
    %63 = vector.shape_cast %62 : vector<128xf32> to vector<1x128xf32>
    %64 = arith.mulf %61, %61 : vector<32x128xf32>
    %cst_71 = arith.constant dense<0.000000e+00> : vector<128xf32>
    %65 = vector.multi_reduction <add>, %64, %cst_71 [0] : vector<32x128xf32> to vector<128xf32>
    %66 = vector.shape_cast %65 : vector<128xf32> to vector<1x128xf32>
    %cst_72 = arith.constant 3.125000e-02 : f32
    %67 = vector.broadcast %cst_72 : f32 to vector<1x128xf32>
    %68 = arith.mulf %63, %67 : vector<1x128xf32>
    %cst_73 = arith.constant 3.125000e-02 : f32
    %69 = vector.broadcast %cst_73 : f32 to vector<1x128xf32>
    %70 = arith.mulf %66, %69 : vector<1x128xf32>
    %71 = arith.mulf %68, %68 : vector<1x128xf32>
    %72 = arith.subf %70, %71 : vector<1x128xf32>
    %cst_74 = arith.constant 0.000000e+00 : f32
    %73 = vector.broadcast %cst_74 : f32 to vector<1x128xf32>
    %74 = arith.maximumf %72, %73 : vector<1x128xf32>
    %c0_75 = arith.constant 0 : index
    %c0_76 = arith.constant 0 : index
    %c0_77 = arith.constant 0 : index
    %75 = vector.load %arg3[%c0_75, %c0_76, %c0_77] : memref<1x1x128xf32, #tpu.memory_space<vmem>>, vector<1x1x128xf32>
    %76 = vector.shape_cast %75 : vector<1x1x128xf32> to vector<1x128xf32>
    %cst_78 = arith.constant 9.99999974E-6 : f32
    %77 = vector.broadcast %cst_78 : f32 to vector<1x128xf32>
    %78 = arith.addf %74, %77 : vector<1x128xf32>
    %79 = math.rsqrt %78 : vector<1x128xf32>
    %80 = arith.mulf %76, %79 : vector<1x128xf32>
    %c0_79 = arith.constant 0 : index
    %c0_80 = arith.constant 0 : index
    %c0_81 = arith.constant 0 : index
    %81 = vector.load %arg4[%c0_79, %c0_80, %c0_81] : memref<1x1x128xf32, #tpu.memory_space<vmem>>, vector<1x1x128xf32>
    %82 = vector.shape_cast %81 : vector<1x1x128xf32> to vector<1x128xf32>
    %83 = arith.mulf %68, %80 : vector<1x128xf32>
    %84 = arith.subf %82, %83 : vector<1x128xf32>
    %85 = vector.broadcast %80 : vector<1x128xf32> to vector<32x128xf32>
    %86 = arith.mulf %61, %85 : vector<32x128xf32>
    %87 = vector.broadcast %84 : vector<1x128xf32> to vector<32x128xf32>
    %88 = arith.addf %86, %87 : vector<32x128xf32>
    %cst_82 = arith.constant 0.000000e+00 : f32
    %89 = vector.broadcast %cst_82 : f32 to vector<32x128xf32>
    %90 = arith.maximumf %88, %89 : vector<32x128xf32>
    %91 = vector.shape_cast %90 : vector<32x128xf32> to vector<2x4x4x128xf32>
    %c0_83 = arith.constant 0 : index
    %c1_84 = arith.constant 1 : index
    %c1_85 = arith.constant 1 : index
    %c0_86 = arith.constant 0 : index
    %92 = vector.load %arg9[%c0_83, %c1_84, %c1_85, %c0_86] : memref<2x6x8x128xf32, #tpu.memory_space<vmem>>, vector<2x4x4x128xf32>
    tpu.vector_store %arg9[%c0_83, %c1_84, %c1_85, %c0_86], %91 {strides = array<i32>} : memref<2x6x8x128xf32, #tpu.memory_space<vmem>>, vector<2x4x4x128xf32>,
    %cst_87 = arith.constant 0.000000e+00 : f32
    %93 = vector.broadcast %cst_87 : f32 to vector<32x128xf32>
    %c0_88 = arith.constant 0 : index
    %c0_89 = arith.constant 0 : index
    %c0_90 = arith.constant 0 : index
    %c0_91 = arith.constant 0 : index
    %94 = vector.load %arg9[%c0_88, %c0_89, %c0_90, %c0_91] : memref<2x6x8x128xf32, #tpu.memory_space<vmem>>, vector<2x4x4x128xf32>
    %95 = vector.shape_cast %94 : vector<2x4x4x128xf32> to vector<32x128xf32>
    %c0_92 = arith.constant 0 : index
    %c0_93 = arith.constant 0 : index
    %c0_94 = arith.constant 0 : index
    %96 = vector.load %arg5[%c0_92, %c0_93, %c0_94] : memref<1x1152x128xf32, #tpu.memory_space<vmem>>, vector<1x128x128xf32>
    %97 = vector.shape_cast %96 : vector<1x128x128xf32> to vector<128x128xf32>
    %cst_95 = arith.constant dense<0.000000e+00> : vector<32x128xf32>
    %98 = tpu.matmul %95, %97, %cst_95 {dimension_numbers = #tpu.dot_dimension_numbers<[1], [0], [0], [1], [0, 0, 1, 1], [], []>} : vector<32x128xf32>, vector<128x128xf32>, vector<32x128xf32> -> vector<32x128xf32>
    %99 = arith.addf %93, %98 : vector<32x128xf32>
    %c0_96 = arith.constant 0 : index
    %c0_97 = arith.constant 0 : index
    %c1_98 = arith.constant 1 : index
    %c0_99 = arith.constant 0 : index
    %100 = vector.load %arg9[%c0_96, %c0_97, %c1_98, %c0_99] : memref<2x6x8x128xf32, #tpu.memory_space<vmem>>, vector<2x4x4x128xf32>
    %101 = vector.shape_cast %100 : vector<2x4x4x128xf32> to vector<32x128xf32>
    %c0_100 = arith.constant 0 : index
    %c128_101 = arith.constant 128 : index
    %c0_102 = arith.constant 0 : index
    %102 = vector.load %arg5[%c0_100, %c128_101, %c0_102] : memref<1x1152x128xf32, #tpu.memory_space<vmem>>, vector<1x128x128xf32>
    %103 = vector.shape_cast %102 : vector<1x128x128xf32> to vector<128x128xf32>
    %cst_103 = arith.constant dense<0.000000e+00> : vector<32x128xf32>
    %104 = tpu.matmul %101, %103, %cst_103 {dimension_numbers = #tpu.dot_dimension_numbers<[1], [0], [0], [1], [0, 0, 1, 1], [], []>} : vector<32x128xf32>, vector<128x128xf32>, vector<32x128xf32> -> vector<32x128xf32>
    %105 = arith.addf %99, %104 : vector<32x128xf32>
    %c0_104 = arith.constant 0 : index
    %c0_105 = arith.constant 0 : index
    %c2_106 = arith.constant 2 : index
    %c0_107 = arith.constant 0 : index
    %106 = vector.load %arg9[%c0_104, %c0_105, %c2_106, %c0_107] : memref<2x6x8x128xf32, #tpu.memory_space<vmem>>, vector<2x4x4x128xf32>
    %107 = vector.shape_cast %106 : vector<2x4x4x128xf32> to vector<32x128xf32>
    %c0_108 = arith.constant 0 : index
    %c256_109 = arith.constant 256 : index
    %c0_110 = arith.constant 0 : index
    %108 = vector.load %arg5[%c0_108, %c256_109, %c0_110] : memref<1x1152x128xf32, #tpu.memory_space<vmem>>, vector<1x128x128xf32>
    %109 = vector.shape_cast %108 : vector<1x128x128xf32> to vector<128x128xf32>
    %cst_111 = arith.constant dense<0.000000e+00> : vector<32x128xf32>
    %110 = tpu.matmul %107, %109, %cst_111 {dimension_numbers = #tpu.dot_dimension_numbers<[1], [0], [0], [1], [0, 0, 1, 1], [], []>} : vector<32x128xf32>, vector<128x128xf32>, vector<32x128xf32> -> vector<32x128xf32>
    %111 = arith.addf %105, %110 : vector<32x128xf32>
    %c0_112 = arith.constant 0 : index
    %c1_113 = arith.constant 1 : index
    %c0_114 = arith.constant 0 : index
    %c0_115 = arith.constant 0 : index
    %112 = vector.load %arg9[%c0_112, %c1_113, %c0_114, %c0_115] : memref<2x6x8x128xf32, #tpu.memory_space<vmem>>, vector<2x4x4x128xf32>
    %113 = vector.shape_cast %112 : vector<2x4x4x128xf32> to vector<32x128xf32>
    %c0_116 = arith.constant 0 : index
    %c384_117 = arith.constant 384 : index
    %c0_118 = arith.constant 0 : index
    %114 = vector.load %arg5[%c0_116, %c384_117, %c0_118] : memref<1x1152x128xf32, #tpu.memory_space<vmem>>, vector<1x128x128xf32>
    %115 = vector.shape_cast %114 : vector<1x128x128xf32> to vector<128x128xf32>
    %cst_119 = arith.constant dense<0.000000e+00> : vector<32x128xf32>
    %116 = tpu.matmul %113, %115, %cst_119 {dimension_numbers = #tpu.dot_dimension_numbers<[1], [0], [0], [1], [0, 0, 1, 1], [], []>} : vector<32x128xf32>, vector<128x128xf32>, vector<32x128xf32> -> vector<32x128xf32>
    %117 = arith.addf %111, %116 : vector<32x128xf32>
    %c0_120 = arith.constant 0 : index
    %c1_121 = arith.constant 1 : index
    %c1_122 = arith.constant 1 : index
    %c0_123 = arith.constant 0 : index
    %118 = vector.load %arg9[%c0_120, %c1_121, %c1_122, %c0_123] : memref<2x6x8x128xf32, #tpu.memory_space<vmem>>, vector<2x4x4x128xf32>
    %119 = vector.shape_cast %118 : vector<2x4x4x128xf32> to vector<32x128xf32>
    %c0_124 = arith.constant 0 : index
    %c512_125 = arith.constant 512 : index
    %c0_126 = arith.constant 0 : index
    %120 = vector.load %arg5[%c0_124, %c512_125, %c0_126] : memref<1x1152x128xf32, #tpu.memory_space<vmem>>, vector<1x128x128xf32>
    %121 = vector.shape_cast %120 : vector<1x128x128xf32> to vector<128x128xf32>
    %cst_127 = arith.constant dense<0.000000e+00> : vector<32x128xf32>
    %122 = tpu.matmul %119, %121, %cst_127 {dimension_numbers = #tpu.dot_dimension_numbers<[1], [0], [0], [1], [0, 0, 1, 1], [], []>} : vector<32x128xf32>, vector<128x128xf32>, vector<32x128xf32> -> vector<32x128xf32>
    %123 = arith.addf %117, %122 : vector<32x128xf32>
    %c0_128 = arith.constant 0 : index
    %c1_129 = arith.constant 1 : index
    %c2_130 = arith.constant 2 : index
    %c0_131 = arith.constant 0 : index
    %124 = vector.load %arg9[%c0_128, %c1_129, %c2_130, %c0_131] : memref<2x6x8x128xf32, #tpu.memory_space<vmem>>, vector<2x4x4x128xf32>
    %125 = vector.shape_cast %124 : vector<2x4x4x128xf32> to vector<32x128xf32>
    %c0_132 = arith.constant 0 : index
    %c640_133 = arith.constant 640 : index
    %c0_134 = arith.constant 0 : index
    %126 = vector.load %arg5[%c0_132, %c640_133, %c0_134] : memref<1x1152x128xf32, #tpu.memory_space<vmem>>, vector<1x128x128xf32>
    %127 = vector.shape_cast %126 : vector<1x128x128xf32> to vector<128x128xf32>
    %cst_135 = arith.constant dense<0.000000e+00> : vector<32x128xf32>
    %128 = tpu.matmul %125, %127, %cst_135 {dimension_numbers = #tpu.dot_dimension_numbers<[1], [0], [0], [1], [0, 0, 1, 1], [], []>} : vector<32x128xf32>, vector<128x128xf32>, vector<32x128xf32> -> vector<32x128xf32>
    %129 = arith.addf %123, %128 : vector<32x128xf32>
    %c0_136 = arith.constant 0 : index
    %c2_137 = arith.constant 2 : index
    %c0_138 = arith.constant 0 : index
    %c0_139 = arith.constant 0 : index
    %130 = vector.load %arg9[%c0_136, %c2_137, %c0_138, %c0_139] : memref<2x6x8x128xf32, #tpu.memory_space<vmem>>, vector<2x4x4x128xf32>
    %131 = vector.shape_cast %130 : vector<2x4x4x128xf32> to vector<32x128xf32>
    %c0_140 = arith.constant 0 : index
    %c768_141 = arith.constant 768 : index
    %c0_142 = arith.constant 0 : index
    %132 = vector.load %arg5[%c0_140, %c768_141, %c0_142] : memref<1x1152x128xf32, #tpu.memory_space<vmem>>, vector<1x128x128xf32>
    %133 = vector.shape_cast %132 : vector<1x128x128xf32> to vector<128x128xf32>
    %cst_143 = arith.constant dense<0.000000e+00> : vector<32x128xf32>
    %134 = tpu.matmul %131, %133, %cst_143 {dimension_numbers = #tpu.dot_dimension_numbers<[1], [0], [0], [1], [0, 0, 1, 1], [], []>} : vector<32x128xf32>, vector<128x128xf32>, vector<32x128xf32> -> vector<32x128xf32>
    %135 = arith.addf %129, %134 : vector<32x128xf32>
    %c0_144 = arith.constant 0 : index
    %c2_145 = arith.constant 2 : index
    %c1_146 = arith.constant 1 : index
    %c0_147 = arith.constant 0 : index
    %136 = vector.load %arg9[%c0_144, %c2_145, %c1_146, %c0_147] : memref<2x6x8x128xf32, #tpu.memory_space<vmem>>, vector<2x4x4x128xf32>
    %137 = vector.shape_cast %136 : vector<2x4x4x128xf32> to vector<32x128xf32>
    %c0_148 = arith.constant 0 : index
    %c896_149 = arith.constant 896 : index
    %c0_150 = arith.constant 0 : index
    %138 = vector.load %arg5[%c0_148, %c896_149, %c0_150] : memref<1x1152x128xf32, #tpu.memory_space<vmem>>, vector<1x128x128xf32>
    %139 = vector.shape_cast %138 : vector<1x128x128xf32> to vector<128x128xf32>
    %cst_151 = arith.constant dense<0.000000e+00> : vector<32x128xf32>
    %140 = tpu.matmul %137, %139, %cst_151 {dimension_numbers = #tpu.dot_dimension_numbers<[1], [0], [0], [1], [0, 0, 1, 1], [], []>} : vector<32x128xf32>, vector<128x128xf32>, vector<32x128xf32> -> vector<32x128xf32>
    %141 = arith.addf %135, %140 : vector<32x128xf32>
    %c0_152 = arith.constant 0 : index
    %c2_153 = arith.constant 2 : index
    %c2_154 = arith.constant 2 : index
    %c0_155 = arith.constant 0 : index
    %142 = vector.load %arg9[%c0_152, %c2_153, %c2_154, %c0_155] : memref<2x6x8x128xf32, #tpu.memory_space<vmem>>, vector<2x4x4x128xf32>
    %143 = vector.shape_cast %142 : vector<2x4x4x128xf32> to vector<32x128xf32>
    %c0_156 = arith.constant 0 : index
    %c1024_157 = arith.constant 1024 : index
    %c0_158 = arith.constant 0 : index
    %144 = vector.load %arg5[%c0_156, %c1024_157, %c0_158] : memref<1x1152x128xf32, #tpu.memory_space<vmem>>, vector<1x128x128xf32>
    %145 = vector.shape_cast %144 : vector<1x128x128xf32> to vector<128x128xf32>
    %cst_159 = arith.constant dense<0.000000e+00> : vector<32x128xf32>
    %146 = tpu.matmul %143, %145, %cst_159 {dimension_numbers = #tpu.dot_dimension_numbers<[1], [0], [0], [1], [0, 0, 1, 1], [], []>} : vector<32x128xf32>, vector<128x128xf32>, vector<32x128xf32> -> vector<32x128xf32>
    %147 = arith.addf %141, %146 : vector<32x128xf32>
    %cst_160 = arith.constant dense<0.000000e+00> : vector<128xf32>
    %148 = vector.multi_reduction <add>, %147, %cst_160 [0] : vector<32x128xf32> to vector<128xf32>
    %149 = vector.shape_cast %148 : vector<128xf32> to vector<1x128xf32>
    %150 = arith.mulf %147, %147 : vector<32x128xf32>
    %cst_161 = arith.constant dense<0.000000e+00> : vector<128xf32>
    %151 = vector.multi_reduction <add>, %150, %cst_161 [0] : vector<32x128xf32> to vector<128xf32>
    %152 = vector.shape_cast %151 : vector<128xf32> to vector<1x128xf32>
    %cst_162 = arith.constant 3.125000e-02 : f32
    %153 = vector.broadcast %cst_162 : f32 to vector<1x128xf32>
    %154 = arith.mulf %149, %153 : vector<1x128xf32>
    %cst_163 = arith.constant 3.125000e-02 : f32
    %155 = vector.broadcast %cst_163 : f32 to vector<1x128xf32>
    %156 = arith.mulf %152, %155 : vector<1x128xf32>
    %157 = arith.mulf %154, %154 : vector<1x128xf32>
    %158 = arith.subf %156, %157 : vector<1x128xf32>
    %cst_164 = arith.constant 0.000000e+00 : f32
    %159 = vector.broadcast %cst_164 : f32 to vector<1x128xf32>
    %160 = arith.maximumf %158, %159 : vector<1x128xf32>
    %c0_165 = arith.constant 0 : index
    %c0_166 = arith.constant 0 : index
    %c0_167 = arith.constant 0 : index
    %161 = vector.load %arg6[%c0_165, %c0_166, %c0_167] : memref<1x1x128xf32, #tpu.memory_space<vmem>>, vector<1x1x128xf32>
    %162 = vector.shape_cast %161 : vector<1x1x128xf32> to vector<1x128xf32>
    %cst_168 = arith.constant 9.99999974E-6 : f32
    %163 = vector.broadcast %cst_168 : f32 to vector<1x128xf32>
    %164 = arith.addf %160, %163 : vector<1x128xf32>
    %165 = math.rsqrt %164 : vector<1x128xf32>
    %166 = arith.mulf %162, %165 : vector<1x128xf32>
    %c0_169 = arith.constant 0 : index
    %c0_170 = arith.constant 0 : index
    %c0_171 = arith.constant 0 : index
    %167 = vector.load %arg7[%c0_169, %c0_170, %c0_171] : memref<1x1x128xf32, #tpu.memory_space<vmem>>, vector<1x1x128xf32>
    %168 = vector.shape_cast %167 : vector<1x1x128xf32> to vector<1x128xf32>
    %169 = arith.mulf %154, %166 : vector<1x128xf32>
    %170 = arith.subf %168, %169 : vector<1x128xf32>
    %171 = vector.broadcast %166 : vector<1x128xf32> to vector<32x128xf32>
    %172 = arith.mulf %147, %171 : vector<32x128xf32>
    %173 = vector.broadcast %170 : vector<1x128xf32> to vector<32x128xf32>
    %174 = arith.addf %172, %173 : vector<32x128xf32>
    %175 = arith.addf %174, %4 : vector<32x128xf32>
    %cst_172 = arith.constant 0.000000e+00 : f32
    %176 = vector.broadcast %cst_172 : f32 to vector<32x128xf32>
    %177 = arith.maximumf %175, %176 : vector<32x128xf32>
    %178 = vector.shape_cast %177 : vector<32x128xf32> to vector<2x4x4x128xf32>
    %c0_173 = arith.constant 0 : index
    %c0_174 = arith.constant 0 : index
    %c0_175 = arith.constant 0 : index
    %c0_176 = arith.constant 0 : index
    %179 = vector.load %arg8[%c0_173, %c0_174, %c0_175, %c0_176] : memref<2x4x4x128xf32, #tpu.memory_space<vmem>>, vector<2x4x4x128xf32>
    tpu.vector_store %arg8[%c0_173, %c0_174, %c0_175, %c0_176], %178 {strides = array<i32>} : memref<2x4x4x128xf32, #tpu.memory_space<vmem>>, vector<2x4x4x128xf32>,
    return
  }
  func.func @transform_1(%arg0: i32) -> (i32, i32, i32) {
    %c0_i32 = arith.constant 0 : i32
    %c0_i32_0 = arith.constant 0 : i32
    %c0_i32_1 = arith.constant 0 : i32
    return %arg0, %c0_i32, %c0_i32_0 : i32, i32, i32
  }
  func.func @transform_2(%arg0: i32) -> (i32, i32, i32) {
    %c0_i32 = arith.constant 0 : i32
    %c0_i32_0 = arith.constant 0 : i32
    %c0_i32_1 = arith.constant 0 : i32
    return %arg0, %c0_i32, %c0_i32_0 : i32, i32, i32
  }
  func.func @transform_3(%arg0: i32) -> (i32, i32, i32) {
    %c0_i32 = arith.constant 0 : i32
    %c0_i32_0 = arith.constant 0 : i32
    %c0_i32_1 = arith.constant 0 : i32
    return %arg0, %c0_i32, %c0_i32_0 : i32, i32, i32
  }
  func.func @transform_4(%arg0: i32) -> (i32, i32, i32) {
    %c0_i32 = arith.constant 0 : i32
    %c0_i32_0 = arith.constant 0 : i32
    %c0_i32_1 = arith.constant 0 : i32
    return %arg0, %c0_i32, %c0_i32_0 : i32, i32, i32
  }
  func.func @transform_5(%arg0: i32) -> (i32, i32, i32) {
    %c0_i32 = arith.constant 0 : i32
    %c0_i32_0 = arith.constant 0 : i32
    %c0_i32_1 = arith.constant 0 : i32
    return %arg0, %c0_i32, %c0_i32_0 : i32, i32, i32
  }
  func.func @transform_6(%arg0: i32) -> (i32, i32, i32) {
    %c0_i32 = arith.constant 0 : i32
    %c0_i32_0 = arith.constant 0 : i32
    %c0_i32_1 = arith.constant 0 : i32
    return %arg0, %c0_i32, %c0_i32_0 : i32, i32, i32
  }
  func.func @transform_7(%arg0: i32) -> (i32, i32, i32, i32) {
    %c0_i32 = arith.constant 0 : i32
    %c0_i32_0 = arith.constant 0 : i32
    %c0_i32_1 = arith.constant 0 : i32
    %c0_i32_2 = arith.constant 0 : i32
    %c0_i32_3 = arith.constant 0 : i32
    return %c0_i32, %c0_i32_0, %c0_i32_1, %c0_i32_2 : i32, i32, i32, i32
  }
}

</mosaic_0001>

<llo_original>
// kernel: decoder_forward.2
$region0: #{decoder_forward.2}
  #allocation0 [shape = 'u32[]', space=smem, size = 0x4, offset = 0x4, fixed_abs, tag = 'smem constant byte address 0x4 - core index']
  #allocation1 [shape = 'u32[144,128]{1,0:T(1,128)}', space=vmem, size = 0x12000, scoped, tag = 'internal scratch']
  %s0 = inlined_call_operand.vmem [shape: f32[16,16], index: 0, kind: input, shape index: {}]
  %s1 = inlined_call_operand.vmem [shape: f32[16,128], index: 1, kind: input, shape index: {}]
  %s2 = inlined_call_operand.vmem [shape: f32[1,128], index: 2, kind: input, shape index: {}]
  %s3 = inlined_call_operand.vmem [shape: f32[16,128], index: 3, kind: output, shape index: {}]
  %s4 = sld [smem:[#allocation0]]
  $region22: #{decoder_forward.2} parent=0
    _
  %s6 = ssub.s32 1, %s4
  %s7 = scalar_select 0, %s6, %s4
  // Predicated region
  $region2: #{decoder_forward.2} parent=0 // pred_check
    _
  $region3: #{decoder_forward.2} parent=0 // pred_check_branch
    %9 = sbr.rel (0) target = $region5
  $region4: #{decoder_forward.2} parent=0 // pred_region
    _
  $region5: #{decoder_forward.2} parent=0 // pred_fallthru
    _
  // Predicated region
  $region6: #{decoder_forward.2} parent=0 // pred_check
    _
  $region7: #{decoder_forward.2} parent=0 // pred_check_branch
    %11 = sbr.rel (0) target = $region9
  $region8: #{decoder_forward.2} parent=0 // pred_region
    _
  $region9: #{decoder_forward.2} parent=0 // pred_fallthru
    _
  // Predicated region
  $region10: #{decoder_forward.2} parent=0 // pred_check
    _
  $region11: #{decoder_forward.2} parent=0 // pred_check_branch
    %13 = sbr.rel (0) target = $region13
  $region12: #{decoder_forward.2} parent=0 // pred_region
    _
  $region13: #{decoder_forward.2} parent=0 // pred_fallthru
    _
  %v14 = vld [vmem:[%s0] sm:$0xff]
  %v15 = vld [vmem:[%s0 + $0x8] sm:$0xff]
  %v16 = vld [vmem:[%s1] sm:$0xff]
  %v17 = vld [vmem:[%s1 + $0x8] sm:$0xff]
  %v18 = vld [vmem:[%s2] sm:$0x1]
  %v20 = vlaneseq
  %v21 = vshrl.u32 %v20, 7
  %v22 = vsub.s32 0, %v21
  %v23 = vrot.slane %v18, %v22
  %vm25 = vcmask 130048
  %v27 = vsel %vm25, %v14, 0
  %v30 = vsel %vm25, %v15, 0
  %32 = vmatprep.subr.mxu0 0.0
  %33 = vmatpush1.msra.mxu0 %v16
  %34 = vmatprep.subr.mxu0 0.0
  %35 = vmatpush1.msra.mxu0 %v17
  %36 = vmatprep.subr.mxu0 0.0
  %37 = vmatpush1.msra.mxu0 0.0
  %38 = vmatprep.subr.mxu0 0.0
  %39 = vmatpush1.msra.mxu0 0.0
  %40 = vmatprep.subr.mxu0 0.0
  %41 = vmatpush1.msra.mxu0 0.0
  %42 = vmatprep.subr.mxu0 0.0
  %43 = vmatpush1.msra.mxu0 0.0
  %44 = vmatprep.subr.mxu0 0.0
  %45 = vmatpush1.msra.mxu0 0.0
  %46 = vmatprep.subr.mxu0 0.0
  %47 = vmatpush1.msra.mxu0 0.0
  %48 = vmatprep.subr.mxu0 0.0
  %49 = vmatpush1.msra.mxu0 0.0
  %50 = vmatprep.subr.mxu0 0.0
  %51 = vmatpush1.msra.mxu0 0.0
  %52 = vmatprep.subr.mxu0 0.0
  %53 = vmatpush1.msra.mxu0 0.0
  %54 = vmatprep.subr.mxu0 0.0
  %55 = vmatpush1.msra.mxu0 0.0
  %56 = vmatprep.subr.mxu0 0.0
  %57 = vmatpush1.msra.mxu0 0.0
  %58 = vmatprep.subr.mxu0 0.0
  %59 = vmatpush1.msra.mxu0 0.0
  %60 = vmatprep.subr.mxu0 0.0
  %61 = vmatpush1.msra.mxu0 0.0
  %62 = vmatprep.subr.mxu0 0.0
  %63 = vmatpush1.msra.mxu0 0.0
  %64 = vmatprep.subr.mxu0 0.0
  %65 = vmatpush1.msra.mxu0 0.0
  %66 = vmatprep.subr.mxu0 0.0
  %67 = vmatpush1.msra.mxu0 0.0
  %68 = vmatprep.subr.mxu0 0.0
  %69 = vmatpush1.msra.mxu0 0.0
  %70 = vmatprep.subr.mxu0 0.0
  %71 = vmatpush1.msra.mxu0 0.0
  %72 = vmatprep.subr.mxu0 0.0
  %73 = vmatpush1.msra.mxu0 0.0
  %74 = vmatprep.subr.mxu0 0.0
  %75 = vmatpush1.msra.mxu0 0.0
  %76 = vmatprep.subr.mxu0 0.0
  %77 = vmatpush1.msra.mxu0 0.0
  %78 = vmatprep.subr.mxu0 0.0
  %79 = vmatpush1.msra.mxu0 0.0
  %80 = vmatprep.subr.mxu0 0.0
  %81 = vmatpush1.msra.mxu0 0.0
  %82 = vmatprep.subr.mxu0 0.0
  %83 = vmatpush1.msra.mxu0 0.0
  %84 = vmatprep.subr.mxu0 0.0
  %85 = vmatpush1.msra.mxu0 0.0
  %86 = vmatprep.subr.mxu0 0.0
  %87 = vmatpush1.msra.mxu0 0.0
  %88 = vmatprep.subr.mxu0 0.0
  %89 = vmatpush1.msra.mxu0 0.0
  %90 = vmatprep.subr.mxu0 0.0
  %91 = vmatpush1.msra.mxu0 0.0
  %92 = vmatprep.subr.mxu0 0.0
  %93 = vmatpush1.msra.mxu0 0.0
  %94 = vmatprep.subr.mxu0 0.0
  %95 = vmatpush1.msra.mxu0 0.0
  %96 = vmatprep.mubr.f32.mxu0 0.0
  %97 = vmatmul.mubr.f32.gmra.mrb[0].mxu0 %v27
  %v98 = vpop.f32.mrb[0].mxu0
  %v99 = vadd.f32 %v23, %v98
  %v100 = vpop.f32.mrb[0].mxu0
  %101 = vmatprep.mubr.f32.mxu0 0.0
  %102 = vmatmul.mubr.f32.gmra.mrb[0].mxu0 %v30
  %v103 = vpop.f32.mrb[0].mxu0
  %v104 = vadd.f32 %v23, %v103
  %v105 = vpop.f32.mrb[0].mxu0
  %106 = vdwg.mxu0
  %107 = vst [vmem:[%s3] sm:$0xff] %v99
  %108 = vst [vmem:[%s3 + $0x8] sm:$0xff] %v104
  // Predicated region
  $region14: #{decoder_forward.2} parent=0 // pred_check
    _
  $region15: #{decoder_forward.2} parent=0 // pred_check_branch
    %110 = sbr.rel (0) target = $region17
  $region16: #{decoder_forward.2} parent=0 // pred_region
    _
  $region17: #{decoder_forward.2} parent=0 // pred_fallthru
    _
  // Predicated region
  $region18: #{decoder_forward.2} parent=0 // pred_check
    _
  $region19: #{decoder_forward.2} parent=0 // pred_check_branch
    %112 = sbr.rel (0) target = $region21
  $region20: #{decoder_forward.2} parent=0 // pred_region
    _
  $region21: #{decoder_forward.2} parent=0 // pred_fallthru
    _

// kernel: decoder_forward.3
$region0: #{decoder_forward.3}
  #allocation0 [shape = 'u32[]', space=smem, size = 0x4, offset = 0x4, fixed_abs, tag = 'smem constant byte address 0x4 - core index']
  #allocation1 [shape = 'u32[144,128]{1,0:T(1,128)}', space=vmem, size = 0x12000, scoped, tag = 'internal scratch']
  #allocation2 [shape = 'f32[2,6,8,128]{3,2,1,0:T(8,128)}', space=vmem, size = 0xc000, scoped, tag = 'scratch operand']
  #allocation4 [shape = 's32[]', space=sflag, size = 0x4, offset = 0, fixed_abs, tag = 'sflag constant byte address 0x0 - dummy sync flag']
  %s0 = inlined_call_operand.vmem [shape: f32[2,4,4,128], index: 0, kind: input, shape index: {}, may-alias: {0,7}]
  %s1 = inlined_call_operand.vmem [shape: f32[2,1152,128], index: 1, kind: input, shape index: {}]
  %s2 = inlined_call_operand.vmem [shape: f32[2,1,128], index: 2, kind: input, shape index: {}]
  %s3 = inlined_call_operand.vmem [shape: f32[2,1,128], index: 3, kind: input, shape index: {}]
  %s4 = inlined_call_operand.vmem [shape: f32[2,1152,128], index: 4, kind: input, shape index: {}]
  %s5 = inlined_call_operand.vmem [shape: f32[2,1,128], index: 5, kind: input, shape index: {}]
  %s6 = inlined_call_operand.vmem [shape: f32[2,1,128], index: 6, kind: input, shape index: {}]
  %s7 = inlined_call_operand.vmem [shape: f32[2,4,4,128], index: 7, kind: output, shape index: {}, may-alias: {0,7}]
  %s8 = sld [smem:[#allocation0]]
  $region96: #{decoder_forward.3} parent=0
    _
  %s10 = ssub.s32 1, %s8
  %s11 = scalar_select 0, %s10, %s8
  loop: start=0, step=1, limit=4
  $region2: #{decoder_forward.3} parent=0 // loop_pre_header
    _
  $region3: #{decoder_forward.3} parent=0 // loop_header
    %s13 = sphi 0, %s17
    %p14 = scmp.ge.s32.totalorder %s13, 4
    %s23 = sphi 0, %s25
    %s26 = sphi 0, %s23
    %s27 = sphi 0, %s26
    %s43 = sphi 0, %s27
    %s49 = sphi 0, %s51
    %s52 = sphi 0, %s49
    %s53 = sphi 0, %s52
    %s69 = sphi 0, %s53
    %s75 = sphi 0, %s77
    %s78 = sphi 0, %s75
    %s79 = sphi 0, %s78
    %s95 = sphi 0, %s79
    %s101 = sphi 0, %s103
    %s104 = sphi 0, %s101
    %s105 = sphi 0, %s104
    %s121 = sphi 0, %s105
    %s127 = sphi 0, %s129
    %s130 = sphi 0, %s127
    %s131 = sphi 0, %s130
    %s147 = sphi 0, %s131
    %s153 = sphi 0, %s155
    %s156 = sphi 0, %s153
    %s157 = sphi 0, %s156
    %s173 = sphi 0, %s157
    %s177 = sphi 0, %s177
    %s179 = sphi 0, %s177
    %s180 = sphi 0, %s179
    %s194 = sphi 0, %s180
  $region4: #{decoder_forward.3} parent=0 // loop_header_branch
    %16 = sbr.rel (%p14) target = $region8
  $region5: #{decoder_forward.3} parent=0 // loop_body
    %s18 = ssub.s32 %s13, 1
    %s19 = ssub.s32 %s13, 2
    %s20 = sadd.s32 %s13, 1
    %s21 = ssub.s32 %s13, %s20
    %p22 = scmp.eq.s32.totalorder %s21, 0
    %s24 = sadd.s32 %s23, 1
    %s25 = scalar_select %p22, %s23, %s24
    %p28 = pneg %p22
    %p29 = scmp.eq.s32.totalorder %s13, 1
    %p30 = por %p28, %p29
    %p31 = scmp.ne.s32.totalorder %s23, %s26
    %p32 = scmp.eq.s32.totalorder %s13, 0
    %p33 = por %p31, %p32
    %p34 = scmp.ne.s32.totalorder %s23, %s26
    %p35 = scmp.eq.s32.totalorder %s18, 1
    %p36 = por %p34, %p35
    %p37 = scmp.ne.s32.totalorder %s26, %s27
    %p38 = scmp.eq.s32.totalorder %s18, 0
    %p39 = por %p37, %p38
    %p40 = scmp.ne.s32.totalorder %s26, %s27
    %p41 = scmp.eq.s32.totalorder %s19, 1
    %p42 = por %p40, %p41
    %p44 = scmp.ne.s32.totalorder %s27, %s43
    %p45 = scmp.eq.s32.totalorder %s19, 0
    %p46 = por %p44, %p45
    %s47 = ssub.s32 %s13, %s20
    %p48 = scmp.eq.s32.totalorder %s47, 0
    %s50 = sadd.s32 %s49, 1
    %s51 = scalar_select %p48, %s49, %s50
    %p54 = pneg %p48
    %p55 = scmp.eq.s32.totalorder %s13, 1
    %p56 = por %p54, %p55
    %p57 = scmp.ne.s32.totalorder %s49, %s52
    %p58 = scmp.eq.s32.totalorder %s13, 0
    %p59 = por %p57, %p58
    %p60 = scmp.ne.s32.totalorder %s49, %s52
    %p61 = scmp.eq.s32.totalorder %s18, 1
    %p62 = por %p60, %p61
    %p63 = scmp.ne.s32.totalorder %s52, %s53
    %p64 = scmp.eq.s32.totalorder %s18, 0
    %p65 = por %p63, %p64
    %p66 = scmp.ne.s32.totalorder %s52, %s53
    %p67 = scmp.eq.s32.totalorder %s19, 1
    %p68 = por %p66, %p67
    %p70 = scmp.ne.s32.totalorder %s53, %s69
    %p71 = scmp.eq.s32.totalorder %s19, 0
    %p72 = por %p70, %p71
    %s73 = ssub.s32 %s13, %s20
    %p74 = scmp.eq.s32.totalorder %s73, 0
    %s76 = sadd.s32 %s75, 1
    %s77 = scalar_select %p74, %s75, %s76
    %p80 = pneg %p74
    %p81 = scmp.eq.s32.totalorder %s13, 1
    %p82 = por %p80, %p81
    %p83 = scmp.ne.s32.totalorder %s75, %s78
    %p84 = scmp.eq.s32.totalorder %s13, 0
    %p85 = por %p83, %p84
    %p86 = scmp.ne.s32.totalorder %s75, %s78
    %p87 = scmp.eq.s32.totalorder %s18, 1
    %p88 = por %p86, %p87
    %p89 = scmp.ne.s32.totalorder %s78, %s79
    %p90 = scmp.eq.s32.totalorder %s18, 0
    %p91 = por %p89, %p90
    %p92 = scmp.ne.s32.totalorder %s78, %s79
    %p93 = scmp.eq.s32.totalorder %s19, 1
    %p94 = por %p92, %p93
    %p96 = scmp.ne.s32.totalorder %s79, %s95
    %p97 = scmp.eq.s32.totalorder %s19, 0
    %p98 = por %p96, %p97
    %s99 = ssub.s32 %s13, %s20
    %p100 = scmp.eq.s32.totalorder %s99, 0
    %s102 = sadd.s32 %s101, 1
    %s103 = scalar_select %p100, %s101, %s102
    %p106 = pneg %p100
    %p107 = scmp.eq.s32.totalorder %s13, 1
    %p108 = por %p106, %p107
    %p109 = scmp.ne.s32.totalorder %s101, %s104
    %p110 = scmp.eq.s32.totalorder %s13, 0
    %p111 = por %p109, %p110
    %p112 = scmp.ne.s32.totalorder %s101, %s104
    %p113 = scmp.eq.s32.totalorder %s18, 1
    %p114 = por %p112, %p113
    %p115 = scmp.ne.s32.totalorder %s104, %s105
    %p116 = scmp.eq.s32.totalorder %s18, 0
    %p117 = por %p115, %p116
    %p118 = scmp.ne.s32.totalorder %s104, %s105
    %p119 = scmp.eq.s32.totalorder %s19, 1
    %p120 = por %p118, %p119
    %p122 = scmp.ne.s32.totalorder %s105, %s121
    %p123 = scmp.eq.s32.totalorder %s19, 0
    %p124 = por %p122, %p123
    %s125 = ssub.s32 %s13, %s20
    %p126 = scmp.eq.s32.totalorder %s125, 0
    %s128 = sadd.s32 %s127, 1
    %s129 = scalar_select %p126, %s127, %s128
    %p132 = pneg %p126
    %p133 = scmp.eq.s32.totalorder %s13, 1
    %p134 = por %p132, %p133
    %p135 = scmp.ne.s32.totalorder %s127, %s130
    %p136 = scmp.eq.s32.totalorder %s13, 0
    %p137 = por %p135, %p136
    %p138 = scmp.ne.s32.totalorder %s127, %s130
    %p139 = scmp.eq.s32.totalorder %s18, 1
    %p140 = por %p138, %p139
    %p141 = scmp.ne.s32.totalorder %s130, %s131
    %p142 = scmp.eq.s32.totalorder %s18, 0
    %p143 = por %p141, %p142
    %p144 = scmp.ne.s32.totalorder %s130, %s131
    %p145 = scmp.eq.s32.totalorder %s19, 1
    %p146 = por %p144, %p145
    %p148 = scmp.ne.s32.totalorder %s131, %s147
    %p149 = scmp.eq.s32.totalorder %s19, 0
    %p150 = por %p148, %p149
    %s151 = ssub.s32 %s13, %s20
    %p152 = scmp.eq.s32.totalorder %s151, 0
    %s154 = sadd.s32 %s153, 1
    %s155 = scalar_select %p152, %s153, %s154
    %p158 = pneg %p152
    %p159 = scmp.eq.s32.totalorder %s13, 1
    %p160 = por %p158, %p159
    %p161 = scmp.ne.s32.totalorder %s153, %s156
    %p162 = scmp.eq.s32.totalorder %s13, 0
    %p163 = por %p161, %p162
    %p164 = scmp.ne.s32.totalorder %s153, %s156
    %p165 = scmp.eq.s32.totalorder %s18, 1
    %p166 = por %p164, %p165
    %p167 = scmp.ne.s32.totalorder %s156, %s157
    %p168 = scmp.eq.s32.totalorder %s18, 0
    %p169 = por %p167, %p168
    %p170 = scmp.ne.s32.totalorder %s156, %s157
    %p171 = scmp.eq.s32.totalorder %s19, 1
    %p172 = por %p170, %p171
    %p174 = scmp.ne.s32.totalorder %s157, %s173
    %p175 = scmp.eq.s32.totalorder %s19, 0
    %p176 = por %p174, %p175
    %s178 = sadd.s32 %s177, 1
    %p181 = scmp.eq.s32.totalorder %s13, 1
    %p182 = scmp.ne.s32.totalorder %s177, %s179
    %p183 = scmp.eq.s32.totalorder %s13, 0
    %p184 = por %p182, %p183
    %p185 = scmp.ne.s32.totalorder %s177, %s179
    %p186 = scmp.eq.s32.totalorder %s18, 1
    %p187 = por %p185, %p186
    %p188 = scmp.ne.s32.totalorder %s179, %s180
    %p189 = scmp.eq.s32.totalorder %s18, 0
    %p190 = por %p188, %p189
    %p191 = scmp.ne.s32.totalorder %s179, %s180
    %p192 = scmp.eq.s32.totalorder %s19, 1
    %p193 = por %p191, %p192
    %p195 = scmp.ne.s32.totalorder %s180, %s194
    %p196 = scmp.eq.s32.totalorder %s19, 0
    %p197 = por %p195, %p196
    %p198 = scmp.le.s32.totalorder 1, %s13
    %p199 = scmp.lt.s32.totalorder %s13, 3
    %p200 = pnand %p198, %p199
    %p201 = pneg %p200
    // Predicated region
    $region9: #{decoder_forward.3} parent=5 // pred_check
      _
    $region10: #{decoder_forward.3} parent=5 // pred_check_branch
      %203 = sbr.rel (%p200) target = $region12
    $region11: #{decoder_forward.3} parent=5 // pred_region
      %s204 = ssub.s32 %s13, 1
    $region12: #{decoder_forward.3} parent=5 // pred_fallthru
      _
    %p205 = scmp.lt.s32.totalorder %s13, 2
    // Predicated region
    $region13: #{decoder_forward.3} parent=5 // pred_check
      %p206 = pneg %p205
    $region14: #{decoder_forward.3} parent=5 // pred_check_branch
      %208 = sbr.rel (%p206) target = $region16
    $region15: #{decoder_forward.3} parent=5 // pred_region
      // Predicated region
      $region17: #{decoder_forward.3} parent=15 // pred_check
        %p209 = pneg %p33
      $region18: #{decoder_forward.3} parent=15 // pred_check_branch
        %211 = sbr.rel (%p209) target = $region20
      $region19: #{decoder_forward.3} parent=15 // pred_region
        %p212 = scmp.lt.s32.totalorder %s13, 1
        %s213 = scalar_select %p212, %s13, 1
        %s214 = smul.addr %s213, 144
        %s215 = smul.addr %s214, 8
        %s216 = scalar_lea.vmem %s1, %s215
      $region20: #{decoder_forward.3} parent=15 // pred_fallthru
        _
      // Predicated region
      $region21: #{decoder_forward.3} parent=15 // pred_check
        %p217 = pneg %p59
      $region22: #{decoder_forward.3} parent=15 // pred_check_branch
        %219 = sbr.rel (%p217) target = $region24
      $region23: #{decoder_forward.3} parent=15 // pred_region
        %p220 = scmp.lt.s32.totalorder %s13, 1
        %s221 = scalar_select %p220, %s13, 1
        %s222 = scalar_lea.vmem %s2, %s221
      $region24: #{decoder_forward.3} parent=15 // pred_fallthru
        _
      // Predicated region
      $region25: #{decoder_forward.3} parent=15 // pred_check
        %p223 = pneg %p85
      $region26: #{decoder_forward.3} parent=15 // pred_check_branch
        %225 = sbr.rel (%p223) target = $region28
      $region27: #{decoder_forward.3} parent=15 // pred_region
        %p226 = scmp.lt.s32.totalorder %s13, 1
        %s227 = scalar_select %p226, %s13, 1
        %s228 = scalar_lea.vmem %s3, %s227
      $region28: #{decoder_forward.3} parent=15 // pred_fallthru
        _
      // Predicated region
      $region29: #{decoder_forward.3} parent=15 // pred_check
        %p229 = pneg %p111
      $region30: #{decoder_forward.3} parent=15 // pred_check_branch
        %231 = sbr.rel (%p229) target = $region32
      $region31: #{decoder_forward.3} parent=15 // pred_region
        %p232 = scmp.lt.s32.totalorder %s13, 1
        %s233 = scalar_select %p232, %s13, 1
        %s234 = smul.addr %s233, 144
        %s235 = smul.addr %s234, 8
        %s236 = scalar_lea.vmem %s4, %s235
      $region32: #{decoder_forward.3} parent=15 // pred_fallthru
        _
      // Predicated region
      $region33: #{decoder_forward.3} parent=15 // pred_check
        %p237 = pneg %p137
      $region34: #{decoder_forward.3} parent=15 // pred_check_branch
        %239 = sbr.rel (%p237) target = $region36
      $region35: #{decoder_forward.3} parent=15 // pred_region
        %p240 = scmp.lt.s32.totalorder %s13, 1
        %s241 = scalar_select %p240, %s13, 1
        %s242 = scalar_lea.vmem %s5, %s241
      $region36: #{decoder_forward.3} parent=15 // pred_fallthru
        _
      // Predicated region
      $region37: #{decoder_forward.3} parent=15 // pred_check
        %p243 = pneg %p163
      $region38: #{decoder_forward.3} parent=15 // pred_check_branch
        %245 = sbr.rel (%p243) target = $region40
      $region39: #{decoder_forward.3} parent=15 // pred_region
        %p246 = scmp.lt.s32.totalorder %s13, 1
        %s247 = scalar_select %p246, %s13, 1
        %s248 = scalar_lea.vmem %s6, %s247
      $region40: #{decoder_forward.3} parent=15 // pred_fallthru
        _
    $region16: #{decoder_forward.3} parent=5 // pred_fallthru
      _
    %p249 = scmp.le.s32.totalorder 1, %s13
    %p250 = scmp.lt.s32.totalorder %s13, 3
    %p251 = pnand %p249, %p250
    %p252 = pneg %p251
    // Predicated region
    $region41: #{decoder_forward.3} parent=5 // pred_check
      _
    $region42: #{decoder_forward.3} parent=5 // pred_check_branch
      %254 = sbr.rel (%p251) target = $region44
    $region43: #{decoder_forward.3} parent=5 // pred_region
      %s255 = ssub.s32 %s13, 1
      %p256 = scmp.lt.s32.totalorder %s18, 1
      %s257 = scalar_select %p256, %s18, 1
      %s258 = smul.addr %s257, 144
      %s259 = smul.addr %s258, 8
      %s260 = scalar_lea.vmem %s1, %s259
      %p261 = pneg %p39
      %p262 = pneg %p36
      %p263 = scmp.lt.s32.totalorder %s18, 1
      %s264 = scalar_select %p263, %s18, 1
      %s265 = scalar_lea.vmem %s2, %s264
      %p266 = pneg %p65
      %p267 = pneg %p62
      %p268 = scmp.lt.s32.totalorder %s18, 1
      %s269 = scalar_select %p268, %s18, 1
      %s270 = scalar_lea.vmem %s3, %s269
      %p271 = pneg %p91
      %p272 = pneg %p88
      %p273 = scmp.lt.s32.totalorder %s18, 1
      %s274 = scalar_select %p273, %s18, 1
      %s275 = smul.addr %s274, 144
      %s276 = smul.addr %s275, 8
      %s277 = scalar_lea.vmem %s4, %s276
      %p278 = pneg %p117
      %p279 = pneg %p114
      %p280 = scmp.lt.s32.totalorder %s18, 1
      %s281 = scalar_select %p280, %s18, 1
      %s282 = scalar_lea.vmem %s5, %s281
      %p283 = pneg %p143
      %p284 = pneg %p140
      %p285 = scmp.lt.s32.totalorder %s18, 1
      %s286 = scalar_select %p285, %s18, 1
      %s287 = scalar_lea.vmem %s6, %s286
      %p288 = pneg %p169
      %p289 = pneg %p166
      %p290 = pneg %p190
      %p291 = pneg %p187
      %p292 = scmp.lt.s32.totalorder %s18, 1
      %s293 = scalar_select %p292, %s18, 1
      %s294 = smul.addr %s293, 144
      %s295 = smul.addr %s294, 8
      %s296 = scalar_lea.vmem %s1, %s295
      %p297 = scmp.lt.s32.totalorder %s18, 1
      %s298 = scalar_select %p297, %s18, 1
      %s299 = scalar_lea.vmem %s2, %s298
      %p300 = scmp.lt.s32.totalorder %s18, 1
      %s301 = scalar_select %p300, %s18, 1
      %s302 = scalar_lea.vmem %s3, %s301
      %p303 = scmp.lt.s32.totalorder %s18, 1
      %s304 = scalar_select %p303, %s18, 1
      %s305 = smul.addr %s304, 144
      %s306 = smul.addr %s305, 8
      %s307 = scalar_lea.vmem %s4, %s306
      %p308 = scmp.lt.s32.totalorder %s18, 1
      %s309 = scalar_select %p308, %s18, 1
      %s310 = scalar_lea.vmem %s5, %s309
      %p311 = scmp.lt.s32.totalorder %s18, 1
      %s312 = scalar_select %p311, %s18, 1
      %s313 = scalar_lea.vmem %s6, %s312
      %p314 = scmp.eq.s32.totalorder %s18, 0
      // Predicated region
      $region45: #{decoder_forward.3} parent=43 // pred_check
        %p315 = pneg %p314
      $region46: #{decoder_forward.3} parent=43 // pred_check_branch
        %317 = sbr.rel (%p315) target = $region48
      $region47: #{decoder_forward.3} parent=43 // pred_region
        %318 = vst [vmem:[#allocation2] sm:$0xff] 0.0
        %319 = vst [vmem:[#allocation2 + $0x8] sm:$0xff] 0.0
        %320 = vst [vmem:[#allocation2 + $0x10] sm:$0xff] 0.0
        %321 = vst [vmem:[#allocation2 + $0x18] sm:$0xff] 0.0
        %322 = vst [vmem:[#allocation2 + $0x20] sm:$0xff] 0.0
        %323 = vst [vmem:[#allocation2 + $0x28] sm:$0xff] 0.0
        %324 = vst [vmem:[#allocation2 + $0x30] sm:$0xff] 0.0
        %325 = vst [vmem:[#allocation2 + $0x38] sm:$0xff] 0.0
        %326 = vst [vmem:[#allocation2 + $0x40] sm:$0xff] 0.0
        %327 = vst [vmem:[#allocation2 + $0x48] sm:$0xff] 0.0
        %328 = vst [vmem:[#allocation2 + $0x50] sm:$0xff] 0.0
        %329 = vst [vmem:[#allocation2 + $0x58] sm:$0xff] 0.0
        $region49: #{decoder_forward.3} parent=47
          #allocation3 [shape = 's32[1]{0}', space=sflag, size = 0x4, scoped, tag = 'scoped memory for decoder_forward.3']
          %p331 = scmp.lt.u32.totalorder 32, 8
          %p332 = pneg %p331
          // Predicated region
          $region50: #{decoder_forward.3} parent=49 // pred_check
            _
          $region51: #{decoder_forward.3} parent=49 // pred_check_branch
            %334 = sbr.rel (%p331) target = $region53
          $region52: #{decoder_forward.3} parent=49 // pred_region
            %s349 = sand.u32 32, 7
            %p350 = scmp.eq.s32.totalorder %s349, 0
            // Predicated region
            $region65: #{decoder_forward.3} parent=52 // pred_check
              %p351 = pneg %p350
            $region66: #{decoder_forward.3} parent=52 // pred_check_branch
              %353 = sbr.rel (%p351) target = $region68
            $region67: #{decoder_forward.3} parent=52 // pred_region
              loop: start=0, step=1, limit=1
              $region69: #{decoder_forward.3} parent=67 // loop_pre_header
                _
              $region70: #{decoder_forward.3} parent=67 // loop_header
                %s355 = sphi 0, %s359
                %p356 = scmp.ge.s32.totalorder %s355, 1
                %s360 = sphi %s0, %s0
                %s361 = sphi %s7, %s7
              $region71: #{decoder_forward.3} parent=67 // loop_header_branch
                %358 = sbr.rel (%p356) target = $region75
              $region72: #{decoder_forward.3} parent=67 // loop_body
                %v362 = vld [vmem:[%s360] sm:$0xff]
                %363 = vst [vmem:[%s361] sm:$0xff] %v362
                %v364 = vld [vmem:[%s360 + $0x8] sm:$0xff]
                %365 = vst [vmem:[%s361 + $0x8] sm:$0xff] %v364
                %v366 = vld [vmem:[%s360 + $0x10] sm:$0xff]
                %367 = vst [vmem:[%s361 + $0x10] sm:$0xff] %v366
                %v368 = vld [vmem:[%s360 + $0x18] sm:$0xff]
                %369 = vst [vmem:[%s361 + $0x18] sm:$0xff] %v368
              $region73: #{decoder_forward.3} parent=67 // loop_footer
                %s359 = sadd.s32 1, %s355
              $region74: #{decoder_forward.3} parent=67 // loop_footer_branch
                %354 = sbr.rel target = $region70
              $region75: #{decoder_forward.3} parent=67 // loop_exit
                _
            $region68: #{decoder_forward.3} parent=52 // pred_fallthru
              _
            %p370 = pneg %p350
            // Predicated region
            $region76: #{decoder_forward.3} parent=52 // pred_check
              _
            $region77: #{decoder_forward.3} parent=52 // pred_check_branch
              %372 = sbr.rel (%p350) target = $region79
            $region78: #{decoder_forward.3} parent=52 // pred_region
              %s373 = sand.u32 32, 7
            $region79: #{decoder_forward.3} parent=52 // pred_fallthru
              _
          $region53: #{decoder_forward.3} parent=49 // pred_fallthru
            _
          // Predicated region
          $region54: #{decoder_forward.3} parent=49 // pred_check
            %p335 = pneg %p331
          $region55: #{decoder_forward.3} parent=49 // pred_check_branch
            %337 = sbr.rel (%p335) target = $region57
          $region56: #{decoder_forward.3} parent=49 // pred_region
            %s338 = sshllo.u32 0, 32
            loop: start=0, step=1, limit=1
            $region58: #{decoder_forward.3} parent=56 // loop_pre_header
              _
            $region59: #{decoder_forward.3} parent=56 // loop_header
              %s340 = sphi 0, %s344
              %p341 = scmp.ge.s32.totalorder %s340, 1
              %s345 = sphi %s0, %s0
              %s346 = sphi %s7, %s7
            $region60: #{decoder_forward.3} parent=56 // loop_header_branch
              %343 = sbr.rel (%p341) target = $region64
            $region61: #{decoder_forward.3} parent=56 // loop_body
              %v347 = vld [vmem:[%s345] sm:%s338]
              %348 = vst [vmem:[%s346] sm:%s338] %v347
            $region62: #{decoder_forward.3} parent=56 // loop_footer
              %s344 = sadd.s32 1, %s340
            $region63: #{decoder_forward.3} parent=56 // loop_footer_branch
              %339 = sbr.rel target = $region59
            $region64: #{decoder_forward.3} parent=56 // loop_exit
              _
          $region57: #{decoder_forward.3} parent=49 // pred_fallthru
            _
          // Predicated region
          $region80: #{decoder_forward.3} parent=49 // pred_check
            _
          $region81: #{decoder_forward.3} parent=49 // pred_check_branch
            %376 = sbr.rel (0) target = $region83
          $region82: #{decoder_forward.3} parent=49 // pred_region
            %377 = vsyncadd [#allocation3], 512
          $region83: #{decoder_forward.3} parent=49 // pred_fallthru
            _
          %s378 = smul.u32 2, 4
          %s379 = smul.u32 %s378, 4
          %s380 = smul.u32 %s379, 1
          %s381 = sshll.u32 %s380, 4
          %382 = dma.done [#allocation3], %s381
      $region48: #{decoder_forward.3} parent=43 // pred_fallthru
        _
      %v383 = vld [vmem:[%s7] sm:$0xf]
      %v384 = vld [vmem:[%s7 + $0x4] sm:$0xf]
      %v385 = vld [vmem:[%s7 + $0x8] sm:$0xf]
      %v386 = vld [vmem:[%s7 + $0xc] sm:$0xf]
      %v387 = vld [vmem:[%s7 + $0x10] sm:$0xf]
      %v388 = vld [vmem:[%s7 + $0x14] sm:$0xf]
      %v389 = vld [vmem:[%s7 + $0x18] sm:$0xf]
      %v390 = vld [vmem:[%s7 + $0x1c] sm:$0xf]
      %s391 = scalar_lea.vmem [#allocation2], 8
      %392 = vst [vmem:[%s391 + $0x1] sm:$0xf] %v383
      %393 = vst [vmem:[%s391 + $0x9] sm:$0xf] %v384
      %394 = vst [vmem:[%s391 + $0x11] sm:$0xf] %v385
      %395 = vst [vmem:[%s391 + $0x19] sm:$0xf] %v386
      %396 = vst [vmem:[%s391 + $0x31] sm:$0xf] %v387
      %397 = vst [vmem:[%s391 + $0x39] sm:$0xf] %v388
      %398 = vst [vmem:[%s391 + $0x41] sm:$0xf] %v389
      %399 = vst [vmem:[%s391 + $0x49] sm:$0xf] %v390
      %v400 = vld [vmem:[#allocation2] sm:$0xf]
      %v401 = vld [vmem:[#allocation2 + $0x8] sm:$0xf]
      %v402 = vld [vmem:[#allocation2 + $0x10] sm:$0xf]
      %v403 = vld [vmem:[#allocation2 + $0x18] sm:$0xf]
      %v404 = vld [vmem:[#allocation2 + $0x30] sm:$0xf]
      %v405 = vld [vmem:[#allocation2 + $0x38] sm:$0xf]
      %v406 = vld [vmem:[#allocation2 + $0x40] sm:$0xf]
      %v407 = vld [vmem:[#allocation2 + $0x48] sm:$0xf]
      %v408 = vld [vmem:[%s296] sm:$0xff]
      %v409 = vld [vmem:[%s296 + $0x8] sm:$0xff]
      %v410 = vld [vmem:[%s296 + $0x10] sm:$0xff]
      %v411 = vld [vmem:[%s296 + $0x18] sm:$0xff]
      %v412 = vld [vmem:[%s296 + $0x20] sm:$0xff]
      %v413 = vld [vmem:[%s296 + $0x28] sm:$0xff]
      %v414 = vld [vmem:[%s296 + $0x30] sm:$0xff]
      %v415 = vld [vmem:[%s296 + $0x38] sm:$0xff]
      %v416 = vld [vmem:[%s296 + $0x40] sm:$0xff]
      %v417 = vld [vmem:[%s296 + $0x48] sm:$0xff]
      %v418 = vld [vmem:[%s296 + $0x50] sm:$0xff]
      %v419 = vld [vmem:[%s296 + $0x58] sm:$0xff]
      %v420 = vld [vmem:[%s296 + $0x60] sm:$0xff]
      %v421 = vld [vmem:[%s296 + $0x68] sm:$0xff]
      %v422 = vld [vmem:[%s296 + $0x70] sm:$0xff]
      %v423 = vld [vmem:[%s296 + $0x78] sm:$0xff]
      %v424 = vld [vmem:[#allocation2 + $0x1] sm:$0xf]
      %v425 = vld [vmem:[#allocation2 + $0x9] sm:$0xf]
      %v426 = vld [vmem:[#allocation2 + $0x11] sm:$0xf]
      %v427 = vld [vmem:[#allocation2 + $0x19] sm:$0xf]
      %v428 = vld [vmem:[#allocation2 + $0x31] sm:$0xf]
      %v429 = vld [vmem:[#allocation2 + $0x39] sm:$0xf]
      %v430 = vld [vmem:[#allocation2 + $0x41] sm:$0xf]
      %v431 = vld [vmem:[#allocation2 + $0x49] sm:$0xf]
      %v432 = vld [vmem:[%s296 + $0x80] sm:$0xff]
      %v433 = vld [vmem:[%s296 + $0x88] sm:$0xff]
      %v434 = vld [vmem:[%s296 + $0x90] sm:$0xff]
      %v435 = vld [vmem:[%s296 + $0x98] sm:$0xff]
      %v436 = vld [vmem:[%s296 + $0xa0] sm:$0xff]
      %v437 = vld [vmem:[%s296 + $0xa8] sm:$0xff]
      %v438 = vld [vmem:[%s296 + $0xb0] sm:$0xff]
      %v439 = vld [vmem:[%s296 + $0xb8] sm:$0xff]
      %v440 = vld [vmem:[%s296 + $0xc0] sm:$0xff]
      %v441 = vld [vmem:[%s296 + $0xc8] sm:$0xff]
      %v442 = vld [vmem:[%s296 + $0xd0] sm:$0xff]
      %v443 = vld [vmem:[%s296 + $0xd8] sm:$0xff]
      %v444 = vld [vmem:[%s296 + $0xe0] sm:$0xff]
      %v445 = vld [vmem:[%s296 + $0xe8] sm:$0xff]
      %v446 = vld [vmem:[%s296 + $0xf0] sm:$0xff]
      %v447 = vld [vmem:[%s296 + $0xf8] sm:$0xff]
      %v456 = vcombine.low %v424, %v425
      %v457 = vcombine.low %v426, %v427
      %v458 = vcombine.low %v428, %v429
      %v459 = vcombine.low %v430, %v431
      %464 = vmatprep.subr.mxu0 0.0
      %465 = vmatpush1.msra.mxu0 %v432
      %466 = vmatprep.subr.mxu0 0.0
      %467 = vmatpush1.msra.mxu0 %v433
      %468 = vmatprep.subr.mxu0 0.0
      %469 = vmatpush1.msra.mxu0 %v434
      %470 = vmatprep.subr.mxu0 0.0
      %471 = vmatpush1.msra.mxu0 %v435
      %472 = vmatprep.subr.mxu0 0.0
      %473 = vmatpush1.msra.mxu0 %v436
      %474 = vmatprep.subr.mxu0 0.0
      %475 = vmatpush1.msra.mxu0 %v437
      %476 = vmatprep.subr.mxu0 0.0
      %477 = vmatpush1.msra.mxu0 %v438
      %478 = vmatprep.subr.mxu0 0.0
      %479 = vmatpush1.msra.mxu0 %v439
      %480 = vmatprep.subr.mxu0 0.0
      %481 = vmatpush1.msra.mxu0 %v440
      %482 = vmatprep.subr.mxu0 0.0
      %483 = vmatpush1.msra.mxu0 %v441
      %484 = vmatprep.subr.mxu0 0.0
      %485 = vmatpush1.msra.mxu0 %v442
      %486 = vmatprep.subr.mxu0 0.0
      %487 = vmatpush1.msra.mxu0 %v443
      %488 = vmatprep.subr.mxu0 0.0
      %489 = vmatpush1.msra.mxu0 %v444
      %490 = vmatprep.subr.mxu0 0.0
      %491 = vmatpush1.msra.mxu0 %v445
      %492 = vmatprep.subr.mxu0 0.0
      %493 = vmatpush1.msra.mxu0 %v446
      %494 = vmatprep.subr.mxu0 0.0
      %495 = vmatpush1.msra.mxu0 %v447
      %496 = vmatprep.subr.mxu0 0.0
      %497 = vmatpush1.msra.mxu0 0.0
      %498 = vmatprep.subr.mxu0 0.0
      %499 = vmatpush1.msra.mxu0 0.0
      %500 = vmatprep.subr.mxu0 0.0
      %501 = vmatpush1.msra.mxu0 0.0
      %502 = vmatprep.subr.mxu0 0.0
      %503 = vmatpush1.msra.mxu0 0.0
      %504 = vmatprep.subr.mxu0 0.0
      %505 = vmatpush1.msra.mxu0 0.0
      %506 = vmatprep.subr.mxu0 0.0
      %507 = vmatpush1.msra.mxu0 0.0
      %508 = vmatprep.subr.mxu0 0.0
      %509 = vmatpush1.msra.mxu0 0.0
      %510 = vmatprep.subr.mxu0 0.0
      %511 = vmatpush1.msra.mxu0 0.0
      %512 = vmatprep.subr.mxu0 0.0
      %513 = vmatpush1.msra.mxu0 0.0
      %514 = vmatprep.subr.mxu0 0.0
      %515 = vmatpush1.msra.mxu0 0.0
      %516 = vmatprep.subr.mxu0 0.0
      %517 = vmatpush1.msra.mxu0 0.0
      %518 = vmatprep.subr.mxu0 0.0
      %519 = vmatpush1.msra.mxu0 0.0
      %520 = vmatprep.subr.mxu0 0.0
      %521 = vmatpush1.msra.mxu0 0.0
      %522 = vmatprep.subr.mxu0 0.0
      %523 = vmatpush1.msra.mxu0 0.0
      %524 = vmatprep.subr.mxu0 0.0
      %525 = vmatpush1.msra.mxu0 0.0
      %526 = vmatprep.subr.mxu0 0.0
      %527 = vmatpush1.msra.mxu0 0.0
      %528 = vmatprep.mubr.f32.mxu0 0.0
      %529 = vmatmul.mubr.f32.gmra.mrb[0].mxu0 %v456
      %v530 = vpop.f32.mrb[0].mxu0
      %v531 = vadd.f32 0.0, %v530
      %v532 = vpop.f32.mrb[0].mxu0
      %533 = vmatprep.mubr.f32.mxu0 0.0
      %534 = vmatmul.mubr.f32.gmra.mrb[0].mxu0 %v457
      %v535 = vpop.f32.mrb[0].mxu0
      %v536 = vadd.f32 0.0, %v535
      %v537 = vpop.f32.mrb[0].mxu0
      %538 = vmatprep.mubr.f32.mxu0 0.0
      %539 = vmatmul.mubr.f32.gmra.mrb[0].mxu0 %v458
      %v540 = vpop.f32.mrb[0].mxu0
      %v541 = vadd.f32 0.0, %v540
      %v542 = vpop.f32.mrb[0].mxu0
      %543 = vmatprep.mubr.f32.mxu0 0.0
      %544 = vmatmul.mubr.f32.gmra.mrb[0].mxu0 %v459
      %v545 = vpop.f32.mrb[0].mxu0
      %v546 = vadd.f32 0.0, %v545
      %v547 = vpop.f32.mrb[0].mxu0
      %548 = vdwg.mxu0
      %v557 = vcombine.low %v400, %v401
      %v558 = vcombine.low %v402, %v403
      %v559 = vcombine.low %v404, %v405
      %v560 = vcombine.low %v406, %v407
      %565 = vmatprep.subr.mxu0 0.0
      %566 = vmatpush1.msra.mxu0 %v408
      %567 = vmatprep.subr.mxu0 0.0
      %568 = vmatpush1.msra.mxu0 %v409
      %569 = vmatprep.subr.mxu0 0.0
      %570 = vmatpush1.msra.mxu0 %v410
      %571 = vmatprep.subr.mxu0 0.0
      %572 = vmatpush1.msra.mxu0 %v411
      %573 = vmatprep.subr.mxu0 0.0
      %574 = vmatpush1.msra.mxu0 %v412
      %575 = vmatprep.subr.mxu0 0.0
      %576 = vmatpush1.msra.mxu0 %v413
      %577 = vmatprep.subr.mxu0 0.0
      %578 = vmatpush1.msra.mxu0 %v414
      %579 = vmatprep.subr.mxu0 0.0
      %580 = vmatpush1.msra.mxu0 %v415
      %581 = vmatprep.subr.mxu0 0.0
      %582 = vmatpush1.msra.mxu0 %v416
      %583 = vmatprep.subr.mxu0 0.0
      %584 = vmatpush1.msra.mxu0 %v417
      %585 = vmatprep.subr.mxu0 0.0
      %586 = vmatpush1.msra.mxu0 %v418
      %587 = vmatprep.subr.mxu0 0.0
      %588 = vmatpush1.msra.mxu0 %v419
      %589 = vmatprep.subr.mxu0 0.0
      %590 = vmatpush1.msra.mxu0 %v420
      %591 = vmatprep.subr.mxu0 0.0
      %592 = vmatpush1.msra.mxu0 %v421
      %593 = vmatprep.subr.mxu0 0.0
      %594 = vmatpush1.msra.mxu0 %v422
      %595 = vmatprep.subr.mxu0 0.0
      %596 = vmatpush1.msra.mxu0 %v423
      %597 = vmatprep.subr.mxu0 0.0
      %598 = vmatpush1.msra.mxu0 0.0
      %599 = vmatprep.subr.mxu0 0.0
      %600 = vmatpush1.msra.mxu0 0.0
      %601 = vmatprep.subr.mxu0 0.0
      %602 = vmatpush1.msra.mxu0 0.0
      %603 = vmatprep.subr.mxu0 0.0
      %604 = vmatpush1.msra.mxu0 0.0
      %605 = vmatprep.subr.mxu0 0.0
      %606 = vmatpush1.msra.mxu0 0.0
      %607 = vmatprep.subr.mxu0 0.0
      %608 = vmatpush1.msra.mxu0 0.0
      %609 = vmatprep.subr.mxu0 0.0
      %610 = vmatpush1.msra.mxu0 0.0
      %611 = vmatprep.subr.mxu0 0.0
      %612 = vmatpush1.msra.mxu0 0.0
      %613 = vmatprep.subr.mxu0 0.0
      %614 = vmatpush1.msra.mxu0 0.0
      %615 = vmatprep.subr.mxu0 0.0
      %616 = vmatpush1.msra.mxu0 0.0
      %617 = vmatprep.subr.mxu0 0.0
      %618 = vmatpush1.msra.mxu0 0.0
      %619 = vmatprep.subr.mxu0 0.0
      %620 = vmatpush1.msra.mxu0 0.0
      %621 = vmatprep.subr.mxu0 0.0
      %622 = vmatpush1.msra.mxu0 0.0
      %623 = vmatprep.subr.mxu0 0.0
      %624 = vmatpush1.msra.mxu0 0.0
      %625 = vmatprep.subr.mxu0 0.0
      %626 = vmatpush1.msra.mxu0 0.0
      %627 = vmatprep.subr.mxu0 0.0
      %628 = vmatpush1.msra.mxu0 0.0
      %629 = vmatprep.mubr.f32.mxu0 0.0
      %630 = vmatmul.mubr.f32.gmra.mrb[0].mxu0 %v557
      %v631 = vpop.f32.mrb[0].mxu0
      %v632 = vadd.f32 %v531, %v631
      %v633 = vpop.f32.mrb[0].mxu0
      %634 = vmatprep.mubr.f32.mxu0 0.0
      %635 = vmatmul.mubr.f32.gmra.mrb[0].mxu0 %v558
      %v636 = vpop.f32.mrb[0].mxu0
      %v637 = vadd.f32 %v536, %v636
      %v638 = vpop.f32.mrb[0].mxu0
      %639 = vmatprep.mubr.f32.mxu0 0.0
      %640 = vmatmul.mubr.f32.gmra.mrb[0].mxu0 %v559
      %v641 = vpop.f32.mrb[0].mxu0
      %v642 = vadd.f32 %v541, %v641
      %v643 = vpop.f32.mrb[0].mxu0
      %644 = vmatprep.mubr.f32.mxu0 0.0
      %645 = vmatmul.mubr.f32.gmra.mrb[0].mxu0 %v560
      %v646 = vpop.f32.mrb[0].mxu0
      %v647 = vadd.f32 %v546, %v646
      %v648 = vpop.f32.mrb[0].mxu0
      %649 = vdwg.mxu0
      %v650 = vld [vmem:[#allocation2 + $0x2] sm:$0xf]
      %v651 = vld [vmem:[#allocation2 + $0xa] sm:$0xf]
      %v652 = vld [vmem:[#allocation2 + $0x12] sm:$0xf]
      %v653 = vld [vmem:[#allocation2 + $0x1a] sm:$0xf]
      %v654 = vld [vmem:[#allocation2 + $0x32] sm:$0xf]
      %v655 = vld [vmem:[#allocation2 + $0x3a] sm:$0xf]
      %v656 = vld [vmem:[#allocation2 + $0x42] sm:$0xf]
      %v657 = vld [vmem:[#allocation2 + $0x4a] sm:$0xf]
      %v658 = vld [vmem:[%s296 + $0x100] sm:$0xff]
      %v659 = vld [vmem:[%s296 + $0x108] sm:$0xff]
      %v660 = vld [vmem:[%s296 + $0x110] sm:$0xff]
      %v661 = vld [vmem:[%s296 + $0x118] sm:$0xff]
      %v662 = vld [vmem:[%s296 + $0x120] sm:$0xff]
      %v663 = vld [vmem:[%s296 + $0x128] sm:$0xff]
      %v664 = vld [vmem:[%s296 + $0x130] sm:$0xff]
      %v665 = vld [vmem:[%s296 + $0x138] sm:$0xff]
      %v666 = vld [vmem:[%s296 + $0x140] sm:$0xff]
      %v667 = vld [vmem:[%s296 + $0x148] sm:$0xff]
      %v668 = vld [vmem:[%s296 + $0x150] sm:$0xff]
      %v669 = vld [vmem:[%s296 + $0x158] sm:$0xff]
      %v670 = vld [vmem:[%s296 + $0x160] sm:$0xff]
      %v671 = vld [vmem:[%s296 + $0x168] sm:$0xff]
      %v672 = vld [vmem:[%s296 + $0x170] sm:$0xff]
      %v673 = vld [vmem:[%s296 + $0x178] sm:$0xff]
      %v682 = vcombine.low %v650, %v651
      %v683 = vcombine.low %v652, %v653
      %v684 = vcombine.low %v654, %v655
      %v685 = vcombine.low %v656, %v657
      %690 = vmatprep.subr.mxu0 0.0
      %691 = vmatpush1.msra.mxu0 %v658
      %692 = vmatprep.subr.mxu0 0.0
      %693 = vmatpush1.msra.mxu0 %v659
      %694 = vmatprep.subr.mxu0 0.0
      %695 = vmatpush1.msra.mxu0 %v660
      %696 = vmatprep.subr.mxu0 0.0
      %697 = vmatpush1.msra.mxu0 %v661
      %698 = vmatprep.subr.mxu0 0.0
      %699 = vmatpush1.msra.mxu0 %v662
      %700 = vmatprep.subr.mxu0 0.0
      %701 = vmatpush1.msra.mxu0 %v663
      %702 = vmatprep.subr.mxu0 0.0
      %703 = vmatpush1.msra.mxu0 %v664
      %704 = vmatprep.subr.mxu0 0.0
      %705 = vmatpush1.msra.mxu0 %v665
      %706 = vmatprep.subr.mxu0 0.0
      %707 = vmatpush1.msra.mxu0 %v666
      %708 = vmatprep.subr.mxu0 0.0
      %709 = vmatpush1.msra.mxu0 %v667
      %710 = vmatprep.subr.mxu0 0.0
      %711 = vmatpush1.msra.mxu0 %v668
      %712 = vmatprep.subr.mxu0 0.0
      %713 = vmatpush1.msra.mxu0 %v669
      %714 = vmatprep.subr.mxu0 0.0
      %715 = vmatpush1.msra.mxu0 %v670
      %716 = vmatprep.subr.mxu0 0.0
      %717 = vmatpush1.msra.mxu0 %v671
      %718 = vmatprep.subr.mxu0 0.0
      %719 = vmatpush1.msra.mxu0 %v672
      %720 = vmatprep.subr.mxu0 0.0
      %721 = vmatpush1.msra.mxu0 %v673
      %722 = vmatprep.subr.mxu0 0.0
      %723 = vmatpush1.msra.mxu0 0.0
      %724 = vmatprep.subr.mxu0 0.0
      %725 = vmatpush1.msra.mxu0 0.0
      %726 = vmatprep.subr.mxu0 0.0
      %727 = vmatpush1.msra.mxu0 0.0
      %728 = vmatprep.subr.mxu0 0.0
      %729 = vmatpush1.msra.mxu0 0.0
      %730 = vmatprep.subr.mxu0 0.0
      %731 = vmatpush1.msra.mxu0 0.0
      %732 = vmatprep.subr.mxu0 0.0
      %733 = vmatpush1.msra.mxu0 0.0
      %734 = vmatprep.subr.mxu0 0.0
      %735 = vmatpush1.msra.mxu0 0.0
      %736 = vmatprep.subr.mxu0 0.0
      %737 = vmatpush1.msra.mxu0 0.0
      %738 = vmatprep.subr.mxu0 0.0
      %739 = vmatpush1.msra.mxu0 0.0
      %740 = vmatprep.subr.mxu0 0.0
      %741 = vmatpush1.msra.mxu0 0.0
      %742 = vmatprep.subr.mxu0 0.0
      %743 = vmatpush1.msra.mxu0 0.0
      %744 = vmatprep.subr.mxu0 0.0
      %745 = vmatpush1.msra.mxu0 0.0
      %746 = vmatprep.subr.mxu0 0.0
      %747 = vmatpush1.msra.mxu0 0.0
      %748 = vmatprep.subr.mxu0 0.0
      %749 = vmatpush1.msra.mxu0 0.0
      %750 = vmatprep.subr.mxu0 0.0
      %751 = vmatpush1.msra.mxu0 0.0
      %752 = vmatprep.subr.mxu0 0.0
      %753 = vmatpush1.msra.mxu0 0.0
      %754 = vmatprep.mubr.f32.mxu0 0.0
      %755 = vmatmul.mubr.f32.gmra.mrb[0].mxu0 %v682
      %v756 = vpop.f32.mrb[0].mxu0
      %v757 = vadd.f32 0.0, %v756
      %v758 = vpop.f32.mrb[0].mxu0
      %759 = vmatprep.mubr.f32.mxu0 0.0
      %760 = vmatmul.mubr.f32.gmra.mrb[0].mxu0 %v683
      %v761 = vpop.f32.mrb[0].mxu0
      %v762 = vadd.f32 0.0, %v761
      %v763 = vpop.f32.mrb[0].mxu0
      %764 = vmatprep.mubr.f32.mxu0 0.0
      %765 = vmatmul.mubr.f32.gmra.mrb[0].mxu0 %v684
      %v766 = vpop.f32.mrb[0].mxu0
      %v767 = vadd.f32 0.0, %v766
      %v768 = vpop.f32.mrb[0].mxu0
      %769 = vmatprep.mubr.f32.mxu0 0.0
      %770 = vmatmul.mubr.f32.gmra.mrb[0].mxu0 %v685
      %v771 = vpop.f32.mrb[0].mxu0
      %v772 = vadd.f32 0.0, %v771
      %v773 = vpop.f32.mrb[0].mxu0
      %774 = vdwg.mxu0
      %v775 = vadd.f32 %v632, %v757
      %v776 = vadd.f32 %v637, %v762
      %v777 = vadd.f32 %v642, %v767
      %v778 = vadd.f32 %v647, %v772
      %v779 = vld [vmem:[%s391] sm:$0xf]
      %v780 = vld [vmem:[%s391 + $0x8] sm:$0xf]
      %v781 = vld [vmem:[%s391 + $0x10] sm:$0xf]
      %v782 = vld [vmem:[%s391 + $0x18] sm:$0xf]
      %v783 = vld [vmem:[%s391 + $0x30] sm:$0xf]
      %v784 = vld [vmem:[%s391 + $0x38] sm:$0xf]
      %v785 = vld [vmem:[%s391 + $0x40] sm:$0xf]
      %v786 = vld [vmem:[%s391 + $0x48] sm:$0xf]
      %v787 = vld [vmem:[%s296 + $0x180] sm:$0xff]
      %v788 = vld [vmem:[%s296 + $0x188] sm:$0xff]
      %v789 = vld [vmem:[%s296 + $0x190] sm:$0xff]
      %v790 = vld [vmem:[%s296 + $0x198] sm:$0xff]
      %v791 = vld [vmem:[%s296 + $0x1a0] sm:$0xff]
      %v792 = vld [vmem:[%s296 + $0x1a8] sm:$0xff]
      %v793 = vld [vmem:[%s296 + $0x1b0] sm:$0xff]
      %v794 = vld [vmem:[%s296 + $0x1b8] sm:$0xff]
      %v795 = vld [vmem:[%s296 + $0x1c0] sm:$0xff]
      %v796 = vld [vmem:[%s296 + $0x1c8] sm:$0xff]
      %v797 = vld [vmem:[%s296 + $0x1d0] sm:$0xff]
      %v798 = vld [vmem:[%s296 + $0x1d8] sm:$0xff]
      %v799 = vld [vmem:[%s296 + $0x1e0] sm:$0xff]
      %v800 = vld [vmem:[%s296 + $0x1e8] sm:$0xff]
      %v801 = vld [vmem:[%s296 + $0x1f0] sm:$0xff]
      %v802 = vld [vmem:[%s296 + $0x1f8] sm:$0xff]
      %v811 = vcombine.low %v779, %v780
      %v812 = vcombine.low %v781, %v782
      %v813 = vcombine.low %v783, %v784
      %v814 = vcombine.low %v785, %v786
      %819 = vmatprep.subr.mxu0 0.0
      %820 = vmatpush1.msra.mxu0 %v787
      %821 = vmatprep.subr.mxu0 0.0
      %822 = vmatpush1.msra.mxu0 %v788
      %823 = vmatprep.subr.mxu0 0.0
      %824 = vmatpush1.msra.mxu0 %v789
      %825 = vmatprep.subr.mxu0 0.0
      %826 = vmatpush1.msra.mxu0 %v790
      %827 = vmatprep.subr.mxu0 0.0
      %828 = vmatpush1.msra.mxu0 %v791
      %829 = vmatprep.subr.mxu0 0.0
      %830 = vmatpush1.msra.mxu0 %v792
      %831 = vmatprep.subr.mxu0 0.0
      %832 = vmatpush1.msra.mxu0 %v793
      %833 = vmatprep.subr.mxu0 0.0
      %834 = vmatpush1.msra.mxu0 %v794
      %835 = vmatprep.subr.mxu0 0.0
      %836 = vmatpush1.msra.mxu0 %v795
      %837 = vmatprep.subr.mxu0 0.0
      %838 = vmatpush1.msra.mxu0 %v796
      %839 = vmatprep.subr.mxu0 0.0
      %840 = vmatpush1.msra.mxu0 %v797
      %841 = vmatprep.subr.mxu0 0.0
      %842 = vmatpush1.msra.mxu0 %v798
      %843 = vmatprep.subr.mxu0 0.0
      %844 = vmatpush1.msra.mxu0 %v799
      %845 = vmatprep.subr.mxu0 0.0
      %846 = vmatpush1.msra.mxu0 %v800
      %847 = vmatprep.subr.mxu0 0.0
      %848 = vmatpush1.msra.mxu0 %v801
      %849 = vmatprep.subr.mxu0 0.0
      %850 = vmatpush1.msra.mxu0 %v802
      %851 = vmatprep.subr.mxu0 0.0
      %852 = vmatpush1.msra.mxu0 0.0
      %853 = vmatprep.subr.mxu0 0.0
      %854 = vmatpush1.msra.mxu0 0.0
      %855 = vmatprep.subr.mxu0 0.0
      %856 = vmatpush1.msra.mxu0 0.0
      %857 = vmatprep.subr.mxu0 0.0
      %858 = vmatpush1.msra.mxu0 0.0
      %859 = vmatprep.subr.mxu0 0.0
      %860 = vmatpush1.msra.mxu0 0.0
      %861 = vmatprep.subr.mxu0 0.0
      %862 = vmatpush1.msra.mxu0 0.0
      %863 = vmatprep.subr.mxu0 0.0
      %864 = vmatpush1.msra.mxu0 0.0
      %865 = vmatprep.subr.mxu0 0.0
      %866 = vmatpush1.msra.mxu0 0.0
      %867 = vmatprep.subr.mxu0 0.0
      %868 = vmatpush1.msra.mxu0 0.0
      %869 = vmatprep.subr.mxu0 0.0
      %870 = vmatpush1.msra.mxu0 0.0
      %871 = vmatprep.subr.mxu0 0.0
      %872 = vmatpush1.msra.mxu0 0.0
      %873 = vmatprep.subr.mxu0 0.0
      %874 = vmatpush1.msra.mxu0 0.0
      %875 = vmatprep.subr.mxu0 0.0
      %876 = vmatpush1.msra.mxu0 0.0
      %877 = vmatprep.subr.mxu0 0.0
      %878 = vmatpush1.msra.mxu0 0.0
      %879 = vmatprep.subr.mxu0 0.0
      %880 = vmatpush1.msra.mxu0 0.0
      %881 = vmatprep.subr.mxu0 0.0
      %882 = vmatpush1.msra.mxu0 0.0
      %883 = vmatprep.mubr.f32.mxu0 0.0
      %884 = vmatmul.mubr.f32.gmra.mrb[0].mxu0 %v811
      %v885 = vpop.f32.mrb[0].mxu0
      %v886 = vadd.f32 0.0, %v885
      %v887 = vpop.f32.mrb[0].mxu0
      %888 = vmatprep.mubr.f32.mxu0 0.0
      %889 = vmatmul.mubr.f32.gmra.mrb[0].mxu0 %v812
      %v890 = vpop.f32.mrb[0].mxu0
      %v891 = vadd.f32 0.0, %v890
      %v892 = vpop.f32.mrb[0].mxu0
      %893 = vmatprep.mubr.f32.mxu0 0.0
      %894 = vmatmul.mubr.f32.gmra.mrb[0].mxu0 %v813
      %v895 = vpop.f32.mrb[0].mxu0
      %v896 = vadd.f32 0.0, %v895
      %v897 = vpop.f32.mrb[0].mxu0
      %898 = vmatprep.mubr.f32.mxu0 0.0
      %899 = vmatmul.mubr.f32.gmra.mrb[0].mxu0 %v814
      %v900 = vpop.f32.mrb[0].mxu0
      %v901 = vadd.f32 0.0, %v900
      %v902 = vpop.f32.mrb[0].mxu0
      %903 = vdwg.mxu0
      %v904 = vadd.f32 %v775, %v886
      %v905 = vadd.f32 %v776, %v891
      %v906 = vadd.f32 %v777, %v896
      %v907 = vadd.f32 %v778, %v901
      %v908 = vld [vmem:[%s391 + $0x1] sm:$0xf]
      %v909 = vld [vmem:[%s391 + $0x9] sm:$0xf]
      %v910 = vld [vmem:[%s391 + $0x11] sm:$0xf]
      %v911 = vld [vmem:[%s391 + $0x19] sm:$0xf]
      %v912 = vld [vmem:[%s391 + $0x31] sm:$0xf]
      %v913 = vld [vmem:[%s391 + $0x39] sm:$0xf]
      %v914 = vld [vmem:[%s391 + $0x41] sm:$0xf]
      %v915 = vld [vmem:[%s391 + $0x49] sm:$0xf]
      %v916 = vld [vmem:[%s296 + $0x200] sm:$0xff]
      %v917 = vld [vmem:[%s296 + $0x208] sm:$0xff]
      %v918 = vld [vmem:[%s296 + $0x210] sm:$0xff]
      %v919 = vld [vmem:[%s296 + $0x218] sm:$0xff]
      %v920 = vld [vmem:[%s296 + $0x220] sm:$0xff]
      %v921 = vld [vmem:[%s296 + $0x228] sm:$0xff]
      %v922 = vld [vmem:[%s296 + $0x230] sm:$0xff]
      %v923 = vld [vmem:[%s296 + $0x238] sm:$0xff]
      %v924 = vld [vmem:[%s296 + $0x240] sm:$0xff]
      %v925 = vld [vmem:[%s296 + $0x248] sm:$0xff]
      %v926 = vld [vmem:[%s296 + $0x250] sm:$0xff]
      %v927 = vld [vmem:[%s296 + $0x258] sm:$0xff]
      %v928 = vld [vmem:[%s296 + $0x260] sm:$0xff]
      %v929 = vld [vmem:[%s296 + $0x268] sm:$0xff]
      %v930 = vld [vmem:[%s296 + $0x270] sm:$0xff]
      %v931 = vld [vmem:[%s296 + $0x278] sm:$0xff]
      %v940 = vcombine.low %v908, %v909
      %v941 = vcombine.low %v910, %v911
      %v942 = vcombine.low %v912, %v913
      %v943 = vcombine.low %v914, %v915
      %948 = vmatprep.subr.mxu0 0.0
      %949 = vmatpush1.msra.mxu0 %v916
      %950 = vmatprep.subr.mxu0 0.0
      %951 = vmatpush1.msra.mxu0 %v917
      %952 = vmatprep.subr.mxu0 0.0
      %953 = vmatpush1.msra.mxu0 %v918
      %954 = vmatprep.subr.mxu0 0.0
      %955 = vmatpush1.msra.mxu0 %v919
      %956 = vmatprep.subr.mxu0 0.0
      %957 = vmatpush1.msra.mxu0 %v920
      %958 = vmatprep.subr.mxu0 0.0
      %959 = vmatpush1.msra.mxu0 %v921
      %960 = vmatprep.subr.mxu0 0.0
      %961 = vmatpush1.msra.mxu0 %v922
      %962 = vmatprep.subr.mxu0 0.0
      %963 = vmatpush1.msra.mxu0 %v923
      %964 = vmatprep.subr.mxu0 0.0
      %965 = vmatpush1.msra.mxu0 %v924
      %966 = vmatprep.subr.mxu0 0.0
      %967 = vmatpush1.msra.mxu0 %v925
      %968 = vmatprep.subr.mxu0 0.0
      %969 = vmatpush1.msra.mxu0 %v926
      %970 = vmatprep.subr.mxu0 0.0
      %971 = vmatpush1.msra.mxu0 %v927
      %972 = vmatprep.subr.mxu0 0.0
      %973 = vmatpush1.msra.mxu0 %v928
      %974 = vmatprep.subr.mxu0 0.0
      %975 = vmatpush1.msra.mxu0 %v929
      %976 = vmatprep.subr.mxu0 0.0
      %977 = vmatpush1.msra.mxu0 %v930
      %978 = vmatprep.subr.mxu0 0.0
      %979 = vmatpush1.msra.mxu0 %v931
      %980 = vmatprep.subr.mxu0 0.0
      %981 = vmatpush1.msra.mxu0 0.0
      %982 = vmatprep.subr.mxu0 0.0
      %983 = vmatpush1.msra.mxu0 0.0
      %984 = vmatprep.subr.mxu0 0.0
      %985 = vmatpush1.msra.mxu0 0.0
      %986 = vmatprep.subr.mxu0 0.0
      %987 = vmatpush1.msra.mxu0 0.0
      %988 = vmatprep.subr.mxu0 0.0
      %989 = vmatpush1.msra.mxu0 0.0
      %990 = vmatprep.subr.mxu0 0.0
      %991 = vmatpush1.msra.mxu0 0.0
      %992 = vmatprep.subr.mxu0 0.0
      %993 = vmatpush1.msra.mxu0 0.0
      %994 = vmatprep.subr.mxu0 0.0
      %995 = vmatpush1.msra.mxu0 0.0
      %996 = vmatprep.subr.mxu0 0.0
      %997 = vmatpush1.msra.mxu0 0.0
      %998 = vmatprep.subr.mxu0 0.0
      %999 = vmatpush1.msra.mxu0 0.0
      %1000 = vmatprep.subr.mxu0 0.0
      %1001 = vmatpush1.msra.mxu0 0.0
      %1002 = vmatprep.subr.mxu0 0.0
      %1003 = vmatpush1.msra.mxu0 0.0
      %1004 = vmatprep.subr.mxu0 0.0
      %1005 = vmatpush1.msra.mxu0 0.0
      %1006 = vmatprep.subr.mxu0 0.0
      %1007 = vmatpush1.msra.mxu0 0.0
      %1008 = vmatprep.subr.mxu0 0.0
      %1009 = vmatpush1.msra.mxu0 0.0
      %1010 = vmatprep.subr.mxu0 0.0
      %1011 = vmatpush1.msra.mxu0 0.0
      %1012 = vmatprep.mubr.f32.mxu0 0.0
      %1013 = vmatmul.mubr.f32.gmra.mrb[0].mxu0 %v940
      %v1014 = vpop.f32.mrb[0].mxu0
      %v1015 = vadd.f32 0.0, %v1014
      %v1016 = vpop.f32.mrb[0].mxu0
      %1017 = vmatprep.mubr.f32.mxu0 0.0
      %1018 = vmatmul.mubr.f32.gmra.mrb[0].mxu0 %v941
      %v1019 = vpop.f32.mrb[0].mxu0
      %v1020 = vadd.f32 0.0, %v1019
      %v1021 = vpop.f32.mrb[0].mxu0
      %1022 = vmatprep.mubr.f32.mxu0 0.0
      %1023 = vmatmul.mubr.f32.gmra.mrb[0].mxu0 %v942
      %v1024 = vpop.f32.mrb[0].mxu0
      %v1025 = vadd.f32 0.0, %v1024
      %v1026 = vpop.f32.mrb[0].mxu0
      %1027 = vmatprep.mubr.f32.mxu0 0.0
      %1028 = vmatmul.mubr.f32.gmra.mrb[0].mxu0 %v943
      %v1029 = vpop.f32.mrb[0].mxu0
      %v1030 = vadd.f32 0.0, %v1029
      %v1031 = vpop.f32.mrb[0].mxu0
      %1032 = vdwg.mxu0
      %v1033 = vadd.f32 %v904, %v1015
      %v1034 = vadd.f32 %v905, %v1020
      %v1035 = vadd.f32 %v906, %v1025
      %v1036 = vadd.f32 %v907, %v1030
      %v1037 = vld [vmem:[%s391 + $0x2] sm:$0xf]
      %v1038 = vld [vmem:[%s391 + $0xa] sm:$0xf]
      %v1039 = vld [vmem:[%s391 + $0x12] sm:$0xf]
      %v1040 = vld [vmem:[%s391 + $0x1a] sm:$0xf]
      %v1041 = vld [vmem:[%s391 + $0x32] sm:$0xf]
      %v1042 = vld [vmem:[%s391 + $0x3a] sm:$0xf]
      %v1043 = vld [vmem:[%s391 + $0x42] sm:$0xf]
      %v1044 = vld [vmem:[%s391 + $0x4a] sm:$0xf]
      %v1045 = vld [vmem:[%s296 + $0x280] sm:$0xff]
      %v1046 = vld [vmem:[%s296 + $0x288] sm:$0xff]
      %v1047 = vld [vmem:[%s296 + $0x290] sm:$0xff]
      %v1048 = vld [vmem:[%s296 + $0x298] sm:$0xff]
      %v1049 = vld [vmem:[%s296 + $0x2a0] sm:$0xff]
      %v1050 = vld [vmem:[%s296 + $0x2a8] sm:$0xff]
      %v1051 = vld [vmem:[%s296 + $0x2b0] sm:$0xff]
      %v1052 = vld [vmem:[%s296 + $0x2b8] sm:$0xff]
      %v1053 = vld [vmem:[%s296 + $0x2c0] sm:$0xff]
      %v1054 = vld [vmem:[%s296 + $0x2c8] sm:$0xff]
      %v1055 = vld [vmem:[%s296 + $0x2d0] sm:$0xff]
      %v1056 = vld [vmem:[%s296 + $0x2d8] sm:$0xff]
      %v1057 = vld [vmem:[%s296 + $0x2e0] sm:$0xff]
      %v1058 = vld [vmem:[%s296 + $0x2e8] sm:$0xff]
      %v1059 = vld [vmem:[%s296 + $0x2f0] sm:$0xff]
      %v1060 = vld [vmem:[%s296 + $0x2f8] sm:$0xff]
      %v1069 = vcombine.low %v1037, %v1038
      %v1070 = vcombine.low %v1039, %v1040
      %v1071 = vcombine.low %v1041, %v1042
      %v1072 = vcombine.low %v1043, %v1044
      %1077 = vmatprep.subr.mxu0 0.0
      %1078 = vmatpush1.msra.mxu0 %v1045
      %1079 = vmatprep.subr.mxu0 0.0
      %1080 = vmatpush1.msra.mxu0 %v1046
      %1081 = vmatprep.subr.mxu0 0.0
      %1082 = vmatpush1.msra.mxu0 %v1047
      %1083 = vmatprep.subr.mxu0 0.0
      %1084 = vmatpush1.msra.mxu0 %v1048
      %1085 = vmatprep.subr.mxu0 0.0
      %1086 = vmatpush1.msra.mxu0 %v1049
      %1087 = vmatprep.subr.mxu0 0.0
      %1088 = vmatpush1.msra.mxu0 %v1050
      %1089 = vmatprep.subr.mxu0 0.0
      %1090 = vmatpush1.msra.mxu0 %v1051
      %1091 = vmatprep.subr.mxu0 0.0
      %1092 = vmatpush1.msra.mxu0 %v1052
      %1093 = vmatprep.subr.mxu0 0.0
      %1094 = vmatpush1.msra.mxu0 %v1053
      %1095 = vmatprep.subr.mxu0 0.0
      %1096 = vmatpush1.msra.mxu0 %v1054
      %1097 = vmatprep.subr.mxu0 0.0
      %1098 = vmatpush1.msra.mxu0 %v1055
      %1099 = vmatprep.subr.mxu0 0.0
      %1100 = vmatpush1.msra.mxu0 %v1056
      %1101 = vmatprep.subr.mxu0 0.0
      %1102 = vmatpush1.msra.mxu0 %v1057
      %1103 = vmatprep.subr.mxu0 0.0
      %1104 = vmatpush1.msra.mxu0 %v1058
      %1105 = vmatprep.subr.mxu0 0.0
      %1106 = vmatpush1.msra.mxu0 %v1059
      %1107 = vmatprep.subr.mxu0 0.0
      %1108 = vmatpush1.msra.mxu0 %v1060
      %1109 = vmatprep.subr.mxu0 0.0
      %1110 = vmatpush1.msra.mxu0 0.0
      %1111 = vmatprep.subr.mxu0 0.0
      %1112 = vmatpush1.msra.mxu0 0.0
      %1113 = vmatprep.subr.mxu0 0.0
      %1114 = vmatpush1.msra.mxu0 0.0
      %1115 = vmatprep.subr.mxu0 0.0
      %1116 = vmatpush1.msra.mxu0 0.0
      %1117 = vmatprep.subr.mxu0 0.0
      %1118 = vmatpush1.msra.mxu0 0.0
      %1119 = vmatprep.subr.mxu0 0.0
      %1120 = vmatpush1.msra.mxu0 0.0
      %1121 = vmatprep.subr.mxu0 0.0
      %1122 = vmatpush1.msra.mxu0 0.0
      %1123 = vmatprep.subr.mxu0 0.0
      %1124 = vmatpush1.msra.mxu0 0.0
      %1125 = vmatprep.subr.mxu0 0.0
      %1126 = vmatpush1.msra.mxu0 0.0
      %1127 = vmatprep.subr.mxu0 0.0
      %1128 = vmatpush1.msra.mxu0 0.0
      %1129 = vmatprep.subr.mxu0 0.0
      %1130 = vmatpush1.msra.mxu0 0.0
      %1131 = vmatprep.subr.mxu0 0.0
      %1132 = vmatpush1.msra.mxu0 0.0
      %1133 = vmatprep.subr.mxu0 0.0
      %1134 = vmatpush1.msra.mxu0 0.0
      %1135 = vmatprep.subr.mxu0 0.0
      %1136 = vmatpush1.msra.mxu0 0.0
      %1137 = vmatprep.subr.mxu0 0.0
      %1138 = vmatpush1.msra.mxu0 0.0
      %1139 = vmatprep.subr.mxu0 0.0
      %1140 = vmatpush1.msra.mxu0 0.0
      %1141 = vmatprep.mubr.f32.mxu0 0.0
      %1142 = vmatmul.mubr.f32.gmra.mrb[0].mxu0 %v1069
      %v1143 = vpop.f32.mrb[0].mxu0
      %v1144 = vadd.f32 0.0, %v1143
      %v1145 = vpop.f32.mrb[0].mxu0
      %1146 = vmatprep.mubr.f32.mxu0 0.0
      %1147 = vmatmul.mubr.f32.gmra.mrb[0].mxu0 %v1070
      %v1148 = vpop.f32.mrb[0].mxu0
      %v1149 = vadd.f32 0.0, %v1148
      %v1150 = vpop.f32.mrb[0].mxu0
      %1151 = vmatprep.mubr.f32.mxu0 0.0
      %1152 = vmatmul.mubr.f32.gmra.mrb[0].mxu0 %v1071
      %v1153 = vpop.f32.mrb[0].mxu0
      %v1154 = vadd.f32 0.0, %v1153
      %v1155 = vpop.f32.mrb[0].mxu0
      %1156 = vmatprep.mubr.f32.mxu0 0.0
      %1157 = vmatmul.mubr.f32.gmra.mrb[0].mxu0 %v1072
      %v1158 = vpop.f32.mrb[0].mxu0
      %v1159 = vadd.f32 0.0, %v1158
      %v1160 = vpop.f32.mrb[0].mxu0
      %1161 = vdwg.mxu0
      %v1162 = vadd.f32 %v1033, %v1144
      %v1163 = vadd.f32 %v1034, %v1149
      %v1164 = vadd.f32 %v1035, %v1154
      %v1165 = vadd.f32 %v1036, %v1159
      %s1166 = scalar_lea.vmem [#allocation2], 16
      %v1167 = vld [vmem:[%s1166] sm:$0xf]
      %v1168 = vld [vmem:[%s1166 + $0x8] sm:$0xf]
      %v1169 = vld [vmem:[%s1166 + $0x10] sm:$0xf]
      %v1170 = vld [vmem:[%s1166 + $0x18] sm:$0xf]
      %v1171 = vld [vmem:[%s1166 + $0x30] sm:$0xf]
      %v1172 = vld [vmem:[%s1166 + $0x38] sm:$0xf]
      %v1173 = vld [vmem:[%s1166 + $0x40] sm:$0xf]
      %v1174 = vld [vmem:[%s1166 + $0x48] sm:$0xf]
      %v1175 = vld [vmem:[%s296 + $0x300] sm:$0xff]
      %v1176 = vld [vmem:[%s296 + $0x308] sm:$0xff]
      %v1177 = vld [vmem:[%s296 + $0x310] sm:$0xff]
      %v1178 = vld [vmem:[%s296 + $0x318] sm:$0xff]
      %v1179 = vld [vmem:[%s296 + $0x320] sm:$0xff]
      %v1180 = vld [vmem:[%s296 + $0x328] sm:$0xff]
      %v1181 = vld [vmem:[%s296 + $0x330] sm:$0xff]
      %v1182 = vld [vmem:[%s296 + $0x338] sm:$0xff]
      %v1183 = vld [vmem:[%s296 + $0x340] sm:$0xff]
      %v1184 = vld [vmem:[%s296 + $0x348] sm:$0xff]
      %v1185 = vld [vmem:[%s296 + $0x350] sm:$0xff]
      %v1186 = vld [vmem:[%s296 + $0x358] sm:$0xff]
      %v1187 = vld [vmem:[%s296 + $0x360] sm:$0xff]
      %v1188 = vld [vmem:[%s296 + $0x368] sm:$0xff]
      %v1189 = vld [vmem:[%s296 + $0x370] sm:$0xff]
      %v1190 = vld [vmem:[%s296 + $0x378] sm:$0xff]
      %v1199 = vcombine.low %v1167, %v1168
      %v1200 = vcombine.low %v1169, %v1170
      %v1201 = vcombine.low %v1171, %v1172
      %v1202 = vcombine.low %v1173, %v1174
      %1207 = vmatprep.subr.mxu0 0.0
      %1208 = vmatpush1.msra.mxu0 %v1175
      %1209 = vmatprep.subr.mxu0 0.0
      %1210 = vmatpush1.msra.mxu0 %v1176
      %1211 = vmatprep.subr.mxu0 0.0
      %1212 = vmatpush1.msra.mxu0 %v1177
      %1213 = vmatprep.subr.mxu0 0.0
      %1214 = vmatpush1.msra.mxu0 %v1178
      %1215 = vmatprep.subr.mxu0 0.0
      %1216 = vmatpush1.msra.mxu0 %v1179
      %1217 = vmatprep.subr.mxu0 0.0
      %1218 = vmatpush1.msra.mxu0 %v1180
      %1219 = vmatprep.subr.mxu0 0.0
      %1220 = vmatpush1.msra.mxu0 %v1181
      %1221 = vmatprep.subr.mxu0 0.0
      %1222 = vmatpush1.msra.mxu0 %v1182
      %1223 = vmatprep.subr.mxu0 0.0
      %1224 = vmatpush1.msra.mxu0 %v1183
      %1225 = vmatprep.subr.mxu0 0.0
      %1226 = vmatpush1.msra.mxu0 %v1184
      %1227 = vmatprep.subr.mxu0 0.0
      %1228 = vmatpush1.msra.mxu0 %v1185
      %1229 = vmatprep.subr.mxu0 0.0
      %1230 = vmatpush1.msra.mxu0 %v1186
      %1231 = vmatprep.subr.mxu0 0.0
      %1232 = vmatpush1.msra.mxu0 %v1187
      %1233 = vmatprep.subr.mxu0 0.0
      %1234 = vmatpush1.msra.mxu0 %v1188
      %1235 = vmatprep.subr.mxu0 0.0
      %1236 = vmatpush1.msra.mxu0 %v1189
      %1237 = vmatprep.subr.mxu0 0.0
      %1238 = vmatpush1.msra.mxu0 %v1190
      %1239 = vmatprep.subr.mxu0 0.0
      %1240 = vmatpush1.msra.mxu0 0.0
      %1241 = vmatprep.subr.mxu0 0.0
      %1242 = vmatpush1.msra.mxu0 0.0
      %1243 = vmatprep.subr.mxu0 0.0
      %1244 = vmatpush1.msra.mxu0 0.0
      %1245 = vmatprep.subr.mxu0 0.0
      %1246 = vmatpush1.msra.mxu0 0.0
      %1247 = vmatprep.subr.mxu0 0.0
      %1248 = vmatpush1.msra.mxu0 0.0
      %1249 = vmatprep.subr.mxu0 0.0
      %1250 = vmatpush1.msra.mxu0 0.0
      %1251 = vmatprep.subr.mxu0 0.0
      %1252 = vmatpush1.msra.mxu0 0.0
      %1253 = vmatprep.subr.mxu0 0.0
      %1254 = vmatpush1.msra.mxu0 0.0
      %1255 = vmatprep.subr.mxu0 0.0
      %1256 = vmatpush1.msra.mxu0 0.0
      %1257 = vmatprep.subr.mxu0 0.0
      %1258 = vmatpush1.msra.mxu0 0.0
      %1259 = vmatprep.subr.mxu0 0.0
      %1260 = vmatpush1.msra.mxu0 0.0
      %1261 = vmatprep.subr.mxu0 0.0
      %1262 = vmatpush1.msra.mxu0 0.0
      %1263 = vmatprep.subr.mxu0 0.0
      %1264 = vmatpush1.msra.mxu0 0.0
      %1265 = vmatprep.subr.mxu0 0.0
      %1266 = vmatpush1.msra.mxu0 0.0
      %1267 = vmatprep.subr.mxu0 0.0
      %1268 = vmatpush1.msra.mxu0 0.0
      %1269 = vmatprep.subr.mxu0 0.0
      %1270 = vmatpush1.msra.mxu0 0.0
      %1271 = vmatprep.mubr.f32.mxu0 0.0
      %1272 = vmatmul.mubr.f32.gmra.mrb[0].mxu0 %v1199
      %v1273 = vpop.f32.mrb[0].mxu0
      %v1274 = vadd.f32 0.0, %v1273
      %v1275 = vpop.f32.mrb[0].mxu0
      %1276 = vmatprep.mubr.f32.mxu0 0.0
      %1277 = vmatmul.mubr.f32.gmra.mrb[0].mxu0 %v1200
      %v1278 = vpop.f32.mrb[0].mxu0
      %v1279 = vadd.f32 0.0, %v1278
      %v1280 = vpop.f32.mrb[0].mxu0
      %1281 = vmatprep.mubr.f32.mxu0 0.0
      %1282 = vmatmul.mubr.f32.gmra.mrb[0].mxu0 %v1201
      %v1283 = vpop.f32.mrb[0].mxu0
      %v1284 = vadd.f32 0.0, %v1283
      %v1285 = vpop.f32.mrb[0].mxu0
      %1286 = vmatprep.mubr.f32.mxu0 0.0
      %1287 = vmatmul.mubr.f32.gmra.mrb[0].mxu0 %v1202
      %v1288 = vpop.f32.mrb[0].mxu0
      %v1289 = vadd.f32 0.0, %v1288
      %v1290 = vpop.f32.mrb[0].mxu0
      %1291 = vdwg.mxu0
      %v1292 = vadd.f32 %v1162, %v1274
      %v1293 = vadd.f32 %v1163, %v1279
      %v1294 = vadd.f32 %v1164, %v1284
      %v1295 = vadd.f32 %v1165, %v1289
      %v1296 = vld [vmem:[%s1166 + $0x1] sm:$0xf]
      %v1297 = vld [vmem:[%s1166 + $0x9] sm:$0xf]
      %v1298 = vld [vmem:[%s1166 + $0x11] sm:$0xf]
      %v1299 = vld [vmem:[%s1166 + $0x19] sm:$0xf]
      %v1300 = vld [vmem:[%s1166 + $0x31] sm:$0xf]
      %v1301 = vld [vmem:[%s1166 + $0x39] sm:$0xf]
      %v1302 = vld [vmem:[%s1166 + $0x41] sm:$0xf]
      %v1303 = vld [vmem:[%s1166 + $0x49] sm:$0xf]
      %v1304 = vld [vmem:[%s296 + $0x380] sm:$0xff]
      %v1305 = vld [vmem:[%s296 + $0x388] sm:$0xff]
      %v1306 = vld [vmem:[%s296 + $0x390] sm:$0xff]
      %v1307 = vld [vmem:[%s296 + $0x398] sm:$0xff]
      %v1308 = vld [vmem:[%s296 + $0x3a0] sm:$0xff]
      %v1309 = vld [vmem:[%s296 + $0x3a8] sm:$0xff]
      %v1310 = vld [vmem:[%s296 + $0x3b0] sm:$0xff]
      %v1311 = vld [vmem:[%s296 + $0x3b8] sm:$0xff]
      %v1312 = vld [vmem:[%s296 + $0x3c0] sm:$0xff]
      %v1313 = vld [vmem:[%s296 + $0x3c8] sm:$0xff]
      %v1314 = vld [vmem:[%s296 + $0x3d0] sm:$0xff]
      %v1315 = vld [vmem:[%s296 + $0x3d8] sm:$0xff]
      %v1316 = vld [vmem:[%s296 + $0x3e0] sm:$0xff]
      %v1317 = vld [vmem:[%s296 + $0x3e8] sm:$0xff]
      %v1318 = vld [vmem:[%s296 + $0x3f0] sm:$0xff]
      %v1319 = vld [vmem:[%s296 + $0x3f8] sm:$0xff]
      %v1328 = vcombine.low %v1296, %v1297
      %v1329 = vcombine.low %v1298, %v1299
      %v1330 = vcombine.low %v1300, %v1301
      %v1331 = vcombine.low %v1302, %v1303
      %1336 = vmatprep.subr.mxu0 0.0
      %1337 = vmatpush1.msra.mxu0 %v1304
      %1338 = vmatprep.subr.mxu0 0.0
      %1339 = vmatpush1.msra.mxu0 %v1305
      %1340 = vmatprep.subr.mxu0 0.0
      %1341 = vmatpush1.msra.mxu0 %v1306
      %1342 = vmatprep.subr.mxu0 0.0
      %1343 = vmatpush1.msra.mxu0 %v1307
      %1344 = vmatprep.subr.mxu0 0.0
      %1345 = vmatpush1.msra.mxu0 %v1308
      %1346 = vmatprep.subr.mxu0 0.0
      %1347 = vmatpush1.msra.mxu0 %v1309
      %1348 = vmatprep.subr.mxu0 0.0
      %1349 = vmatpush1.msra.mxu0 %v1310
      %1350 = vmatprep.subr.mxu0 0.0
      %1351 = vmatpush1.msra.mxu0 %v1311
      %1352 = vmatprep.subr.mxu0 0.0
      %1353 = vmatpush1.msra.mxu0 %v1312
      %1354 = vmatprep.subr.mxu0 0.0
      %1355 = vmatpush1.msra.mxu0 %v1313
      %1356 = vmatprep.subr.mxu0 0.0
      %1357 = vmatpush1.msra.mxu0 %v1314
      %1358 = vmatprep.subr.mxu0 0.0
      %1359 = vmatpush1.msra.mxu0 %v1315
      %1360 = vmatprep.subr.mxu0 0.0
      %1361 = vmatpush1.msra.mxu0 %v1316
      %1362 = vmatprep.subr.mxu0 0.0
      %1363 = vmatpush1.msra.mxu0 %v1317
      %1364 = vmatprep.subr.mxu0 0.0
      %1365 = vmatpush1.msra.mxu0 %v1318
      %1366 = vmatprep.subr.mxu0 0.0
      %1367 = vmatpush1.msra.mxu0 %v1319
      %1368 = vmatprep.subr.mxu0 0.0
      %1369 = vmatpush1.msra.mxu0 0.0
      %1370 = vmatprep.subr.mxu0 0.0
      %1371 = vmatpush1.msra.mxu0 0.0
      %1372 = vmatprep.subr.mxu0 0.0
      %1373 = vmatpush1.msra.mxu0 0.0
      %1374 = vmatprep.subr.mxu0 0.0
      %1375 = vmatpush1.msra.mxu0 0.0
      %1376 = vmatprep.subr.mxu0 0.0
      %1377 = vmatpush1.msra.mxu0 0.0
      %1378 = vmatprep.subr.mxu0 0.0
      %1379 = vmatpush1.msra.mxu0 0.0
      %1380 = vmatprep.subr.mxu0 0.0
      %1381 = vmatpush1.msra.mxu0 0.0
      %1382 = vmatprep.subr.mxu0 0.0
      %1383 = vmatpush1.msra.mxu0 0.0
      %1384 = vmatprep.subr.mxu0 0.0
      %1385 = vmatpush1.msra.mxu0 0.0
      %1386 = vmatprep.subr.mxu0 0.0
      %1387 = vmatpush1.msra.mxu0 0.0
      %1388 = vmatprep.subr.mxu0 0.0
      %1389 = vmatpush1.msra.mxu0 0.0
      %1390 = vmatprep.subr.mxu0 0.0
      %1391 = vmatpush1.msra.mxu0 0.0
      %1392 = vmatprep.subr.mxu0 0.0
      %1393 = vmatpush1.msra.mxu0 0.0
      %1394 = vmatprep.subr.mxu0 0.0
      %1395 = vmatpush1.msra.mxu0 0.0
      %1396 = vmatprep.subr.mxu0 0.0
      %1397 = vmatpush1.msra.mxu0 0.0
      %1398 = vmatprep.subr.mxu0 0.0
      %1399 = vmatpush1.msra.mxu0 0.0
      %1400 = vmatprep.mubr.f32.mxu0 0.0
      %1401 = vmatmul.mubr.f32.gmra.mrb[0].mxu0 %v1328
      %v1402 = vpop.f32.mrb[0].mxu0
      %v1403 = vadd.f32 0.0, %v1402
      %v1404 = vpop.f32.mrb[0].mxu0
      %1405 = vmatprep.mubr.f32.mxu0 0.0
      %1406 = vmatmul.mubr.f32.gmra.mrb[0].mxu0 %v1329
      %v1407 = vpop.f32.mrb[0].mxu0
      %v1408 = vadd.f32 0.0, %v1407
      %v1409 = vpop.f32.mrb[0].mxu0
      %1410 = vmatprep.mubr.f32.mxu0 0.0
      %1411 = vmatmul.mubr.f32.gmra.mrb[0].mxu0 %v1330
      %v1412 = vpop.f32.mrb[0].mxu0
      %v1413 = vadd.f32 0.0, %v1412
      %v1414 = vpop.f32.mrb[0].mxu0
      %1415 = vmatprep.mubr.f32.mxu0 0.0
      %1416 = vmatmul.mubr.f32.gmra.mrb[0].mxu0 %v1331
      %v1417 = vpop.f32.mrb[0].mxu0
      %v1418 = vadd.f32 0.0, %v1417
      %v1419 = vpop.f32.mrb[0].mxu0
      %1420 = vdwg.mxu0
      %v1421 = vadd.f32 %v1292, %v1403
      %v1422 = vadd.f32 %v1293, %v1408
      %v1423 = vadd.f32 %v1294, %v1413
      %v1424 = vadd.f32 %v1295, %v1418
      %v1425 = vld [vmem:[%s1166 + $0x2] sm:$0xf]
      %v1426 = vld [vmem:[%s1166 + $0xa] sm:$0xf]
      %v1427 = vld [vmem:[%s1166 + $0x12] sm:$0xf]
      %v1428 = vld [vmem:[%s1166 + $0x1a] sm:$0xf]
      %v1429 = vld [vmem:[%s1166 + $0x32] sm:$0xf]
      %v1430 = vld [vmem:[%s1166 + $0x3a] sm:$0xf]
      %v1431 = vld [vmem:[%s1166 + $0x42] sm:$0xf]
      %v1432 = vld [vmem:[%s1166 + $0x4a] sm:$0xf]
      %v1433 = vld [vmem:[%s296 + $0x400] sm:$0xff]
      %v1434 = vld [vmem:[%s296 + $0x408] sm:$0xff]
      %v1435 = vld [vmem:[%s296 + $0x410] sm:$0xff]
      %v1436 = vld [vmem:[%s296 + $0x418] sm:$0xff]
      %v1437 = vld [vmem:[%s296 + $0x420] sm:$0xff]
      %v1438 = vld [vmem:[%s296 + $0x428] sm:$0xff]
      %v1439 = vld [vmem:[%s296 + $0x430] sm:$0xff]
      %v1440 = vld [vmem:[%s296 + $0x438] sm:$0xff]
      %v1441 = vld [vmem:[%s296 + $0x440] sm:$0xff]
      %v1442 = vld [vmem:[%s296 + $0x448] sm:$0xff]
      %v1443 = vld [vmem:[%s296 + $0x450] sm:$0xff]
      %v1444 = vld [vmem:[%s296 + $0x458] sm:$0xff]
      %v1445 = vld [vmem:[%s296 + $0x460] sm:$0xff]
      %v1446 = vld [vmem:[%s296 + $0x468] sm:$0xff]
      %v1447 = vld [vmem:[%s296 + $0x470] sm:$0xff]
      %v1448 = vld [vmem:[%s296 + $0x478] sm:$0xff]
      %v1457 = vcombine.low %v1425, %v1426
      %v1458 = vcombine.low %v1427, %v1428
      %v1459 = vcombine.low %v1429, %v1430
      %v1460 = vcombine.low %v1431, %v1432
      %1465 = vmatprep.subr.mxu0 0.0
      %1466 = vmatpush1.msra.mxu0 %v1433
      %1467 = vmatprep.subr.mxu0 0.0
      %1468 = vmatpush1.msra.mxu0 %v1434
      %1469 = vmatprep.subr.mxu0 0.0
      %1470 = vmatpush1.msra.mxu0 %v1435
      %1471 = vmatprep.subr.mxu0 0.0
      %1472 = vmatpush1.msra.mxu0 %v1436
      %1473 = vmatprep.subr.mxu0 0.0
      %1474 = vmatpush1.msra.mxu0 %v1437
      %1475 = vmatprep.subr.mxu0 0.0
      %1476 = vmatpush1.msra.mxu0 %v1438
      %1477 = vmatprep.subr.mxu0 0.0
      %1478 = vmatpush1.msra.mxu0 %v1439
      %1479 = vmatprep.subr.mxu0 0.0
      %1480 = vmatpush1.msra.mxu0 %v1440
      %1481 = vmatprep.subr.mxu0 0.0
      %1482 = vmatpush1.msra.mxu0 %v1441
      %1483 = vmatprep.subr.mxu0 0.0
      %1484 = vmatpush1.msra.mxu0 %v1442
      %1485 = vmatprep.subr.mxu0 0.0
      %1486 = vmatpush1.msra.mxu0 %v1443
      %1487 = vmatprep.subr.mxu0 0.0
      %1488 = vmatpush1.msra.mxu0 %v1444
      %1489 = vmatprep.subr.mxu0 0.0
      %1490 = vmatpush1.msra.mxu0 %v1445
      %1491 = vmatprep.subr.mxu0 0.0
      %1492 = vmatpush1.msra.mxu0 %v1446
      %1493 = vmatprep.subr.mxu0 0.0
      %1494 = vmatpush1.msra.mxu0 %v1447
      %1495 = vmatprep.subr.mxu0 0.0
      %1496 = vmatpush1.msra.mxu0 %v1448
      %1497 = vmatprep.subr.mxu0 0.0
      %1498 = vmatpush1.msra.mxu0 0.0
      %1499 = vmatprep.subr.mxu0 0.0
      %1500 = vmatpush1.msra.mxu0 0.0
      %1501 = vmatprep.subr.mxu0 0.0
      %1502 = vmatpush1.msra.mxu0 0.0
      %1503 = vmatprep.subr.mxu0 0.0
      %1504 = vmatpush1.msra.mxu0 0.0
      %1505 = vmatprep.subr.mxu0 0.0
      %1506 = vmatpush1.msra.mxu0 0.0
      %1507 = vmatprep.subr.mxu0 0.0
      %1508 = vmatpush1.msra.mxu0 0.0
      %1509 = vmatprep.subr.mxu0 0.0
      %1510 = vmatpush1.msra.mxu0 0.0
      %1511 = vmatprep.subr.mxu0 0.0
      %1512 = vmatpush1.msra.mxu0 0.0
      %1513 = vmatprep.subr.mxu0 0.0
      %1514 = vmatpush1.msra.mxu0 0.0
      %1515 = vmatprep.subr.mxu0 0.0
      %1516 = vmatpush1.msra.mxu0 0.0
      %1517 = vmatprep.subr.mxu0 0.0
      %1518 = vmatpush1.msra.mxu0 0.0
      %1519 = vmatprep.subr.mxu0 0.0
      %1520 = vmatpush1.msra.mxu0 0.0
      %1521 = vmatprep.subr.mxu0 0.0
      %1522 = vmatpush1.msra.mxu0 0.0
      %1523 = vmatprep.subr.mxu0 0.0
      %1524 = vmatpush1.msra.mxu0 0.0
      %1525 = vmatprep.subr.mxu0 0.0
      %1526 = vmatpush1.msra.mxu0 0.0
      %1527 = vmatprep.subr.mxu0 0.0
      %1528 = vmatpush1.msra.mxu0 0.0
      %1529 = vmatprep.mubr.f32.mxu0 0.0
      %1530 = vmatmul.mubr.f32.gmra.mrb[0].mxu0 %v1457
      %v1531 = vpop.f32.mrb[0].mxu0
      %v1532 = vadd.f32 0.0, %v1531
      %v1533 = vpop.f32.mrb[0].mxu0
      %1534 = vmatprep.mubr.f32.mxu0 0.0
      %1535 = vmatmul.mubr.f32.gmra.mrb[0].mxu0 %v1458
      %v1536 = vpop.f32.mrb[0].mxu0
      %v1537 = vadd.f32 0.0, %v1536
      %v1538 = vpop.f32.mrb[0].mxu0
      %1539 = vmatprep.mubr.f32.mxu0 0.0
      %1540 = vmatmul.mubr.f32.gmra.mrb[0].mxu0 %v1459
      %v1541 = vpop.f32.mrb[0].mxu0
      %v1542 = vadd.f32 0.0, %v1541
      %v1543 = vpop.f32.mrb[0].mxu0
      %1544 = vmatprep.mubr.f32.mxu0 0.0
      %1545 = vmatmul.mubr.f32.gmra.mrb[0].mxu0 %v1460
      %v1546 = vpop.f32.mrb[0].mxu0
      %v1547 = vadd.f32 0.0, %v1546
      %v1548 = vpop.f32.mrb[0].mxu0
      %1549 = vdwg.mxu0
      %v1550 = vadd.f32 %v1421, %v1532
      %v1551 = vadd.f32 %v1422, %v1537
      %v1552 = vadd.f32 %v1423, %v1542
      %v1553 = vadd.f32 %v1424, %v1547
      %v1554 = vadd.f32 %v1550, %v1551
      %v1555 = vadd.f32 %v1554, %v1552
      %v1556 = vadd.f32 %v1555, %v1553
      %v1557 = vrot.slane %v1556, 4
      %v1558 = vadd.f32 %v1556, %v1557
      %v1559 = vrot.slane %v1558, 2
      %v1560 = vadd.f32 %v1558, %v1559
      %v1561 = vrot.slane %v1560, 1
      %v1562 = vadd.f32 %v1560, %v1561
      %v1563 = vmul.f32 %v1550, %v1550
      %v1564 = vmul.f32 %v1551, %v1551
      %v1565 = vmul.f32 %v1552, %v1552
      %v1566 = vmul.f32 %v1553, %v1553
      %v1567 = vadd.f32 %v1563, %v1564
      %v1568 = vadd.f32 %v1567, %v1565
      %v1569 = vadd.f32 %v1568, %v1566
      %v1570 = vrot.slane %v1569, 4
      %v1571 = vadd.f32 %v1569, %v1570
      %v1572 = vrot.slane %v1571, 2
      %v1573 = vadd.f32 %v1571, %v1572
      %v1574 = vrot.slane %v1573, 1
      %v1575 = vadd.f32 %v1573, %v1574
      %v1576 = vmul.f32 %v1562, 0.03125
      %v1577 = vmul.f32 %v1575, 0.03125
      %v1578 = vmul.f32 %v1576, %v1576
      %v1579 = vsub.f32 %v1577, %v1578
      %v1580 = vmax.f32 %v1579, 0.0
      %v1581 = vld [vmem:[%s299] sm:$0x1]
      %v1582 = vadd.f32 %v1580, 1e-05
      %v1583 = vrsqrt.pop %v1582
      %v1584 = vmul.f32 %v1581, %v1583
      %v1585 = vld [vmem:[%s302] sm:$0x1]
      %v1586 = vmul.f32 %v1576, %v1584
      %v1587 = vsub.f32 %v1585, %v1586
      %v1589 = vlaneseq
      %v1590 = vshrl.u32 %v1589, 7
      %v1591 = vsub.s32 0, %v1590
      %v1592 = vrot.slane %v1584, %v1591
      %v1594 = vmul.f32 %v1550, %v1592
      %v1595 = vmul.f32 %v1551, %v1592
      %v1596 = vmul.f32 %v1552, %v1592
      %v1597 = vmul.f32 %v1553, %v1592
      %v1599 = vlaneseq
      %v1600 = vshrl.u32 %v1599, 7
      %v1601 = vsub.s32 0, %v1600
      %v1602 = vrot.slane %v1587, %v1601
      %v1604 = vadd.f32 %v1594, %v1602
      %v1605 = vadd.f32 %v1595, %v1602
      %v1606 = vadd.f32 %v1596, %v1602
      %v1607 = vadd.f32 %v1597, %v1602
      %v1608 = vmax.f32 %v1604, 0.0
      %v1609 = vmax.f32 %v1605, 0.0
      %v1610 = vmax.f32 %v1606, 0.0
      %v1611 = vmax.f32 %v1607, 0.0
      %v1616 = vcombine.high %v1608, %v1608
      %v1617 = vcombine.high %v1609, %v1609
      %v1618 = vcombine.high %v1610, %v1610
      %v1619 = vcombine.high %v1611, %v1611
      %1624 = vst [vmem:[%s391 + $0x1] sm:$0xf] %v1608
      %1625 = vst [vmem:[%s391 + $0x9] sm:$0xf] %v1616
      %1626 = vst [vmem:[%s391 + $0x11] sm:$0xf] %v1609
      %1627 = vst [vmem:[%s391 + $0x19] sm:$0xf] %v1617
      %1628 = vst [vmem:[%s391 + $0x31] sm:$0xf] %v1610
      %1629 = vst [vmem:[%s391 + $0x39] sm:$0xf] %v1618
      %1630 = vst [vmem:[%s391 + $0x41] sm:$0xf] %v1611
      %1631 = vst [vmem:[%s391 + $0x49] sm:$0xf] %v1619
      %v1632 = vld [vmem:[#allocation2] sm:$0xf]
      %v1633 = vld [vmem:[#allocation2 + $0x8] sm:$0xf]
      %v1634 = vld [vmem:[#allocation2 + $0x10] sm:$0xf]
      %v1635 = vld [vmem:[#allocation2 + $0x18] sm:$0xf]
      %v1636 = vld [vmem:[#allocation2 + $0x30] sm:$0xf]
      %v1637 = vld [vmem:[#allocation2 + $0x38] sm:$0xf]
      %v1638 = vld [vmem:[#allocation2 + $0x40] sm:$0xf]
      %v1639 = vld [vmem:[#allocation2 + $0x48] sm:$0xf]
      %v1640 = vld [vmem:[%s307] sm:$0xff]
      %v1641 = vld [vmem:[%s307 + $0x8] sm:$0xff]
      %v1642 = vld [vmem:[%s307 + $0x10] sm:$0xff]
      %v1643 = vld [vmem:[%s307 + $0x18] sm:$0xff]
      %v1644 = vld [vmem:[%s307 + $0x20] sm:$0xff]
      %v1645 = vld [vmem:[%s307 + $0x28] sm:$0xff]
      %v1646 = vld [vmem:[%s307 + $0x30] sm:$0xff]
      %v1647 = vld [vmem:[%s307 + $0x38] sm:$0xff]
      %v1648 = vld [vmem:[%s307 + $0x40] sm:$0xff]
      %v1649 = vld [vmem:[%s307 + $0x48] sm:$0xff]
      %v1650 = vld [vmem:[%s307 + $0x50] sm:$0xff]
      %v1651 = vld [vmem:[%s307 + $0x58] sm:$0xff]
      %v1652 = vld [vmem:[%s307 + $0x60] sm:$0xff]
      %v1653 = vld [vmem:[%s307 + $0x68] sm:$0xff]
      %v1654 = vld [vmem:[%s307 + $0x70] sm:$0xff]
      %v1655 = vld [vmem:[%s307 + $0x78] sm:$0xff]
      %v1656 = vld [vmem:[#allocation2 + $0x1] sm:$0xf]
      %v1657 = vld [vmem:[#allocation2 + $0x9] sm:$0xf]
      %v1658 = vld [vmem:[#allocation2 + $0x11] sm:$0xf]
      %v1659 = vld [vmem:[#allocation2 + $0x19] sm:$0xf]
      %v1660 = vld [vmem:[#allocation2 + $0x31] sm:$0xf]
      %v1661 = vld [vmem:[#allocation2 + $0x39] sm:$0xf]
      %v1662 = vld [vmem:[#allocation2 + $0x41] sm:$0xf]
      %v1663 = vld [vmem:[#allocation2 + $0x49] sm:$0xf]
      %v1664 = vld [vmem:[%s307 + $0x80] sm:$0xff]
      %v1665 = vld [vmem:[%s307 + $0x88] sm:$0xff]
      %v1666 = vld [vmem:[%s307 + $0x90] sm:$0xff]
      %v1667 = vld [vmem:[%s307 + $0x98] sm:$0xff]
      %v1668 = vld [vmem:[%s307 + $0xa0] sm:$0xff]
      %v1669 = vld [vmem:[%s307 + $0xa8] sm:$0xff]
      %v1670 = vld [vmem:[%s307 + $0xb0] sm:$0xff]
      %v1671 = vld [vmem:[%s307 + $0xb8] sm:$0xff]
      %v1672 = vld [vmem:[%s307 + $0xc0] sm:$0xff]
      %v1673 = vld [vmem:[%s307 + $0xc8] sm:$0xff]
      %v1674 = vld [vmem:[%s307 + $0xd0] sm:$0xff]
      %v1675 = vld [vmem:[%s307 + $0xd8] sm:$0xff]
      %v1676 = vld [vmem:[%s307 + $0xe0] sm:$0xff]
      %v1677 = vld [vmem:[%s307 + $0xe8] sm:$0xff]
      %v1678 = vld [vmem:[%s307 + $0xf0] sm:$0xff]
      %v1679 = vld [vmem:[%s307 + $0xf8] sm:$0xff]
      %v1688 = vcombine.low %v1656, %v1657
      %v1689 = vcombine.low %v1658, %v1659
      %v1690 = vcombine.low %v1660, %v1661
      %v1691 = vcombine.low %v1662, %v1663
      %1696 = vmatprep.subr.mxu0 0.0
      %1697 = vmatpush1.msra.mxu0 %v1664
      %1698 = vmatprep.subr.mxu0 0.0
      %1699 = vmatpush1.msra.mxu0 %v1665
      %1700 = vmatprep.subr.mxu0 0.0
      %1701 = vmatpush1.msra.mxu0 %v1666
      %1702 = vmatprep.subr.mxu0 0.0
      %1703 = vmatpush1.msra.mxu0 %v1667
      %1704 = vmatprep.subr.mxu0 0.0
      %1705 = vmatpush1.msra.mxu0 %v1668
      %1706 = vmatprep.subr.mxu0 0.0
      %1707 = vmatpush1.msra.mxu0 %v1669
      %1708 = vmatprep.subr.mxu0 0.0
      %1709 = vmatpush1.msra.mxu0 %v1670
      %1710 = vmatprep.subr.mxu0 0.0
      %1711 = vmatpush1.msra.mxu0 %v1671
      %1712 = vmatprep.subr.mxu0 0.0
      %1713 = vmatpush1.msra.mxu0 %v1672
      %1714 = vmatprep.subr.mxu0 0.0
      %1715 = vmatpush1.msra.mxu0 %v1673
      %1716 = vmatprep.subr.mxu0 0.0
      %1717 = vmatpush1.msra.mxu0 %v1674
      %1718 = vmatprep.subr.mxu0 0.0
      %1719 = vmatpush1.msra.mxu0 %v1675
      %1720 = vmatprep.subr.mxu0 0.0
      %1721 = vmatpush1.msra.mxu0 %v1676
      %1722 = vmatprep.subr.mxu0 0.0
      %1723 = vmatpush1.msra.mxu0 %v1677
      %1724 = vmatprep.subr.mxu0 0.0
      %1725 = vmatpush1.msra.mxu0 %v1678
      %1726 = vmatprep.subr.mxu0 0.0
      %1727 = vmatpush1.msra.mxu0 %v1679
      %1728 = vmatprep.subr.mxu0 0.0
      %1729 = vmatpush1.msra.mxu0 0.0
      %1730 = vmatprep.subr.mxu0 0.0
      %1731 = vmatpush1.msra.mxu0 0.0
      %1732 = vmatprep.subr.mxu0 0.0
      %1733 = vmatpush1.msra.mxu0 0.0
      %1734 = vmatprep.subr.mxu0 0.0
      %1735 = vmatpush1.msra.mxu0 0.0
      %1736 = vmatprep.subr.mxu0 0.0
      %1737 = vmatpush1.msra.mxu0 0.0
      %1738 = vmatprep.subr.mxu0 0.0
      %1739 = vmatpush1.msra.mxu0 0.0
      %1740 = vmatprep.subr.mxu0 0.0
      %1741 = vmatpush1.msra.mxu0 0.0
      %1742 = vmatprep.subr.mxu0 0.0
      %1743 = vmatpush1.msra.mxu0 0.0
      %1744 = vmatprep.subr.mxu0 0.0
      %1745 = vmatpush1.msra.mxu0 0.0
      %1746 = vmatprep.subr.mxu0 0.0
      %1747 = vmatpush1.msra.mxu0 0.0
      %1748 = vmatprep.subr.mxu0 0.0
      %1749 = vmatpush1.msra.mxu0 0.0
      %1750 = vmatprep.subr.mxu0 0.0
      %1751 = vmatpush1.msra.mxu0 0.0
      %1752 = vmatprep.subr.mxu0 0.0
      %1753 = vmatpush1.msra.mxu0 0.0
      %1754 = vmatprep.subr.mxu0 0.0
      %1755 = vmatpush1.msra.mxu0 0.0
      %1756 = vmatprep.subr.mxu0 0.0
      %1757 = vmatpush1.msra.mxu0 0.0
      %1758 = vmatprep.subr.mxu0 0.0
      %1759 = vmatpush1.msra.mxu0 0.0
      %1760 = vmatprep.mubr.f32.mxu0 0.0
      %1761 = vmatmul.mubr.f32.gmra.mrb[0].mxu0 %v1688
      %v1762 = vpop.f32.mrb[0].mxu0
      %v1763 = vadd.f32 0.0, %v1762
      %v1764 = vpop.f32.mrb[0].mxu0
      %1765 = vmatprep.mubr.f32.mxu0 0.0
      %1766 = vmatmul.mubr.f32.gmra.mrb[0].mxu0 %v1689
      %v1767 = vpop.f32.mrb[0].mxu0
      %v1768 = vadd.f32 0.0, %v1767
      %v1769 = vpop.f32.mrb[0].mxu0
      %1770 = vmatprep.mubr.f32.mxu0 0.0
      %1771 = vmatmul.mubr.f32.gmra.mrb[0].mxu0 %v1690
      %v1772 = vpop.f32.mrb[0].mxu0
      %v1773 = vadd.f32 0.0, %v1772
      %v1774 = vpop.f32.mrb[0].mxu0
      %1775 = vmatprep.mubr.f32.mxu0 0.0
      %1776 = vmatmul.mubr.f32.gmra.mrb[0].mxu0 %v1691
      %v1777 = vpop.f32.mrb[0].mxu0
      %v1778 = vadd.f32 0.0, %v1777
      %v1779 = vpop.f32.mrb[0].mxu0
      %1780 = vdwg.mxu0
      %v1789 = vcombine.low %v1632, %v1633
      %v1790 = vcombine.low %v1634, %v1635
      %v1791 = vcombine.low %v1636, %v1637
      %v1792 = vcombine.low %v1638, %v1639
      %1797 = vmatprep.subr.mxu0 0.0
      %1798 = vmatpush1.msra.mxu0 %v1640
      %1799 = vmatprep.subr.mxu0 0.0
      %1800 = vmatpush1.msra.mxu0 %v1641
      %1801 = vmatprep.subr.mxu0 0.0
      %1802 = vmatpush1.msra.mxu0 %v1642
      %1803 = vmatprep.subr.mxu0 0.0
      %1804 = vmatpush1.msra.mxu0 %v1643
      %1805 = vmatprep.subr.mxu0 0.0
      %1806 = vmatpush1.msra.mxu0 %v1644
      %1807 = vmatprep.subr.mxu0 0.0
      %1808 = vmatpush1.msra.mxu0 %v1645
      %1809 = vmatprep.subr.mxu0 0.0
      %1810 = vmatpush1.msra.mxu0 %v1646
      %1811 = vmatprep.subr.mxu0 0.0
      %1812 = vmatpush1.msra.mxu0 %v1647
      %1813 = vmatprep.subr.mxu0 0.0
      %1814 = vmatpush1.msra.mxu0 %v1648
      %1815 = vmatprep.subr.mxu0 0.0
      %1816 = vmatpush1.msra.mxu0 %v1649
      %1817 = vmatprep.subr.mxu0 0.0
      %1818 = vmatpush1.msra.mxu0 %v1650
      %1819 = vmatprep.subr.mxu0 0.0
      %1820 = vmatpush1.msra.mxu0 %v1651
      %1821 = vmatprep.subr.mxu0 0.0
      %1822 = vmatpush1.msra.mxu0 %v1652
      %1823 = vmatprep.subr.mxu0 0.0
      %1824 = vmatpush1.msra.mxu0 %v1653
      %1825 = vmatprep.subr.mxu0 0.0
      %1826 = vmatpush1.msra.mxu0 %v1654
      %1827 = vmatprep.subr.mxu0 0.0
      %1828 = vmatpush1.msra.mxu0 %v1655
      %1829 = vmatprep.subr.mxu0 0.0
      %1830 = vmatpush1.msra.mxu0 0.0
      %1831 = vmatprep.subr.mxu0 0.0
      %1832 = vmatpush1.msra.mxu0 0.0
      %1833 = vmatprep.subr.mxu0 0.0
      %1834 = vmatpush1.msra.mxu0 0.0
      %1835 = vmatprep.subr.mxu0 0.0
      %1836 = vmatpush1.msra.mxu0 0.0
      %1837 = vmatprep.subr.mxu0 0.0
      %1838 = vmatpush1.msra.mxu0 0.0
      %1839 = vmatprep.subr.mxu0 0.0
      %1840 = vmatpush1.msra.mxu0 0.0
      %1841 = vmatprep.subr.mxu0 0.0
      %1842 = vmatpush1.msra.mxu0 0.0
      %1843 = vmatprep.subr.mxu0 0.0
      %1844 = vmatpush1.msra.mxu0 0.0
      %1845 = vmatprep.subr.mxu0 0.0
      %1846 = vmatpush1.msra.mxu0 0.0
      %1847 = vmatprep.subr.mxu0 0.0
      %1848 = vmatpush1.msra.mxu0 0.0
      %1849 = vmatprep.subr.mxu0 0.0
      %1850 = vmatpush1.msra.mxu0 0.0
      %1851 = vmatprep.subr.mxu0 0.0
      %1852 = vmatpush1.msra.mxu0 0.0
      %1853 = vmatprep.subr.mxu0 0.0
      %1854 = vmatpush1.msra.mxu0 0.0
      %1855 = vmatprep.subr.mxu0 0.0
      %1856 = vmatpush1.msra.mxu0 0.0
      %1857 = vmatprep.subr.mxu0 0.0
      %1858 = vmatpush1.msra.mxu0 0.0
      %1859 = vmatprep.subr.mxu0 0.0
      %1860 = vmatpush1.msra.mxu0 0.0
      %1861 = vmatprep.mubr.f32.mxu0 0.0
      %1862 = vmatmul.mubr.f32.gmra.mrb[0].mxu0 %v1789
      %v1863 = vpop.f32.mrb[0].mxu0
      %v1864 = vadd.f32 %v1763, %v1863
      %v1865 = vpop.f32.mrb[0].mxu0
      %1866 = vmatprep.mubr.f32.mxu0 0.0
      %1867 = vmatmul.mubr.f32.gmra.mrb[0].mxu0 %v1790
      %v1868 = vpop.f32.mrb[0].mxu0
      %v1869 = vadd.f32 %v1768, %v1868
      %v1870 = vpop.f32.mrb[0].mxu0
      %1871 = vmatprep.mubr.f32.mxu0 0.0
      %1872 = vmatmul.mubr.f32.gmra.mrb[0].mxu0 %v1791
      %v1873 = vpop.f32.mrb[0].mxu0
      %v1874 = vadd.f32 %v1773, %v1873
      %v1875 = vpop.f32.mrb[0].mxu0
      %1876 = vmatprep.mubr.f32.mxu0 0.0
      %1877 = vmatmul.mubr.f32.gmra.mrb[0].mxu0 %v1792
      %v1878 = vpop.f32.mrb[0].mxu0
      %v1879 = vadd.f32 %v1778, %v1878
      %v1880 = vpop.f32.mrb[0].mxu0
      %1881 = vdwg.mxu0
      %v1882 = vld [vmem:[#allocation2 + $0x2] sm:$0xf]
      %v1883 = vld [vmem:[#allocation2 + $0xa] sm:$0xf]
      %v1884 = vld [vmem:[#allocation2 + $0x12] sm:$0xf]
      %v1885 = vld [vmem:[#allocation2 + $0x1a] sm:$0xf]
      %v1886 = vld [vmem:[#allocation2 + $0x32] sm:$0xf]
      %v1887 = vld [vmem:[#allocation2 + $0x3a] sm:$0xf]
      %v1888 = vld [vmem:[#allocation2 + $0x42] sm:$0xf]
      %v1889 = vld [vmem:[#allocation2 + $0x4a] sm:$0xf]
      %v1890 = vld [vmem:[%s307 + $0x100] sm:$0xff]
      %v1891 = vld [vmem:[%s307 + $0x108] sm:$0xff]
      %v1892 = vld [vmem:[%s307 + $0x110] sm:$0xff]
      %v1893 = vld [vmem:[%s307 + $0x118] sm:$0xff]
      %v1894 = vld [vmem:[%s307 + $0x120] sm:$0xff]
      %v1895 = vld [vmem:[%s307 + $0x128] sm:$0xff]
      %v1896 = vld [vmem:[%s307 + $0x130] sm:$0xff]
      %v1897 = vld [vmem:[%s307 + $0x138] sm:$0xff]
      %v1898 = vld [vmem:[%s307 + $0x140] sm:$0xff]
      %v1899 = vld [vmem:[%s307 + $0x148] sm:$0xff]
      %v1900 = vld [vmem:[%s307 + $0x150] sm:$0xff]
      %v1901 = vld [vmem:[%s307 + $0x158] sm:$0xff]
      %v1902 = vld [vmem:[%s307 + $0x160] sm:$0xff]
      %v1903 = vld [vmem:[%s307 + $0x168] sm:$0xff]
      %v1904 = vld [vmem:[%s307 + $0x170] sm:$0xff]
      %v1905 = vld [vmem:[%s307 + $0x178] sm:$0xff]
      %v1914 = vcombine.low %v1882, %v1883
      %v1915 = vcombine.low %v1884, %v1885
      %v1916 = vcombine.low %v1886, %v1887
      %v1917 = vcombine.low %v1888, %v1889
      %1922 = vmatprep.subr.mxu0 0.0
      %1923 = vmatpush1.msra.mxu0 %v1890
      %1924 = vmatprep.subr.mxu0 0.0
      %1925 = vmatpush1.msra.mxu0 %v1891
      %1926 = vmatprep.subr.mxu0 0.0
      %1927 = vmatpush1.msra.mxu0 %v1892
      %1928 = vmatprep.subr.mxu0 0.0
      %1929 = vmatpush1.msra.mxu0 %v1893
      %1930 = vmatprep.subr.mxu0 0.0
      %1931 = vmatpush1.msra.mxu0 %v1894
      %1932 = vmatprep.subr.mxu0 0.0
      %1933 = vmatpush1.msra.mxu0 %v1895
      %1934 = vmatprep.subr.mxu0 0.0
      %1935 = vmatpush1.msra.mxu0 %v1896
      %1936 = vmatprep.subr.mxu0 0.0
      %1937 = vmatpush1.msra.mxu0 %v1897
      %1938 = vmatprep.subr.mxu0 0.0
      %1939 = vmatpush1.msra.mxu0 %v1898
      %1940 = vmatprep.subr.mxu0 0.0
      %1941 = vmatpush1.msra.mxu0 %v1899
      %1942 = vmatprep.subr.mxu0 0.0
      %1943 = vmatpush1.msra.mxu0 %v1900
      %1944 = vmatprep.subr.mxu0 0.0
      %1945 = vmatpush1.msra.mxu0 %v1901
      %1946 = vmatprep.subr.mxu0 0.0
      %1947 = vmatpush1.msra.mxu0 %v1902
      %1948 = vmatprep.subr.mxu0 0.0
      %1949 = vmatpush1.msra.mxu0 %v1903
      %1950 = vmatprep.subr.mxu0 0.0
      %1951 = vmatpush1.msra.mxu0 %v1904
      %1952 = vmatprep.subr.mxu0 0.0
      %1953 = vmatpush1.msra.mxu0 %v1905
      %1954 = vmatprep.subr.mxu0 0.0
      %1955 = vmatpush1.msra.mxu0 0.0
      %1956 = vmatprep.subr.mxu0 0.0
      %1957 = vmatpush1.msra.mxu0 0.0
      %1958 = vmatprep.subr.mxu0 0.0
      %1959 = vmatpush1.msra.mxu0 0.0
      %1960 = vmatprep.subr.mxu0 0.0
      %1961 = vmatpush1.msra.mxu0 0.0
      %1962 = vmatprep.subr.mxu0 0.0
      %1963 = vmatpush1.msra.mxu0 0.0
      %1964 = vmatprep.subr.mxu0 0.0
      %1965 = vmatpush1.msra.mxu0 0.0
      %1966 = vmatprep.subr.mxu0 0.0
      %1967 = vmatpush1.msra.mxu0 0.0
      %1968 = vmatprep.subr.mxu0 0.0
      %1969 = vmatpush1.msra.mxu0 0.0
      %1970 = vmatprep.subr.mxu0 0.0
      %1971 = vmatpush1.msra.mxu0 0.0
      %1972 = vmatprep.subr.mxu0 0.0
      %1973 = vmatpush1.msra.mxu0 0.0
      %1974 = vmatprep.subr.mxu0 0.0
      %1975 = vmatpush1.msra.mxu0 0.0
      %1976 = vmatprep.subr.mxu0 0.0
      %1977 = vmatpush1.msra.mxu0 0.0
      %1978 = vmatprep.subr.mxu0 0.0
      %1979 = vmatpush1.msra.mxu0 0.0
      %1980 = vmatprep.subr.mxu0 0.0
      %1981 = vmatpush1.msra.mxu0 0.0
      %1982 = vmatprep.subr.mxu0 0.0
      %1983 = vmatpush1.msra.mxu0 0.0
      %1984 = vmatprep.subr.mxu0 0.0
      %1985 = vmatpush1.msra.mxu0 0.0
      %1986 = vmatprep.mubr.f32.mxu0 0.0
      %1987 = vmatmul.mubr.f32.gmra.mrb[0].mxu0 %v1914
      %v1988 = vpop.f32.mrb[0].mxu0
      %v1989 = vadd.f32 0.0, %v1988
      %v1990 = vpop.f32.mrb[0].mxu0
      %1991 = vmatprep.mubr.f32.mxu0 0.0
      %1992 = vmatmul.mubr.f32.gmra.mrb[0].mxu0 %v1915
      %v1993 = vpop.f32.mrb[0].mxu0
      %v1994 = vadd.f32 0.0, %v1993
      %v1995 = vpop.f32.mrb[0].mxu0
      %1996 = vmatprep.mubr.f32.mxu0 0.0
      %1997 = vmatmul.mubr.f32.gmra.mrb[0].mxu0 %v1916
      %v1998 = vpop.f32.mrb[0].mxu0
      %v1999 = vadd.f32 0.0, %v1998
      %v2000 = vpop.f32.mrb[0].mxu0
      %2001 = vmatprep.mubr.f32.mxu0 0.0
      %2002 = vmatmul.mubr.f32.gmra.mrb[0].mxu0 %v1917
      %v2003 = vpop.f32.mrb[0].mxu0
      %v2004 = vadd.f32 0.0, %v2003
      %v2005 = vpop.f32.mrb[0].mxu0
      %2006 = vdwg.mxu0
      %v2007 = vadd.f32 %v1864, %v1989
      %v2008 = vadd.f32 %v1869, %v1994
      %v2009 = vadd.f32 %v1874, %v1999
      %v2010 = vadd.f32 %v1879, %v2004
      %v2011 = vld [vmem:[%s391] sm:$0xf]
      %v2012 = vld [vmem:[%s391 + $0x8] sm:$0xf]
      %v2013 = vld [vmem:[%s391 + $0x10] sm:$0xf]
      %v2014 = vld [vmem:[%s391 + $0x18] sm:$0xf]
      %v2015 = vld [vmem:[%s391 + $0x30] sm:$0xf]
      %v2016 = vld [vmem:[%s391 + $0x38] sm:$0xf]
      %v2017 = vld [vmem:[%s391 + $0x40] sm:$0xf]
      %v2018 = vld [vmem:[%s391 + $0x48] sm:$0xf]
      %v2019 = vld [vmem:[%s307 + $0x180] sm:$0xff]
      %v2020 = vld [vmem:[%s307 + $0x188] sm:$0xff]
      %v2021 = vld [vmem:[%s307 + $0x190] sm:$0xff]
      %v2022 = vld [vmem:[%s307 + $0x198] sm:$0xff]
      %v2023 = vld [vmem:[%s307 + $0x1a0] sm:$0xff]
      %v2024 = vld [vmem:[%s307 + $0x1a8] sm:$0xff]
      %v2025 = vld [vmem:[%s307 + $0x1b0] sm:$0xff]
      %v2026 = vld [vmem:[%s307 + $0x1b8] sm:$0xff]
      %v2027 = vld [vmem:[%s307 + $0x1c0] sm:$0xff]
      %v2028 = vld [vmem:[%s307 + $0x1c8] sm:$0xff]
      %v2029 = vld [vmem:[%s307 + $0x1d0] sm:$0xff]
      %v2030 = vld [vmem:[%s307 + $0x1d8] sm:$0xff]
      %v2031 = vld [vmem:[%s307 + $0x1e0] sm:$0xff]
      %v2032 = vld [vmem:[%s307 + $0x1e8] sm:$0xff]
      %v2033 = vld [vmem:[%s307 + $0x1f0] sm:$0xff]
      %v2034 = vld [vmem:[%s307 + $0x1f8] sm:$0xff]
      %v2043 = vcombine.low %v2011, %v2012
      %v2044 = vcombine.low %v2013, %v2014
      %v2045 = vcombine.low %v2015, %v2016
      %v2046 = vcombine.low %v2017, %v2018
      %2051 = vmatprep.subr.mxu0 0.0
      %2052 = vmatpush1.msra.mxu0 %v2019
      %2053 = vmatprep.subr.mxu0 0.0
      %2054 = vmatpush1.msra.mxu0 %v2020
      %2055 = vmatprep.subr.mxu0 0.0
      %2056 = vmatpush1.msra.mxu0 %v2021
      %2057 = vmatprep.subr.mxu0 0.0
      %2058 = vmatpush1.msra.mxu0 %v2022
      %2059 = vmatprep.subr.mxu0 0.0
      %2060 = vmatpush1.msra.mxu0 %v2023
      %2061 = vmatprep.subr.mxu0 0.0
      %2062 = vmatpush1.msra.mxu0 %v2024
      %2063 = vmatprep.subr.mxu0 0.0
      %2064 = vmatpush1.msra.mxu0 %v2025
      %2065 = vmatprep.subr.mxu0 0.0
      %2066 = vmatpush1.msra.mxu0 %v2026
      %2067 = vmatprep.subr.mxu0 0.0
      %2068 = vmatpush1.msra.mxu0 %v2027
      %2069 = vmatprep.subr.mxu0 0.0
      %2070 = vmatpush1.msra.mxu0 %v2028
      %2071 = vmatprep.subr.mxu0 0.0
      %2072 = vmatpush1.msra.mxu0 %v2029
      %2073 = vmatprep.subr.mxu0 0.0
      %2074 = vmatpush1.msra.mxu0 %v2030
      %2075 = vmatprep.subr.mxu0 0.0
      %2076 = vmatpush1.msra.mxu0 %v2031
      %2077 = vmatprep.subr.mxu0 0.0
      %2078 = vmatpush1.msra.mxu0 %v2032
      %2079 = vmatprep.subr.mxu0 0.0
      %2080 = vmatpush1.msra.mxu0 %v2033
      %2081 = vmatprep.subr.mxu0 0.0
      %2082 = vmatpush1.msra.mxu0 %v2034
      %2083 = vmatprep.subr.mxu0 0.0
      %2084 = vmatpush1.msra.mxu0 0.0
      %2085 = vmatprep.subr.mxu0 0.0
      %2086 = vmatpush1.msra.mxu0 0.0
      %2087 = vmatprep.subr.mxu0 0.0
      %2088 = vmatpush1.msra.mxu0 0.0
      %2089 = vmatprep.subr.mxu0 0.0
      %2090 = vmatpush1.msra.mxu0 0.0
      %2091 = vmatprep.subr.mxu0 0.0
      %2092 = vmatpush1.msra.mxu0 0.0
      %2093 = vmatprep.subr.mxu0 0.0
      %2094 = vmatpush1.msra.mxu0 0.0
      %2095 = vmatprep.subr.mxu0 0.0
      %2096 = vmatpush1.msra.mxu0 0.0
      %2097 = vmatprep.subr.mxu0 0.0
      %2098 = vmatpush1.msra.mxu0 0.0
      %2099 = vmatprep.subr.mxu0 0.0
      %2100 = vmatpush1.msra.mxu0 0.0
      %2101 = vmatprep.subr.mxu0 0.0
      %2102 = vmatpush1.msra.mxu0 0.0
      %2103 = vmatprep.subr.mxu0 0.0
      %2104 = vmatpush1.msra.mxu0 0.0
      %2105 = vmatprep.subr.mxu0 0.0
      %2106 = vmatpush1.msra.mxu0 0.0
      %2107 = vmatprep.subr.mxu0 0.0
      %2108 = vmatpush1.msra.mxu0 0.0
      %2109 = vmatprep.subr.mxu0 0.0
      %2110 = vmatpush1.msra.mxu0 0.0
      %2111 = vmatprep.subr.mxu0 0.0
      %2112 = vmatpush1.msra.mxu0 0.0
      %2113 = vmatprep.subr.mxu0 0.0
      %2114 = vmatpush1.msra.mxu0 0.0
      %2115 = vmatprep.mubr.f32.mxu0 0.0
      %2116 = vmatmul.mubr.f32.gmra.mrb[0].mxu0 %v2043
      %v2117 = vpop.f32.mrb[0].mxu0
      %v2118 = vadd.f32 0.0, %v2117
      %v2119 = vpop.f32.mrb[0].mxu0
      %2120 = vmatprep.mubr.f32.mxu0 0.0
      %2121 = vmatmul.mubr.f32.gmra.mrb[0].mxu0 %v2044
      %v2122 = vpop.f32.mrb[0].mxu0
      %v2123 = vadd.f32 0.0, %v2122
      %v2124 = vpop.f32.mrb[0].mxu0
      %2125 = vmatprep.mubr.f32.mxu0 0.0
      %2126 = vmatmul.mubr.f32.gmra.mrb[0].mxu0 %v2045
      %v2127 = vpop.f32.mrb[0].mxu0
      %v2128 = vadd.f32 0.0, %v2127
      %v2129 = vpop.f32.mrb[0].mxu0
      %2130 = vmatprep.mubr.f32.mxu0 0.0
      %2131 = vmatmul.mubr.f32.gmra.mrb[0].mxu0 %v2046
      %v2132 = vpop.f32.mrb[0].mxu0
      %v2133 = vadd.f32 0.0, %v2132
      %v2134 = vpop.f32.mrb[0].mxu0
      %2135 = vdwg.mxu0
      %v2136 = vadd.f32 %v2007, %v2118
      %v2137 = vadd.f32 %v2008, %v2123
      %v2138 = vadd.f32 %v2009, %v2128
      %v2139 = vadd.f32 %v2010, %v2133
      %v2140 = vld [vmem:[%s391 + $0x1] sm:$0xf]
      %v2141 = vld [vmem:[%s391 + $0x9] sm:$0xf]
      %v2142 = vld [vmem:[%s391 + $0x11] sm:$0xf]
      %v2143 = vld [vmem:[%s391 + $0x19] sm:$0xf]
      %v2144 = vld [vmem:[%s391 + $0x31] sm:$0xf]
      %v2145 = vld [vmem:[%s391 + $0x39] sm:$0xf]
      %v2146 = vld [vmem:[%s391 + $0x41] sm:$0xf]
      %v2147 = vld [vmem:[%s391 + $0x49] sm:$0xf]
      %v2148 = vld [vmem:[%s307 + $0x200] sm:$0xff]
      %v2149 = vld [vmem:[%s307 + $0x208] sm:$0xff]
      %v2150 = vld [vmem:[%s307 + $0x210] sm:$0xff]
      %v2151 = vld [vmem:[%s307 + $0x218] sm:$0xff]
      %v2152 = vld [vmem:[%s307 + $0x220] sm:$0xff]
      %v2153 = vld [vmem:[%s307 + $0x228] sm:$0xff]
      %v2154 = vld [vmem:[%s307 + $0x230] sm:$0xff]
      %v2155 = vld [vmem:[%s307 + $0x238] sm:$0xff]
      %v2156 = vld [vmem:[%s307 + $0x240] sm:$0xff]
      %v2157 = vld [vmem:[%s307 + $0x248] sm:$0xff]
      %v2158 = vld [vmem:[%s307 + $0x250] sm:$0xff]
      %v2159 = vld [vmem:[%s307 + $0x258] sm:$0xff]
      %v2160 = vld [vmem:[%s307 + $0x260] sm:$0xff]
      %v2161 = vld [vmem:[%s307 + $0x268] sm:$0xff]
      %v2162 = vld [vmem:[%s307 + $0x270] sm:$0xff]
      %v2163 = vld [vmem:[%s307 + $0x278] sm:$0xff]
      %v2172 = vcombine.low %v2140, %v2141
      %v2173 = vcombine.low %v2142, %v2143
      %v2174 = vcombine.low %v2144, %v2145
      %v2175 = vcombine.low %v2146, %v2147
      %2180 = vmatprep.subr.mxu0 0.0
      %2181 = vmatpush1.msra.mxu0 %v2148
      %2182 = vmatprep.subr.mxu0 0.0
      %2183 = vmatpush1.msra.mxu0 %v2149
      %2184 = vmatprep.subr.mxu0 0.0
      %2185 = vmatpush1.msra.mxu0 %v2150
      %2186 = vmatprep.subr.mxu0 0.0
      %2187 = vmatpush1.msra.mxu0 %v2151
      %2188 = vmatprep.subr.mxu0 0.0
      %2189 = vmatpush1.msra.mxu0 %v2152
      %2190 = vmatprep.subr.mxu0 0.0
      %2191 = vmatpush1.msra.mxu0 %v2153
      %2192 = vmatprep.subr.mxu0 0.0
      %2193 = vmatpush1.msra.mxu0 %v2154
      %2194 = vmatprep.subr.mxu0 0.0
      %2195 = vmatpush1.msra.mxu0 %v2155
      %2196 = vmatprep.subr.mxu0 0.0
      %2197 = vmatpush1.msra.mxu0 %v2156
      %2198 = vmatprep.subr.mxu0 0.0
      %2199 = vmatpush1.msra.mxu0 %v2157
      %2200 = vmatprep.subr.mxu0 0.0
      %2201 = vmatpush1.msra.mxu0 %v2158
      %2202 = vmatprep.subr.mxu0 0.0
      %2203 = vmatpush1.msra.mxu0 %v2159
      %2204 = vmatprep.subr.mxu0 0.0
      %2205 = vmatpush1.msra.mxu0 %v2160
      %2206 = vmatprep.subr.mxu0 0.0
      %2207 = vmatpush1.msra.mxu0 %v2161
      %2208 = vmatprep.subr.mxu0 0.0
      %2209 = vmatpush1.msra.mxu0 %v2162
      %2210 = vmatprep.subr.mxu0 0.0
      %2211 = vmatpush1.msra.mxu0 %v2163
      %2212 = vmatprep.subr.mxu0 0.0
      %2213 = vmatpush1.msra.mxu0 0.0
      %2214 = vmatprep.subr.mxu0 0.0
      %2215 = vmatpush1.msra.mxu0 0.0
      %2216 = vmatprep.subr.mxu0 0.0
      %2217 = vmatpush1.msra.mxu0 0.0
      %2218 = vmatprep.subr.mxu0 0.0
      %2219 = vmatpush1.msra.mxu0 0.0
      %2220 = vmatprep.subr.mxu0 0.0
      %2221 = vmatpush1.msra.mxu0 0.0
      %2222 = vmatprep.subr.mxu0 0.0
      %2223 = vmatpush1.msra.mxu0 0.0
      %2224 = vmatprep.subr.mxu0 0.0
      %2225 = vmatpush1.msra.mxu0 0.0
      %2226 = vmatprep.subr.mxu0 0.0
      %2227 = vmatpush1.msra.mxu0 0.0
      %2228 = vmatprep.subr.mxu0 0.0
      %2229 = vmatpush1.msra.mxu0 0.0
      %2230 = vmatprep.subr.mxu0 0.0
      %2231 = vmatpush1.msra.mxu0 0.0
      %2232 = vmatprep.subr.mxu0 0.0
      %2233 = vmatpush1.msra.mxu0 0.0
      %2234 = vmatprep.subr.mxu0 0.0
      %2235 = vmatpush1.msra.mxu0 0.0
      %2236 = vmatprep.subr.mxu0 0.0
      %2237 = vmatpush1.msra.mxu0 0.0
      %2238 = vmatprep.subr.mxu0 0.0
      %2239 = vmatpush1.msra.mxu0 0.0
      %2240 = vmatprep.subr.mxu0 0.0
      %2241 = vmatpush1.msra.mxu0 0.0
      %2242 = vmatprep.subr.mxu0 0.0
      %2243 = vmatpush1.msra.mxu0 0.0
      %2244 = vmatprep.mubr.f32.mxu0 0.0
      %2245 = vmatmul.mubr.f32.gmra.mrb[0].mxu0 %v2172
      %v2246 = vpop.f32.mrb[0].mxu0
      %v2247 = vadd.f32 0.0, %v2246
      %v2248 = vpop.f32.mrb[0].mxu0
      %2249 = vmatprep.mubr.f32.mxu0 0.0
      %2250 = vmatmul.mubr.f32.gmra.mrb[0].mxu0 %v2173
      %v2251 = vpop.f32.mrb[0].mxu0
      %v2252 = vadd.f32 0.0, %v2251
      %v2253 = vpop.f32.mrb[0].mxu0
      %2254 = vmatprep.mubr.f32.mxu0 0.0
      %2255 = vmatmul.mubr.f32.gmra.mrb[0].mxu0 %v2174
      %v2256 = vpop.f32.mrb[0].mxu0
      %v2257 = vadd.f32 0.0, %v2256
      %v2258 = vpop.f32.mrb[0].mxu0
      %2259 = vmatprep.mubr.f32.mxu0 0.0
      %2260 = vmatmul.mubr.f32.gmra.mrb[0].mxu0 %v2175
      %v2261 = vpop.f32.mrb[0].mxu0
      %v2262 = vadd.f32 0.0, %v2261
      %v2263 = vpop.f32.mrb[0].mxu0
      %2264 = vdwg.mxu0
      %v2265 = vadd.f32 %v2136, %v2247
      %v2266 = vadd.f32 %v2137, %v2252
      %v2267 = vadd.f32 %v2138, %v2257
      %v2268 = vadd.f32 %v2139, %v2262
      %v2269 = vld [vmem:[%s391 + $0x2] sm:$0xf]
      %v2270 = vld [vmem:[%s391 + $0xa] sm:$0xf]
      %v2271 = vld [vmem:[%s391 + $0x12] sm:$0xf]
      %v2272 = vld [vmem:[%s391 + $0x1a] sm:$0xf]
      %v2273 = vld [vmem:[%s391 + $0x32] sm:$0xf]
      %v2274 = vld [vmem:[%s391 + $0x3a] sm:$0xf]
      %v2275 = vld [vmem:[%s391 + $0x42] sm:$0xf]
      %v2276 = vld [vmem:[%s391 + $0x4a] sm:$0xf]
      %v2277 = vld [vmem:[%s307 + $0x280] sm:$0xff]
      %v2278 = vld [vmem:[%s307 + $0x288] sm:$0xff]
      %v2279 = vld [vmem:[%s307 + $0x290] sm:$0xff]
      %v2280 = vld [vmem:[%s307 + $0x298] sm:$0xff]
      %v2281 = vld [vmem:[%s307 + $0x2a0] sm:$0xff]
      %v2282 = vld [vmem:[%s307 + $0x2a8] sm:$0xff]
      %v2283 = vld [vmem:[%s307 + $0x2b0] sm:$0xff]
      %v2284 = vld [vmem:[%s307 + $0x2b8] sm:$0xff]
      %v2285 = vld [vmem:[%s307 + $0x2c0] sm:$0xff]
      %v2286 = vld [vmem:[%s307 + $0x2c8] sm:$0xff]
      %v2287 = vld [vmem:[%s307 + $0x2d0] sm:$0xff]
      %v2288 = vld [vmem:[%s307 + $0x2d8] sm:$0xff]
      %v2289 = vld [vmem:[%s307 + $0x2e0] sm:$0xff]
      %v2290 = vld [vmem:[%s307 + $0x2e8] sm:$0xff]
      %v2291 = vld [vmem:[%s307 + $0x2f0] sm:$0xff]
      %v2292 = vld [vmem:[%s307 + $0x2f8] sm:$0xff]
      %v2301 = vcombine.low %v2269, %v2270
      %v2302 = vcombine.low %v2271, %v2272
      %v2303 = vcombine.low %v2273, %v2274
      %v2304 = vcombine.low %v2275, %v2276
      %2309 = vmatprep.subr.mxu0 0.0
      %2310 = vmatpush1.msra.mxu0 %v2277
      %2311 = vmatprep.subr.mxu0 0.0
      %2312 = vmatpush1.msra.mxu0 %v2278
      %2313 = vmatprep.subr.mxu0 0.0
      %2314 = vmatpush1.msra.mxu0 %v2279
      %2315 = vmatprep.subr.mxu0 0.0
      %2316 = vmatpush1.msra.mxu0 %v2280
      %2317 = vmatprep.subr.mxu0 0.0
      %2318 = vmatpush1.msra.mxu0 %v2281
      %2319 = vmatprep.subr.mxu0 0.0
      %2320 = vmatpush1.msra.mxu0 %v2282
      %2321 = vmatprep.subr.mxu0 0.0
      %2322 = vmatpush1.msra.mxu0 %v2283
      %2323 = vmatprep.subr.mxu0 0.0
      %2324 = vmatpush1.msra.mxu0 %v2284
      %2325 = vmatprep.subr.mxu0 0.0
      %2326 = vmatpush1.msra.mxu0 %v2285
      %2327 = vmatprep.subr.mxu0 0.0
      %2328 = vmatpush1.msra.mxu0 %v2286
      %2329 = vmatprep.subr.mxu0 0.0
      %2330 = vmatpush1.msra.mxu0 %v2287
      %2331 = vmatprep.subr.mxu0 0.0
      %2332 = vmatpush1.msra.mxu0 %v2288
      %2333 = vmatprep.subr.mxu0 0.0
      %2334 = vmatpush1.msra.mxu0 %v2289
      %2335 = vmatprep.subr.mxu0 0.0
      %2336 = vmatpush1.msra.mxu0 %v2290
      %2337 = vmatprep.subr.mxu0 0.0
      %2338 = vmatpush1.msra.mxu0 %v2291
      %2339 = vmatprep.subr.mxu0 0.0
      %2340 = vmatpush1.msra.mxu0 %v2292
      %2341 = vmatprep.subr.mxu0 0.0
      %2342 = vmatpush1.msra.mxu0 0.0
      %2343 = vmatprep.subr.mxu0 0.0
      %2344 = vmatpush1.msra.mxu0 0.0
      %2345 = vmatprep.subr.mxu0 0.0
      %2346 = vmatpush1.msra.mxu0 0.0
      %2347 = vmatprep.subr.mxu0 0.0
      %2348 = vmatpush1.msra.mxu0 0.0
      %2349 = vmatprep.subr.mxu0 0.0
      %2350 = vmatpush1.msra.mxu0 0.0
      %2351 = vmatprep.subr.mxu0 0.0
      %2352 = vmatpush1.msra.mxu0 0.0
      %2353 = vmatprep.subr.mxu0 0.0
      %2354 = vmatpush1.msra.mxu0 0.0
      %2355 = vmatprep.subr.mxu0 0.0
      %2356 = vmatpush1.msra.mxu0 0.0
      %2357 = vmatprep.subr.mxu0 0.0
      %2358 = vmatpush1.msra.mxu0 0.0
      %2359 = vmatprep.subr.mxu0 0.0
      %2360 = vmatpush1.msra.mxu0 0.0
      %2361 = vmatprep.subr.mxu0 0.0
      %2362 = vmatpush1.msra.mxu0 0.0
      %2363 = vmatprep.subr.mxu0 0.0
      %2364 = vmatpush1.msra.mxu0 0.0
      %2365 = vmatprep.subr.mxu0 0.0
      %2366 = vmatpush1.msra.mxu0 0.0
      %2367 = vmatprep.subr.mxu0 0.0
      %2368 = vmatpush1.msra.mxu0 0.0
      %2369 = vmatprep.subr.mxu0 0.0
      %2370 = vmatpush1.msra.mxu0 0.0
      %2371 = vmatprep.subr.mxu0 0.0
      %2372 = vmatpush1.msra.mxu0 0.0
      %2373 = vmatprep.mubr.f32.mxu0 0.0
      %2374 = vmatmul.mubr.f32.gmra.mrb[0].mxu0 %v2301
      %v2375 = vpop.f32.mrb[0].mxu0
      %v2376 = vadd.f32 0.0, %v2375
      %v2377 = vpop.f32.mrb[0].mxu0
      %2378 = vmatprep.mubr.f32.mxu0 0.0
      %2379 = vmatmul.mubr.f32.gmra.mrb[0].mxu0 %v2302
      %v2380 = vpop.f32.mrb[0].mxu0
      %v2381 = vadd.f32 0.0, %v2380
      %v2382 = vpop.f32.mrb[0].mxu0
      %2383 = vmatprep.mubr.f32.mxu0 0.0
      %2384 = vmatmul.mubr.f32.gmra.mrb[0].mxu0 %v2303
      %v2385 = vpop.f32.mrb[0].mxu0
      %v2386 = vadd.f32 0.0, %v2385
      %v2387 = vpop.f32.mrb[0].mxu0
      %2388 = vmatprep.mubr.f32.mxu0 0.0
      %2389 = vmatmul.mubr.f32.gmra.mrb[0].mxu0 %v2304
      %v2390 = vpop.f32.mrb[0].mxu0
      %v2391 = vadd.f32 0.0, %v2390
      %v2392 = vpop.f32.mrb[0].mxu0
      %2393 = vdwg.mxu0
      %v2394 = vadd.f32 %v2265, %v2376
      %v2395 = vadd.f32 %v2266, %v2381
      %v2396 = vadd.f32 %v2267, %v2386
      %v2397 = vadd.f32 %v2268, %v2391
      %v2398 = vld [vmem:[%s1166] sm:$0xf]
      %v2399 = vld [vmem:[%s1166 + $0x8] sm:$0xf]
      %v2400 = vld [vmem:[%s1166 + $0x10] sm:$0xf]
      %v2401 = vld [vmem:[%s1166 + $0x18] sm:$0xf]
      %v2402 = vld [vmem:[%s1166 + $0x30] sm:$0xf]
      %v2403 = vld [vmem:[%s1166 + $0x38] sm:$0xf]
      %v2404 = vld [vmem:[%s1166 + $0x40] sm:$0xf]
      %v2405 = vld [vmem:[%s1166 + $0x48] sm:$0xf]
      %v2406 = vld [vmem:[%s307 + $0x300] sm:$0xff]
      %v2407 = vld [vmem:[%s307 + $0x308] sm:$0xff]
      %v2408 = vld [vmem:[%s307 + $0x310] sm:$0xff]
      %v2409 = vld [vmem:[%s307 + $0x318] sm:$0xff]
      %v2410 = vld [vmem:[%s307 + $0x320] sm:$0xff]
      %v2411 = vld [vmem:[%s307 + $0x328] sm:$0xff]
      %v2412 = vld [vmem:[%s307 + $0x330] sm:$0xff]
      %v2413 = vld [vmem:[%s307 + $0x338] sm:$0xff]
      %v2414 = vld [vmem:[%s307 + $0x340] sm:$0xff]
      %v2415 = vld [vmem:[%s307 + $0x348] sm:$0xff]
      %v2416 = vld [vmem:[%s307 + $0x350] sm:$0xff]
      %v2417 = vld [vmem:[%s307 + $0x358] sm:$0xff]
      %v2418 = vld [vmem:[%s307 + $0x360] sm:$0xff]
      %v2419 = vld [vmem:[%s307 + $0x368] sm:$0xff]
      %v2420 = vld [vmem:[%s307 + $0x370] sm:$0xff]
      %v2421 = vld [vmem:[%s307 + $0x378] sm:$0xff]
      %v2430 = vcombine.low %v2398, %v2399
      %v2431 = vcombine.low %v2400, %v2401
      %v2432 = vcombine.low %v2402, %v2403
      %v2433 = vcombine.low %v2404, %v2405
      %2438 = vmatprep.subr.mxu0 0.0
      %2439 = vmatpush1.msra.mxu0 %v2406
      %2440 = vmatprep.subr.mxu0 0.0
      %2441 = vmatpush1.msra.mxu0 %v2407
      %2442 = vmatprep.subr.mxu0 0.0
      %2443 = vmatpush1.msra.mxu0 %v2408
      %2444 = vmatprep.subr.mxu0 0.0
      %2445 = vmatpush1.msra.mxu0 %v2409
      %2446 = vmatprep.subr.mxu0 0.0
      %2447 = vmatpush1.msra.mxu0 %v2410
      %2448 = vmatprep.subr.mxu0 0.0
      %2449 = vmatpush1.msra.mxu0 %v2411
      %2450 = vmatprep.subr.mxu0 0.0
      %2451 = vmatpush1.msra.mxu0 %v2412
      %2452 = vmatprep.subr.mxu0 0.0
      %2453 = vmatpush1.msra.mxu0 %v2413
      %2454 = vmatprep.subr.mxu0 0.0
      %2455 = vmatpush1.msra.mxu0 %v2414
      %2456 = vmatprep.subr.mxu0 0.0
      %2457 = vmatpush1.msra.mxu0 %v2415
      %2458 = vmatprep.subr.mxu0 0.0
      %2459 = vmatpush1.msra.mxu0 %v2416
      %2460 = vmatprep.subr.mxu0 0.0
      %2461 = vmatpush1.msra.mxu0 %v2417
      %2462 = vmatprep.subr.mxu0 0.0
      %2463 = vmatpush1.msra.mxu0 %v2418
      %2464 = vmatprep.subr.mxu0 0.0
      %2465 = vmatpush1.msra.mxu0 %v2419
      %2466 = vmatprep.subr.mxu0 0.0
      %2467 = vmatpush1.msra.mxu0 %v2420
      %2468 = vmatprep.subr.mxu0 0.0
      %2469 = vmatpush1.msra.mxu0 %v2421
      %2470 = vmatprep.subr.mxu0 0.0
      %2471 = vmatpush1.msra.mxu0 0.0
      %2472 = vmatprep.subr.mxu0 0.0
      %2473 = vmatpush1.msra.mxu0 0.0
      %2474 = vmatprep.subr.mxu0 0.0
      %2475 = vmatpush1.msra.mxu0 0.0
      %2476 = vmatprep.subr.mxu0 0.0
      %2477 = vmatpush1.msra.mxu0 0.0
      %2478 = vmatprep.subr.mxu0 0.0
      %2479 = vmatpush1.msra.mxu0 0.0
      %2480 = vmatprep.subr.mxu0 0.0
      %2481 = vmatpush1.msra.mxu0 0.0
      %2482 = vmatprep.subr.mxu0 0.0
      %2483 = vmatpush1.msra.mxu0 0.0
      %2484 = vmatprep.subr.mxu0 0.0
      %2485 = vmatpush1.msra.mxu0 0.0
      %2486 = vmatprep.subr.mxu0 0.0
      %2487 = vmatpush1.msra.mxu0 0.0
      %2488 = vmatprep.subr.mxu0 0.0
      %2489 = vmatpush1.msra.mxu0 0.0
      %2490 = vmatprep.subr.mxu0 0.0
      %2491 = vmatpush1.msra.mxu0 0.0
      %2492 = vmatprep.subr.mxu0 0.0
      %2493 = vmatpush1.msra.mxu0 0.0
      %2494 = vmatprep.subr.mxu0 0.0
      %2495 = vmatpush1.msra.mxu0 0.0
      %2496 = vmatprep.subr.mxu0 0.0
      %2497 = vmatpush1.msra.mxu0 0.0
      %2498 = vmatprep.subr.mxu0 0.0
      %2499 = vmatpush1.msra.mxu0 0.0
      %2500 = vmatprep.subr.mxu0 0.0
      %2501 = vmatpush1.msra.mxu0 0.0
      %2502 = vmatprep.mubr.f32.mxu0 0.0
      %2503 = vmatmul.mubr.f32.gmra.mrb[0].mxu0 %v2430
      %v2504 = vpop.f32.mrb[0].mxu0
      %v2505 = vadd.f32 0.0, %v2504
      %v2506 = vpop.f32.mrb[0].mxu0
      %2507 = vmatprep.mubr.f32.mxu0 0.0
      %2508 = vmatmul.mubr.f32.gmra.mrb[0].mxu0 %v2431
      %v2509 = vpop.f32.mrb[0].mxu0
      %v2510 = vadd.f32 0.0, %v2509
      %v2511 = vpop.f32.mrb[0].mxu0
      %2512 = vmatprep.mubr.f32.mxu0 0.0
      %2513 = vmatmul.mubr.f32.gmra.mrb[0].mxu0 %v2432
      %v2514 = vpop.f32.mrb[0].mxu0
      %v2515 = vadd.f32 0.0, %v2514
      %v2516 = vpop.f32.mrb[0].mxu0
      %2517 = vmatprep.mubr.f32.mxu0 0.0
      %2518 = vmatmul.mubr.f32.gmra.mrb[0].mxu0 %v2433
      %v2519 = vpop.f32.mrb[0].mxu0
      %v2520 = vadd.f32 0.0, %v2519
      %v2521 = vpop.f32.mrb[0].mxu0
      %2522 = vdwg.mxu0
      %v2523 = vadd.f32 %v2394, %v2505
      %v2524 = vadd.f32 %v2395, %v2510
      %v2525 = vadd.f32 %v2396, %v2515
      %v2526 = vadd.f32 %v2397, %v2520
      %v2527 = vld [vmem:[%s1166 + $0x1] sm:$0xf]
      %v2528 = vld [vmem:[%s1166 + $0x9] sm:$0xf]
      %v2529 = vld [vmem:[%s1166 + $0x11] sm:$0xf]
      %v2530 = vld [vmem:[%s1166 + $0x19] sm:$0xf]
      %v2531 = vld [vmem:[%s1166 + $0x31] sm:$0xf]
      %v2532 = vld [vmem:[%s1166 + $0x39] sm:$0xf]
      %v2533 = vld [vmem:[%s1166 + $0x41] sm:$0xf]
      %v2534 = vld [vmem:[%s1166 + $0x49] sm:$0xf]
      %v2535 = vld [vmem:[%s307 + $0x380] sm:$0xff]
      %v2536 = vld [vmem:[%s307 + $0x388] sm:$0xff]
      %v2537 = vld [vmem:[%s307 + $0x390] sm:$0xff]
      %v2538 = vld [vmem:[%s307 + $0x398] sm:$0xff]
      %v2539 = vld [vmem:[%s307 + $0x3a0] sm:$0xff]
      %v2540 = vld [vmem:[%s307 + $0x3a8] sm:$0xff]
      %v2541 = vld [vmem:[%s307 + $0x3b0] sm:$0xff]
      %v2542 = vld [vmem:[%s307 + $0x3b8] sm:$0xff]
      %v2543 = vld [vmem:[%s307 + $0x3c0] sm:$0xff]
      %v2544 = vld [vmem:[%s307 + $0x3c8] sm:$0xff]
      %v2545 = vld [vmem:[%s307 + $0x3d0] sm:$0xff]
      %v2546 = vld [vmem:[%s307 + $0x3d8] sm:$0xff]
      %v2547 = vld [vmem:[%s307 + $0x3e0] sm:$0xff]
      %v2548 = vld [vmem:[%s307 + $0x3e8] sm:$0xff]
      %v2549 = vld [vmem:[%s307 + $0x3f0] sm:$0xff]
      %v2550 = vld [vmem:[%s307 + $0x3f8] sm:$0xff]
      %v2559 = vcombine.low %v2527, %v2528
      %v2560 = vcombine.low %v2529, %v2530
      %v2561 = vcombine.low %v2531, %v2532
      %v2562 = vcombine.low %v2533, %v2534
      %2567 = vmatprep.subr.mxu0 0.0
      %2568 = vmatpush1.msra.mxu0 %v2535
      %2569 = vmatprep.subr.mxu0 0.0
      %2570 = vmatpush1.msra.mxu0 %v2536
      %2571 = vmatprep.subr.mxu0 0.0
      %2572 = vmatpush1.msra.mxu0 %v2537
      %2573 = vmatprep.subr.mxu0 0.0
      %2574 = vmatpush1.msra.mxu0 %v2538
      %2575 = vmatprep.subr.mxu0 0.0
      %2576 = vmatpush1.msra.mxu0 %v2539
      %2577 = vmatprep.subr.mxu0 0.0
      %2578 = vmatpush1.msra.mxu0 %v2540
      %2579 = vmatprep.subr.mxu0 0.0
      %2580 = vmatpush1.msra.mxu0 %v2541
      %2581 = vmatprep.subr.mxu0 0.0
      %2582 = vmatpush1.msra.mxu0 %v2542
      %2583 = vmatprep.subr.mxu0 0.0
      %2584 = vmatpush1.msra.mxu0 %v2543
      %2585 = vmatprep.subr.mxu0 0.0
      %2586 = vmatpush1.msra.mxu0 %v2544
      %2587 = vmatprep.subr.mxu0 0.0
      %2588 = vmatpush1.msra.mxu0 %v2545
      %2589 = vmatprep.subr.mxu0 0.0
      %2590 = vmatpush1.msra.mxu0 %v2546
      %2591 = vmatprep.subr.mxu0 0.0
      %2592 = vmatpush1.msra.mxu0 %v2547
      %2593 = vmatprep.subr.mxu0 0.0
      %2594 = vmatpush1.msra.mxu0 %v2548
      %2595 = vmatprep.subr.mxu0 0.0
      %2596 = vmatpush1.msra.mxu0 %v2549
      %2597 = vmatprep.subr.mxu0 0.0
      %2598 = vmatpush1.msra.mxu0 %v2550
      %2599 = vmatprep.subr.mxu0 0.0
      %2600 = vmatpush1.msra.mxu0 0.0
      %2601 = vmatprep.subr.mxu0 0.0
      %2602 = vmatpush1.msra.mxu0 0.0
      %2603 = vmatprep.subr.mxu0 0.0
      %2604 = vmatpush1.msra.mxu0 0.0
      %2605 = vmatprep.subr.mxu0 0.0
      %2606 = vmatpush1.msra.mxu0 0.0
      %2607 = vmatprep.subr.mxu0 0.0
      %2608 = vmatpush1.msra.mxu0 0.0
      %2609 = vmatprep.subr.mxu0 0.0
      %2610 = vmatpush1.msra.mxu0 0.0
      %2611 = vmatprep.subr.mxu0 0.0
      %2612 = vmatpush1.msra.mxu0 0.0
      %2613 = vmatprep.subr.mxu0 0.0
      %2614 = vmatpush1.msra.mxu0 0.0
      %2615 = vmatprep.subr.mxu0 0.0
      %2616 = vmatpush1.msra.mxu0 0.0
      %2617 = vmatprep.subr.mxu0 0.0
      %2618 = vmatpush1.msra.mxu0 0.0
      %2619 = vmatprep.subr.mxu0 0.0
      %2620 = vmatpush1.msra.mxu0 0.0
      %2621 = vmatprep.subr.mxu0 0.0
      %2622 = vmatpush1.msra.mxu0 0.0
      %2623 = vmatprep.subr.mxu0 0.0
      %2624 = vmatpush1.msra.mxu0 0.0
      %2625 = vmatprep.subr.mxu0 0.0
      %2626 = vmatpush1.msra.mxu0 0.0
      %2627 = vmatprep.subr.mxu0 0.0
      %2628 = vmatpush1.msra.mxu0 0.0
      %2629 = vmatprep.subr.mxu0 0.0
      %2630 = vmatpush1.msra.mxu0 0.0
      %2631 = vmatprep.mubr.f32.mxu0 0.0
      %2632 = vmatmul.mubr.f32.gmra.mrb[0].mxu0 %v2559
      %v2633 = vpop.f32.mrb[0].mxu0
      %v2634 = vadd.f32 0.0, %v2633
      %v2635 = vpop.f32.mrb[0].mxu0
      %2636 = vmatprep.mubr.f32.mxu0 0.0
      %2637 = vmatmul.mubr.f32.gmra.mrb[0].mxu0 %v2560
      %v2638 = vpop.f32.mrb[0].mxu0
      %v2639 = vadd.f32 0.0, %v2638
      %v2640 = vpop.f32.mrb[0].mxu0
      %2641 = vmatprep.mubr.f32.mxu0 0.0
      %2642 = vmatmul.mubr.f32.gmra.mrb[0].mxu0 %v2561
      %v2643 = vpop.f32.mrb[0].mxu0
      %v2644 = vadd.f32 0.0, %v2643
      %v2645 = vpop.f32.mrb[0].mxu0
      %2646 = vmatprep.mubr.f32.mxu0 0.0
      %2647 = vmatmul.mubr.f32.gmra.mrb[0].mxu0 %v2562
      %v2648 = vpop.f32.mrb[0].mxu0
      %v2649 = vadd.f32 0.0, %v2648
      %v2650 = vpop.f32.mrb[0].mxu0
      %2651 = vdwg.mxu0
      %v2652 = vadd.f32 %v2523, %v2634
      %v2653 = vadd.f32 %v2524, %v2639
      %v2654 = vadd.f32 %v2525, %v2644
      %v2655 = vadd.f32 %v2526, %v2649
      %v2656 = vld [vmem:[%s1166 + $0x2] sm:$0xf]
      %v2657 = vld [vmem:[%s1166 + $0xa] sm:$0xf]
      %v2658 = vld [vmem:[%s1166 + $0x12] sm:$0xf]
      %v2659 = vld [vmem:[%s1166 + $0x1a] sm:$0xf]
      %v2660 = vld [vmem:[%s1166 + $0x32] sm:$0xf]
      %v2661 = vld [vmem:[%s1166 + $0x3a] sm:$0xf]
      %v2662 = vld [vmem:[%s1166 + $0x42] sm:$0xf]
      %v2663 = vld [vmem:[%s1166 + $0x4a] sm:$0xf]
      %v2664 = vld [vmem:[%s307 + $0x400] sm:$0xff]
      %v2665 = vld [vmem:[%s307 + $0x408] sm:$0xff]
      %v2666 = vld [vmem:[%s307 + $0x410] sm:$0xff]
      %v2667 = vld [vmem:[%s307 + $0x418] sm:$0xff]
      %v2668 = vld [vmem:[%s307 + $0x420] sm:$0xff]
      %v2669 = vld [vmem:[%s307 + $0x428] sm:$0xff]
      %v2670 = vld [vmem:[%s307 + $0x430] sm:$0xff]
      %v2671 = vld [vmem:[%s307 + $0x438] sm:$0xff]
      %v2672 = vld [vmem:[%s307 + $0x440] sm:$0xff]
      %v2673 = vld [vmem:[%s307 + $0x448] sm:$0xff]
      %v2674 = vld [vmem:[%s307 + $0x450] sm:$0xff]
      %v2675 = vld [vmem:[%s307 + $0x458] sm:$0xff]
      %v2676 = vld [vmem:[%s307 + $0x460] sm:$0xff]
      %v2677 = vld [vmem:[%s307 + $0x468] sm:$0xff]
      %v2678 = vld [vmem:[%s307 + $0x470] sm:$0xff]
      %v2679 = vld [vmem:[%s307 + $0x478] sm:$0xff]
      %v2688 = vcombine.low %v2656, %v2657
      %v2689 = vcombine.low %v2658, %v2659
      %v2690 = vcombine.low %v2660, %v2661
      %v2691 = vcombine.low %v2662, %v2663
      %2696 = vmatprep.subr.mxu0 0.0
      %2697 = vmatpush1.msra.mxu0 %v2664
      %2698 = vmatprep.subr.mxu0 0.0
      %2699 = vmatpush1.msra.mxu0 %v2665
      %2700 = vmatprep.subr.mxu0 0.0
      %2701 = vmatpush1.msra.mxu0 %v2666
      %2702 = vmatprep.subr.mxu0 0.0
      %2703 = vmatpush1.msra.mxu0 %v2667
      %2704 = vmatprep.subr.mxu0 0.0
      %2705 = vmatpush1.msra.mxu0 %v2668
      %2706 = vmatprep.subr.mxu0 0.0
      %2707 = vmatpush1.msra.mxu0 %v2669
      %2708 = vmatprep.subr.mxu0 0.0
      %2709 = vmatpush1.msra.mxu0 %v2670
      %2710 = vmatprep.subr.mxu0 0.0
      %2711 = vmatpush1.msra.mxu0 %v2671
      %2712 = vmatprep.subr.mxu0 0.0
      %2713 = vmatpush1.msra.mxu0 %v2672
      %2714 = vmatprep.subr.mxu0 0.0
      %2715 = vmatpush1.msra.mxu0 %v2673
      %2716 = vmatprep.subr.mxu0 0.0
      %2717 = vmatpush1.msra.mxu0 %v2674
      %2718 = vmatprep.subr.mxu0 0.0
      %2719 = vmatpush1.msra.mxu0 %v2675
      %2720 = vmatprep.subr.mxu0 0.0
      %2721 = vmatpush1.msra.mxu0 %v2676
      %2722 = vmatprep.subr.mxu0 0.0
      %2723 = vmatpush1.msra.mxu0 %v2677
      %2724 = vmatprep.subr.mxu0 0.0
      %2725 = vmatpush1.msra.mxu0 %v2678
      %2726 = vmatprep.subr.mxu0 0.0
      %2727 = vmatpush1.msra.mxu0 %v2679
      %2728 = vmatprep.subr.mxu0 0.0
      %2729 = vmatpush1.msra.mxu0 0.0
      %2730 = vmatprep.subr.mxu0 0.0
      %2731 = vmatpush1.msra.mxu0 0.0
      %2732 = vmatprep.subr.mxu0 0.0
      %2733 = vmatpush1.msra.mxu0 0.0
      %2734 = vmatprep.subr.mxu0 0.0
      %2735 = vmatpush1.msra.mxu0 0.0
      %2736 = vmatprep.subr.mxu0 0.0
      %2737 = vmatpush1.msra.mxu0 0.0
      %2738 = vmatprep.subr.mxu0 0.0
      %2739 = vmatpush1.msra.mxu0 0.0
      %2740 = vmatprep.subr.mxu0 0.0
      %2741 = vmatpush1.msra.mxu0 0.0
      %2742 = vmatprep.subr.mxu0 0.0
      %2743 = vmatpush1.msra.mxu0 0.0
      %2744 = vmatprep.subr.mxu0 0.0
      %2745 = vmatpush1.msra.mxu0 0.0
      %2746 = vmatprep.subr.mxu0 0.0
      %2747 = vmatpush1.msra.mxu0 0.0
      %2748 = vmatprep.subr.mxu0 0.0
      %2749 = vmatpush1.msra.mxu0 0.0
      %2750 = vmatprep.subr.mxu0 0.0
      %2751 = vmatpush1.msra.mxu0 0.0
      %2752 = vmatprep.subr.mxu0 0.0
      %2753 = vmatpush1.msra.mxu0 0.0
      %2754 = vmatprep.subr.mxu0 0.0
      %2755 = vmatpush1.msra.mxu0 0.0
      %2756 = vmatprep.subr.mxu0 0.0
      %2757 = vmatpush1.msra.mxu0 0.0
      %2758 = vmatprep.subr.mxu0 0.0
      %2759 = vmatpush1.msra.mxu0 0.0
      %2760 = vmatprep.mubr.f32.mxu0 0.0
      %2761 = vmatmul.mubr.f32.gmra.mrb[0].mxu0 %v2688
      %v2762 = vpop.f32.mrb[0].mxu0
      %v2763 = vadd.f32 0.0, %v2762
      %v2764 = vpop.f32.mrb[0].mxu0
      %2765 = vmatprep.mubr.f32.mxu0 0.0
      %2766 = vmatmul.mubr.f32.gmra.mrb[0].mxu0 %v2689
      %v2767 = vpop.f32.mrb[0].mxu0
      %v2768 = vadd.f32 0.0, %v2767
      %v2769 = vpop.f32.mrb[0].mxu0
      %2770 = vmatprep.mubr.f32.mxu0 0.0
      %2771 = vmatmul.mubr.f32.gmra.mrb[0].mxu0 %v2690
      %v2772 = vpop.f32.mrb[0].mxu0
      %v2773 = vadd.f32 0.0, %v2772
      %v2774 = vpop.f32.mrb[0].mxu0
      %2775 = vmatprep.mubr.f32.mxu0 0.0
      %2776 = vmatmul.mubr.f32.gmra.mrb[0].mxu0 %v2691
      %v2777 = vpop.f32.mrb[0].mxu0
      %v2778 = vadd.f32 0.0, %v2777
      %v2779 = vpop.f32.mrb[0].mxu0
      %2780 = vdwg.mxu0
      %v2781 = vadd.f32 %v2652, %v2763
      %v2782 = vadd.f32 %v2653, %v2768
      %v2783 = vadd.f32 %v2654, %v2773
      %v2784 = vadd.f32 %v2655, %v2778
      %v2785 = vadd.f32 %v2781, %v2782
      %v2786 = vadd.f32 %v2785, %v2783
      %v2787 = vadd.f32 %v2786, %v2784
      %v2788 = vrot.slane %v2787, 4
      %v2789 = vadd.f32 %v2787, %v2788
      %v2790 = vrot.slane %v2789, 2
      %v2791 = vadd.f32 %v2789, %v2790
      %v2792 = vrot.slane %v2791, 1
      %v2793 = vadd.f32 %v2791, %v2792
      %v2794 = vmul.f32 %v2781, %v2781
      %v2795 = vmul.f32 %v2782, %v2782
      %v2796 = vmul.f32 %v2783, %v2783
      %v2797 = vmul.f32 %v2784, %v2784
      %v2798 = vadd.f32 %v2794, %v2795
      %v2799 = vadd.f32 %v2798, %v2796
      %v2800 = vadd.f32 %v2799, %v2797
      %v2801 = vrot.slane %v2800, 4
      %v2802 = vadd.f32 %v2800, %v2801
      %v2803 = vrot.slane %v2802, 2
      %v2804 = vadd.f32 %v2802, %v2803
      %v2805 = vrot.slane %v2804, 1
      %v2806 = vadd.f32 %v2804, %v2805
      %v2807 = vmul.f32 %v2793, 0.03125
      %v2808 = vmul.f32 %v2806, 0.03125
      %v2809 = vmul.f32 %v2807, %v2807
      %v2810 = vsub.f32 %v2808, %v2809
      %v2811 = vmax.f32 %v2810, 0.0
      %v2812 = vld [vmem:[%s310] sm:$0x1]
      %v2813 = vadd.f32 %v2811, 1e-05
      %v2814 = vrsqrt.pop %v2813
      %v2815 = vmul.f32 %v2812, %v2814
      %v2816 = vld [vmem:[%s313] sm:$0x1]
      %v2817 = vmul.f32 %v2807, %v2815
      %v2818 = vsub.f32 %v2816, %v2817
      %v2820 = vlaneseq
      %v2821 = vshrl.u32 %v2820, 7
      %v2822 = vsub.s32 0, %v2821
      %v2823 = vrot.slane %v2815, %v2822
      %v2825 = vmul.f32 %v2781, %v2823
      %v2826 = vmul.f32 %v2782, %v2823
      %v2827 = vmul.f32 %v2783, %v2823
      %v2828 = vmul.f32 %v2784, %v2823
      %v2830 = vlaneseq
      %v2831 = vshrl.u32 %v2830, 7
      %v2832 = vsub.s32 0, %v2831
      %v2833 = vrot.slane %v2818, %v2832
      %v2835 = vadd.f32 %v2825, %v2833
      %v2836 = vadd.f32 %v2826, %v2833
      %v2837 = vadd.f32 %v2827, %v2833
      %v2838 = vadd.f32 %v2828, %v2833
      %v2847 = vcombine.low %v383, %v384
      %v2848 = vcombine.low %v385, %v386
      %v2849 = vcombine.low %v387, %v388
      %v2850 = vcombine.low %v389, %v390
      %v2855 = vadd.f32 %v2835, %v2847
      %v2856 = vadd.f32 %v2836, %v2848
      %v2857 = vadd.f32 %v2837, %v2849
      %v2858 = vadd.f32 %v2838, %v2850
      %v2859 = vmax.f32 %v2855, 0.0
      %v2860 = vmax.f32 %v2856, 0.0
      %v2861 = vmax.f32 %v2857, 0.0
      %v2862 = vmax.f32 %v2858, 0.0
      %v2867 = vcombine.high %v2859, %v2859
      %v2868 = vcombine.high %v2860, %v2860
      %v2869 = vcombine.high %v2861, %v2861
      %v2870 = vcombine.high %v2862, %v2862
      %2875 = vst [vmem:[%s7] sm:$0xf] %v2859
      %2876 = vst [vmem:[%s7 + $0x4] sm:$0xf] %v2867
      %2877 = vst [vmem:[%s7 + $0x8] sm:$0xf] %v2860
      %2878 = vst [vmem:[%s7 + $0xc] sm:$0xf] %v2868
      %2879 = vst [vmem:[%s7 + $0x10] sm:$0xf] %v2861
      %2880 = vst [vmem:[%s7 + $0x14] sm:$0xf] %v2869
      %2881 = vst [vmem:[%s7 + $0x18] sm:$0xf] %v2862
      %2882 = vst [vmem:[%s7 + $0x1c] sm:$0xf] %v2870
      // Predicated region
      $region84: #{decoder_forward.3} parent=43 // pred_check
        %p2883 = pneg %p187
      $region85: #{decoder_forward.3} parent=43 // pred_check_branch
        %2885 = sbr.rel (%p2883) target = $region87
      $region86: #{decoder_forward.3} parent=43 // pred_region
        _
      $region87: #{decoder_forward.3} parent=43 // pred_fallthru
        _
      // Predicated region
      $region88: #{decoder_forward.3} parent=43 // pred_check
        %p2886 = pneg %p187
      $region89: #{decoder_forward.3} parent=43 // pred_check_branch
        %2888 = sbr.rel (%p2886) target = $region91
      $region90: #{decoder_forward.3} parent=43 // pred_region
        _
      $region91: #{decoder_forward.3} parent=43 // pred_fallthru
        _
    $region44: #{decoder_forward.3} parent=5 // pred_fallthru
      _
    %p2889 = scmp.le.s32.totalorder 2, %s13
    // Predicated region
    $region92: #{decoder_forward.3} parent=5 // pred_check
      %p2890 = pneg %p2889
    $region93: #{decoder_forward.3} parent=5 // pred_check_branch
      %2892 = sbr.rel (%p2890) target = $region95
    $region94: #{decoder_forward.3} parent=5 // pred_region
      %s2893 = ssub.s32 %s13, 2
    $region95: #{decoder_forward.3} parent=5 // pred_fallthru
      _
  $region6: #{decoder_forward.3} parent=0 // loop_footer
    %s17 = sadd.s32 1, %s13
  $region7: #{decoder_forward.3} parent=0 // loop_footer_branch
    %12 = sbr.rel target = $region3
  $region8: #{decoder_forward.3} parent=0 // loop_exit
    _

</llo_original>
